<compile_context>
chip_gen: v6e
topology: v6e:2x2x1
jax: 0.10.0
libtpu: 0.0.40
codegen_flags: <defaults>
</compile_context>

<pallas_src>
import jax
import jax.numpy as jnp
from jax.experimental import pallas as pl
from jax.experimental.pallas import tpu as pltpu


# 3x3 tap offsets in (kh, kw) row-major order: k = (dh+1)*3 + (dw+1).
_OFFS = ((-1, -1), (-1, 0), (-1, 1),
         (0, -1), (0, 0), (0, 1),
         (1, -1), (1, 0), (1, 1))


def _elu(x):
    return jnp.where(x > 0, x, jnp.exp(jnp.minimum(x, 0.0)) - 1.0)


def _sigmoid(x):
    return 1.0 / (1.0 + jnp.exp(-x))


def _dot(a, b):
    return jnp.dot(a, b, preferred_element_type=jnp.float32)


def _roll_lanes(v, off):
    """result[:, i] = v[:, (i + off) % L] for a static python int `off` (XLU roll)."""
    L = v.shape[-1]
    s = (-off) % L
    if s == 0:
        return v
    return pltpu.roll(v, shift=s, axis=1)


# ------------------------------ fused kernel ---------------------------------
def _make_kernel(C, H, W, Bt, num_classes):
    H2, W2 = H // 2, W // 2          # after pool1
    S = H2 - 2                       # conv3 'valid' output size
    P = S // 2                       # after pool2

    def kernel(x_ref,
               w1_ref, b1_ref,
               w2_ref, b2_ref, bn1s_ref, bn1b_ref, wa1_ref,
               w3_ref, b3_ref, bn2s_ref, bn2b_ref, wa2_ref,
               fc1w_ref, fc1b_ref, fc2w_ref, fc2b_ref, fc3w_ref, fc3b_ref,
               mask1_ref, inter_ref, sel1_ref, sel2_ref,
               out_ref):
        # ------------ stage 1 : H x W grid, lanes = (sample, h, w) ----------
        x = x_ref[...]                                         # (C, Bt*H*W)
        y = _elu(_dot(w1_ref[...], x) + b1_ref[...])           # conv1 (1x1) + ELU

        m1 = mask1_ref[...]                                    # (9, Bt*H*W)
        taps = [_roll_lanes(y, dh * W + dw) * m1[k:k + 1, :]
                for k, (dh, dw) in enumerate(_OFFS)]
        t1 = jnp.concatenate(taps, axis=0)                     # (9, L1) im2col
        f1 = _elu(_dot(w2_ref[...], t1) + b2_ref[...])         # conv2 + ELU
        f1 = f1 * bn1s_ref[...] + bn1b_ref[...]                # bn1 (eval, folded)

        # spatial attention 1 (channel mean/max -> 3x3 'same' conv -> sigmoid)
        avg1 = jnp.mean(f1, axis=0, keepdims=True)
        max1 = jnp.max(f1, axis=0, keepdims=True)
        ta1 = jnp.concatenate(
            [_roll_lanes(src, dh * W + dw) * m1[k:k + 1, :]
             for src in (avg1, max1)
             for k, (dh, dw) in enumerate(_OFFS)], axis=0)     # (18, L1)
        att1 = _sigmoid(_dot(wa1_ref[...], ta1))               # (1, L1)
        g1 = f1 * att1

        # pool1: 2x2 max = two roll+max phases (VPU) + one 0/1 compaction matmul
        mh = jnp.maximum(g1, _roll_lanes(g1, 1))
        mhv = jnp.maximum(mh, _roll_lanes(mh, W))
        p1 = _dot(mhv, sel1_ref[...])                          # (10, Bt*H2*W2)

        # ------------ stage 2 : H2 x W2 grid ("valid" conv3 embedded) -------
        # conv3 computed as 'same' on the H2 x W2 grid; only the interior
        # (S x S) ring-1 region is the real 'valid' output, rest is cropped.
        t3 = jnp.concatenate(
            [_roll_lanes(p1, dh * W2 + dw) for (dh, dw) in _OFFS],
            axis=0)                                            # (90, L2) im2col
        f2 = jnp.maximum(_dot(w3_ref[...], t3) + b3_ref[...], 0.0)   # conv3 + ReLU
        f2 = f2 * bn2s_ref[...] + bn2b_ref[...]                # bn2 (eval, folded)
        f2 = f2 * inter_ref[...]                               # crop to valid S x S
        # (zeroed ring == zero 'same'-padding for the attention-2 conv)

        avg2 = jnp.mean(f2, axis=0, keepdims=True)
        max2 = jnp.max(f2, axis=0, keepdims=True)
        ta2 = jnp.concatenate(
            [_roll_lanes(src, dh * W2 + dw)
             for src in (avg2, max2)
             for (dh, dw) in _OFFS], axis=0)                   # (18, L2)
        att2 = _sigmoid(_dot(wa2_ref[...], ta2))
        g2 = f2 * att2

        # pool2 (+ crop): roll+max phases + compaction to (12, P*P*Bt),
        # output columns ordered s*Bt + b with s = h'*P + w'.
        nh = jnp.maximum(g2, _roll_lanes(g2, 1))
        nhv = jnp.maximum(nh, _roll_lanes(nh, W2))
        p2 = _dot(nhv, sel2_ref[...])                          # (12, P*P*Bt)

        # ------------ flatten + fc1/fc2/fc3 (batch on lanes) ----------------
        # fc1 weight columns were permuted host-side to match row order s*12+oc.
        feat = jnp.concatenate(
            [p2[:, s * Bt:(s + 1) * Bt] for s in range(P * P)],
            axis=0)                                            # (12*P*P, Bt)
        h1 = jnp.maximum(_dot(fc1w_ref[...], feat) + fc1b_ref[...], 0.0)
        # Dropout(p=0.6) is identity at inference.
        h2 = jnp.maximum(_dot(fc2w_ref[...], h1) + fc2b_ref[...], 0.0)
        out_ref[0] = _dot(fc3w_ref[...], h2) + fc3b_ref[...]   # (num_classes, Bt)

    return kernel


# ----------------------- host-built constant tables --------------------------
def _build_constants(Bt, H, W):
    H2, W2 = H // 2, W // 2
    S = H2 - 2
    P = S // 2
    L1 = Bt * H * W
    L2 = Bt * H2 * W2

    # 'same'-padding / sample-boundary masks for the 9 taps on the H x W grid.
    pos1 = jnp.arange(L1, dtype=jnp.int32) % (H * W)
    hh = pos1 // W
    ww = pos1 % W
    mask1 = jnp.stack(
        [((hh + dh >= 0) & (hh + dh < H) & (ww + dw >= 0) & (ww + dw < W)
          ).astype(jnp.float32) for (dh, dw) in _OFFS], axis=0)        # (9, L1)

    # interior (valid conv3) mask on the H2 x W2 grid.
    pos2 = jnp.arange(L2, dtype=jnp.int32) % (H2 * W2)
    h2 = pos2 // W2
    w2 = pos2 % W2
    inter = (((h2 >= 1) & (h2 <= S) & (w2 >= 1) & (w2 <= S))
             .astype(jnp.float32))[None, :]                            # (1, L2)

    # pool1 compaction: picks flat position b*H*W + 2h'*W + 2w' for each
    # pooled output b*H2*W2 + h'*W2 + w'.
    dst1 = jnp.arange(L2, dtype=jnp.int32)
    b1 = dst1 // (H2 * W2)
    r1 = dst1 % (H2 * W2)
    src1 = b1 * H * W + (2 * (r1 // W2)) * W + 2 * (r1 % W2)
    sel1 = (jnp.arange(L1, dtype=jnp.int32)[:, None] == src1[None, :]
            ).astype(jnp.float32)                                      # (L1, L2)

    # pool2 + valid-crop compaction: output columns ordered s*Bt + b,
    # picking flat position b*H2*W2 + (2h'+1)*W2 + (2w'+1)  (s = h'*P + w').
    dst2 = jnp.arange(P * P * Bt, dtype=jnp.int32)
    s = dst2 // Bt
    b2 = dst2 % Bt
    src2 = b2 * H2 * W2 + (2 * (s // P) + 1) * W2 + (2 * (s % P) + 1)
    sel2 = (jnp.arange(L2, dtype=jnp.int32)[:, None] == src2[None, :]
            ).astype(jnp.float32)                                      # (L2, P*P*Bt)

    return mask1, inter, sel1, sel2


# --------------------------------- wrapper ------------------------------------
def nmnet_forward(x, params):
    N, C, H, W = x.shape
    H2, W2 = H // 2, W // 2
    S = H2 - 2
    P = S // 2
    nc = params["fc3_w"].shape[0]
    f32 = jnp.float32

    # samples per grid step (whole batch for small N).
    if N <= 8:
        Bt = N
    else:
        Bt = max(d for d in (8, 4, 2, 1) if N % d == 0)
    G = N // Bt

    # --- lane-dense input layout: channels on sublanes, (n, h, w) on lanes ---
    x_flat = jnp.transpose(x, (1, 0, 2, 3)).reshape(C, N * H * W).astype(f32)

    # --- fold BatchNorm (eval mode) running stats into scale/shift ----------
    eps = 1e-5

    def bn_fold(gamma, beta, mean, var):
        scale = gamma / jnp.sqrt(var + eps)
        shift = beta - mean * scale
        return scale.reshape(-1, 1).astype(f32), shift.reshape(-1, 1).astype(f32)

    bn1s, bn1b = bn_fold(params["bn1_gamma"], params["bn1_beta"],
                         params["bn1_mean"], params["bn1_var"])
    bn2s, bn2b = bn_fold(params["bn2_gamma"], params["bn2_beta"],
                         params["bn2_mean"], params["bn2_var"])

    # --- rearrange PyTorch-shaped weights into matmul-ready tables ----------
    w1 = params["conv1_w"].reshape(1, C).astype(f32)
    b1 = params["conv1_b"].reshape(1, 1).astype(f32)
    w2 = params["conv2_w"].reshape(10, 9).astype(f32)            # cols: kh*3+kw
    b2 = params["conv2_b"].reshape(10, 1).astype(f32)
    wa1 = params["attn1_w"].reshape(1, 18).astype(f32)           # cols: c*9+kh*3+kw
    w3 = jnp.transpose(params["conv3_w"], (0, 2, 3, 1)).reshape(12, 90).astype(f32)
    b3 = params["conv3_b"].reshape(12, 1).astype(f32)
    wa2 = params["attn2_w"].reshape(1, 18).astype(f32)

    Fdim = 12 * P * P
    # fc1 columns permuted from torch flatten order (oc*P*P + s) to (s*12 + oc).
    fc1w = jnp.transpose(params["fc1_w"].reshape(-1, 12, P * P),
                         (0, 2, 1)).reshape(-1, Fdim).astype(f32)
    fc1b = params["fc1_b"].reshape(-1, 1).astype(f32)
    fc2w = params["fc2_w"].astype(f32)
    fc2b = params["fc2_b"].reshape(-1, 1).astype(f32)
    fc3w = params["fc3_w"].astype(f32)
    fc3b = params["fc3_b"].reshape(-1, 1).astype(f32)

    mask1, inter, sel1, sel2 = _build_constants(Bt, H, W)

    consts = [w1, b1, w2, b2, bn1s, bn1b, wa1, w3, b3, bn2s, bn2b, wa2,
              fc1w, fc1b, fc2w, fc2b, fc3w, fc3b, mask1, inter, sel1, sel2]

    kernel = _make_kernel(C, H, W, Bt, nc)

    in_specs = ([pl.BlockSpec((C, Bt * H * W), lambda g: (0, g))]
                + [pl.BlockSpec(a.shape, lambda g: (0, 0)) for a in consts])
    out_spec = pl.BlockSpec((1, nc, Bt), lambda g: (g, 0, 0))

    out = pl.pallas_call(
        kernel,
        out_shape=jax.ShapeDtypeStruct((G, nc, Bt), f32),
        grid=(G,),
        in_specs=in_specs,
        out_specs=out_spec,
        compiler_params=pltpu.CompilerParams(
            dimension_semantics=("parallel",),
            vmem_limit_bytes=32 * 1024 * 1024),
    )(x_flat, *consts)

    logits = jnp.transpose(out, (0, 2, 1)).reshape(N, nc)
    return logits, logits   # PyTorch forward returns (x, x)


# --------------------------- deterministic parameters --------------------------
def init_params(key, num_channels, img_size, num_classes):
    flat = 12 * (img_size // 4 - 1) ** 2
    ks = list(jax.random.split(key, 24))
    it = iter(ks)

    def nrm(shape, scale=0.1):
        return (scale * jax.random.normal(next(it), shape)).astype(jnp.float32)

    return {
        # torch-shaped tensors (layout rearrangement happens in nmnet_forward)
        "conv1_w": nrm((1, num_channels, 1, 1)),
        "conv1_b": nrm((1,), 0.05),
        "conv2_w": nrm((10, 1, 3, 3)),
        "conv2_b": nrm((10,), 0.05),
        "bn1_gamma": 1.0 + nrm((10,)),
        "bn1_beta": nrm((10,)),
        "bn1_mean": jnp.zeros((10,), jnp.float32),
        "bn1_var": jnp.ones((10,), jnp.float32),
        "attn1_w": nrm((1, 2, 3, 3)),
        "conv3_w": nrm((12, 10, 3, 3)),
        "conv3_b": nrm((12,), 0.05),
        "bn2_gamma": 1.0 + nrm((12,)),
        "bn2_beta": nrm((12,)),
        "bn2_mean": jnp.zeros((12,), jnp.float32),
        "bn2_var": jnp.ones((12,), jnp.float32),
        "attn2_w": nrm((1, 2, 3, 3)),
        "fc1_w": nrm((420, flat)),
        "fc1_b": nrm((420,), 0.05),
        "fc2_w": nrm((250, 420)),
        "fc2_b": nrm((250,), 0.05),
        "fc3_w": nrm((num_classes, 250)),
        "fc3_b": nrm((num_classes,), 0.05),
    }


if __name__ == "__main__":
    num_channels, img_size, num_classes, batch = 4, 16, 10, 2

    key = jax.random.PRNGKey(0)
    pkey, xkey = jax.random.split(key)
    params = init_params(pkey, num_channels, img_size, num_classes)
    x = jax.random.normal(xkey, (batch, num_channels, img_size, img_size),
                          dtype=jnp.float32)

    fwd = jax.jit(nmnet_forward)
    out1, out2 = fwd(x, params)
    jax.block_until_ready((out1, out2))

    assert out1.shape == (batch, num_classes)
    assert out2.shape == (batch, num_classes)
    assert bool(jnp.all(jnp.isfinite(out1)))
    print("KERNEL_OK")
</pallas_src>

<mosaic_0001>
module attributes {stable_mosaic.version = 11 : i64} {
  func.func @kernel(%arg0: i32, %arg1: memref<4x512xf32, #tpu.memory_space<vmem>>, %arg2: memref<1x4xf32, #tpu.memory_space<vmem>>, %arg3: memref<1x1xf32, #tpu.memory_space<vmem>>, %arg4: memref<10x9xf32, #tpu.memory_space<vmem>>, %arg5: memref<10x1xf32, #tpu.memory_space<vmem>>, %arg6: memref<10x1xf32, #tpu.memory_space<vmem>>, %arg7: memref<10x1xf32, #tpu.memory_space<vmem>>, %arg8: memref<1x18xf32, #tpu.memory_space<vmem>>, %arg9: memref<12x90xf32, #tpu.memory_space<vmem>>, %arg10: memref<12x1xf32, #tpu.memory_space<vmem>>, %arg11: memref<12x1xf32, #tpu.memory_space<vmem>>, %arg12: memref<12x1xf32, #tpu.memory_space<vmem>>, %arg13: memref<1x18xf32, #tpu.memory_space<vmem>>, %arg14: memref<420x108xf32, #tpu.memory_space<vmem>>, %arg15: memref<420x1xf32, #tpu.memory_space<vmem>>, %arg16: memref<250x420xf32, #tpu.memory_space<vmem>>, %arg17: memref<250x1xf32, #tpu.memory_space<vmem>>, %arg18: memref<10x250xf32, #tpu.memory_space<vmem>>, %arg19: memref<10x1xf32, #tpu.memory_space<vmem>>, %arg20: memref<9x512xf32, #tpu.memory_space<vmem>>, %arg21: memref<1x128xf32, #tpu.memory_space<vmem>>, %arg22: memref<512x128xf32, #tpu.memory_space<vmem>>, %arg23: memref<128x18xf32, #tpu.memory_space<vmem>>, %arg24: memref<1x10x2xf32, #tpu.memory_space<vmem>>) attributes {dimension_semantics = [#tpu.dimension_semantics<parallel>], iteration_bounds = array<i64: 1>, scalar_prefetch = 0 : i64, scratch_operands = 0 : i64, tpu.core_type = #tpu.core_type<tc>, window_params = [{transform_indices = @transform_0, window_bounds = array<i64: 4, 512>}, {pipeline_mode = #tpu.pipeline_mode<synchronous>, transform_indices = @transform_1, window_bounds = array<i64: 1, 4>}, {pipeline_mode = #tpu.pipeline_mode<synchronous>, transform_indices = @transform_2, window_bounds = array<i64: 1, 1>}, {pipeline_mode = #tpu.pipeline_mode<synchronous>, transform_indices = @transform_3, window_bounds = array<i64: 10, 9>}, {pipeline_mode = #tpu.pipeline_mode<synchronous>, transform_indices = @transform_4, window_bounds = array<i64: 10, 1>}, {pipeline_mode = #tpu.pipeline_mode<synchronous>, transform_indices = @transform_5, window_bounds = array<i64: 10, 1>}, {pipeline_mode = #tpu.pipeline_mode<synchronous>, transform_indices = @transform_6, window_bounds = array<i64: 10, 1>}, {pipeline_mode = #tpu.pipeline_mode<synchronous>, transform_indices = @transform_7, window_bounds = array<i64: 1, 18>}, {pipeline_mode = #tpu.pipeline_mode<synchronous>, transform_indices = @transform_8, window_bounds = array<i64: 12, 90>}, {pipeline_mode = #tpu.pipeline_mode<synchronous>, transform_indices = @transform_9, window_bounds = array<i64: 12, 1>}, {pipeline_mode = #tpu.pipeline_mode<synchronous>, transform_indices = @transform_10, window_bounds = array<i64: 12, 1>}, {pipeline_mode = #tpu.pipeline_mode<synchronous>, transform_indices = @transform_11, window_bounds = array<i64: 12, 1>}, {pipeline_mode = #tpu.pipeline_mode<synchronous>, transform_indices = @transform_12, window_bounds = array<i64: 1, 18>}, {pipeline_mode = #tpu.pipeline_mode<synchronous>, transform_indices = @transform_13, window_bounds = array<i64: 420, 108>}, {pipeline_mode = #tpu.pipeline_mode<synchronous>, transform_indices = @transform_14, window_bounds = array<i64: 420, 1>}, {pipeline_mode = #tpu.pipeline_mode<synchronous>, transform_indices = @transform_15, window_bounds = array<i64: 250, 420>}, {pipeline_mode = #tpu.pipeline_mode<synchronous>, transform_indices = @transform_16, window_bounds = array<i64: 250, 1>}, {pipeline_mode = #tpu.pipeline_mode<synchronous>, transform_indices = @transform_17, window_bounds = array<i64: 10, 250>}, {pipeline_mode = #tpu.pipeline_mode<synchronous>, transform_indices = @transform_18, window_bounds = array<i64: 10, 1>}, {pipeline_mode = #tpu.pipeline_mode<synchronous>, transform_indices = @transform_19, window_bounds = array<i64: 9, 512>}, {pipeline_mode = #tpu.pipeline_mode<synchronous>, transform_indices = @transform_20, window_bounds = array<i64: 1, 128>}, {pipeline_mode = #tpu.pipeline_mode<synchronous>, transform_indices = @transform_21, window_bounds = array<i64: 512, 128>}, {pipeline_mode = #tpu.pipeline_mode<synchronous>, transform_indices = @transform_22, window_bounds = array<i64: 128, 18>}, {transform_indices = @transform_23, window_bounds = array<i64: 1, 10, 2>}]} {
    %c0 = arith.constant 0 : index
    %c0_0 = arith.constant 0 : index
    %0 = vector.load %arg1[%c0, %c0_0] : memref<4x512xf32, #tpu.memory_space<vmem>>, vector<4x512xf32>
    %c0_1 = arith.constant 0 : index
    %c0_2 = arith.constant 0 : index
    %1 = vector.load %arg2[%c0_1, %c0_2] : memref<1x4xf32, #tpu.memory_space<vmem>>, vector<1x4xf32>
    %cst = arith.constant dense<0.000000e+00> : vector<1x512xf32>
    %2 = tpu.matmul %1, %0, %cst {dimension_numbers = #tpu.dot_dimension_numbers<[1], [0], [0], [1], [0, 0, 1, 1], [], []>} : vector<1x4xf32>, vector<4x512xf32>, vector<1x512xf32> -> vector<1x512xf32>
    %c0_3 = arith.constant 0 : index
    %c0_4 = arith.constant 0 : index
    %3 = vector.load %arg3[%c0_3, %c0_4] : memref<1x1xf32, #tpu.memory_space<vmem>>, vector<1x1xf32>
    %4 = vector.broadcast %3 : vector<1x1xf32> to vector<1x512xf32>
    %5 = arith.addf %2, %4 : vector<1x512xf32>
    %cst_5 = arith.constant 0.000000e+00 : f32
    %6 = vector.broadcast %cst_5 : f32 to vector<1x512xf32>
    %7 = arith.cmpf ogt, %5, %6 : vector<1x512xf32>
    %cst_6 = arith.constant 0.000000e+00 : f32
    %8 = vector.broadcast %cst_6 : f32 to vector<1x512xf32>
    %9 = arith.minimumf %5, %8 : vector<1x512xf32>
    %10 = math.exp %9 : vector<1x512xf32>
    %cst_7 = arith.constant 1.000000e+00 : f32
    %11 = vector.broadcast %cst_7 : f32 to vector<1x512xf32>
    %12 = arith.subf %10, %11 : vector<1x512xf32>
    %13 = arith.select %7, %5, %12 : vector<1x512xi1>, vector<1x512xf32>
    %c0_8 = arith.constant 0 : index
    %c0_9 = arith.constant 0 : index
    %14 = vector.load %arg20[%c0_8, %c0_9] : memref<9x512xf32, #tpu.memory_space<vmem>>, vector<9x512xf32>
    %c17_i32 = arith.constant 17 : i32
    %15 = tpu.dynamic_rotate %13 by %c17_i32 dim 1 : vector<1x512xf32>, i32 -> vector<1x512xf32>
    %16 = vector.extract_strided_slice %14 {offsets = [0, 0], sizes = [1, 512], strides = [1, 1]} : vector<9x512xf32> to vector<1x512xf32>
    %17 = arith.mulf %15, %16 : vector<1x512xf32>
    %c16_i32 = arith.constant 16 : i32
    %18 = tpu.dynamic_rotate %13 by %c16_i32 dim 1 : vector<1x512xf32>, i32 -> vector<1x512xf32>
    %19 = vector.extract_strided_slice %14 {offsets = [1, 0], sizes = [1, 512], strides = [1, 1]} : vector<9x512xf32> to vector<1x512xf32>
    %20 = arith.mulf %18, %19 : vector<1x512xf32>
    %c15_i32 = arith.constant 15 : i32
    %21 = tpu.dynamic_rotate %13 by %c15_i32 dim 1 : vector<1x512xf32>, i32 -> vector<1x512xf32>
    %22 = vector.extract_strided_slice %14 {offsets = [2, 0], sizes = [1, 512], strides = [1, 1]} : vector<9x512xf32> to vector<1x512xf32>
    %23 = arith.mulf %21, %22 : vector<1x512xf32>
    %c1_i32 = arith.constant 1 : i32
    %24 = tpu.dynamic_rotate %13 by %c1_i32 dim 1 : vector<1x512xf32>, i32 -> vector<1x512xf32>
    %25 = vector.extract_strided_slice %14 {offsets = [3, 0], sizes = [1, 512], strides = [1, 1]} : vector<9x512xf32> to vector<1x512xf32>
    %26 = arith.mulf %24, %25 : vector<1x512xf32>
    %27 = vector.extract_strided_slice %14 {offsets = [4, 0], sizes = [1, 512], strides = [1, 1]} : vector<9x512xf32> to vector<1x512xf32>
    %28 = arith.mulf %13, %27 : vector<1x512xf32>
    %c511_i32 = arith.constant 511 : i32
    %29 = tpu.dynamic_rotate %13 by %c511_i32 dim 1 : vector<1x512xf32>, i32 -> vector<1x512xf32>
    %30 = vector.extract_strided_slice %14 {offsets = [5, 0], sizes = [1, 512], strides = [1, 1]} : vector<9x512xf32> to vector<1x512xf32>
    %31 = arith.mulf %29, %30 : vector<1x512xf32>
    %c497_i32 = arith.constant 497 : i32
    %32 = tpu.dynamic_rotate %13 by %c497_i32 dim 1 : vector<1x512xf32>, i32 -> vector<1x512xf32>
    %33 = vector.extract_strided_slice %14 {offsets = [6, 0], sizes = [1, 512], strides = [1, 1]} : vector<9x512xf32> to vector<1x512xf32>
    %34 = arith.mulf %32, %33 : vector<1x512xf32>
    %c496_i32 = arith.constant 496 : i32
    %35 = tpu.dynamic_rotate %13 by %c496_i32 dim 1 : vector<1x512xf32>, i32 -> vector<1x512xf32>
    %36 = vector.extract_strided_slice %14 {offsets = [7, 0], sizes = [1, 512], strides = [1, 1]} : vector<9x512xf32> to vector<1x512xf32>
    %37 = arith.mulf %35, %36 : vector<1x512xf32>
    %c495_i32 = arith.constant 495 : i32
    %38 = tpu.dynamic_rotate %13 by %c495_i32 dim 1 : vector<1x512xf32>, i32 -> vector<1x512xf32>
    %39 = vector.extract_strided_slice %14 {offsets = [8, 0], sizes = [1, 512], strides = [1, 1]} : vector<9x512xf32> to vector<1x512xf32>
    %40 = arith.mulf %38, %39 : vector<1x512xf32>
    %41 = tpu.concatenate %17, %20, %23, %26, %28, %31, %34, %37, %40 in 0 : vector<1x512xf32>, vector<1x512xf32>, vector<1x512xf32>, vector<1x512xf32>, vector<1x512xf32>, vector<1x512xf32>, vector<1x512xf32>, vector<1x512xf32>, vector<1x512xf32> -> vector<9x512xf32>
    %c0_10 = arith.constant 0 : index
    %c0_11 = arith.constant 0 : index
    %42 = vector.load %arg4[%c0_10, %c0_11] : memref<10x9xf32, #tpu.memory_space<vmem>>, vector<10x9xf32>
    %cst_12 = arith.constant dense<0.000000e+00> : vector<10x512xf32>
    %43 = tpu.matmul %42, %41, %cst_12 {dimension_numbers = #tpu.dot_dimension_numbers<[1], [0], [0], [1], [0, 0, 1, 1], [], []>} : vector<10x9xf32>, vector<9x512xf32>, vector<10x512xf32> -> vector<10x512xf32>
    %c0_13 = arith.constant 0 : index
    %c0_14 = arith.constant 0 : index
    %44 = vector.load %arg5[%c0_13, %c0_14] : memref<10x1xf32, #tpu.memory_space<vmem>>, vector<10x1xf32>
    %45 = vector.broadcast %44 : vector<10x1xf32> to vector<10x512xf32>
    %46 = arith.addf %43, %45 : vector<10x512xf32>
    %cst_15 = arith.constant 0.000000e+00 : f32
    %47 = vector.broadcast %cst_15 : f32 to vector<10x512xf32>
    %48 = arith.cmpf ogt, %46, %47 : vector<10x512xf32>
    %cst_16 = arith.constant 0.000000e+00 : f32
    %49 = vector.broadcast %cst_16 : f32 to vector<10x512xf32>
    %50 = arith.minimumf %46, %49 : vector<10x512xf32>
    %51 = math.exp %50 : vector<10x512xf32>
    %cst_17 = arith.constant 1.000000e+00 : f32
    %52 = vector.broadcast %cst_17 : f32 to vector<10x512xf32>
    %53 = arith.subf %51, %52 : vector<10x512xf32>
    %54 = arith.select %48, %46, %53 : vector<10x512xi1>, vector<10x512xf32>
    %c0_18 = arith.constant 0 : index
    %c0_19 = arith.constant 0 : index
    %55 = vector.load %arg6[%c0_18, %c0_19] : memref<10x1xf32, #tpu.memory_space<vmem>>, vector<10x1xf32>
    %56 = vector.broadcast %55 : vector<10x1xf32> to vector<10x512xf32>
    %57 = arith.mulf %54, %56 : vector<10x512xf32>
    %c0_20 = arith.constant 0 : index
    %c0_21 = arith.constant 0 : index
    %58 = vector.load %arg7[%c0_20, %c0_21] : memref<10x1xf32, #tpu.memory_space<vmem>>, vector<10x1xf32>
    %59 = vector.broadcast %58 : vector<10x1xf32> to vector<10x512xf32>
    %60 = arith.addf %57, %59 : vector<10x512xf32>
    %cst_22 = arith.constant dense<0.000000e+00> : vector<512xf32>
    %61 = vector.multi_reduction <add>, %60, %cst_22 [0] : vector<10x512xf32> to vector<512xf32>
    %62 = vector.shape_cast %61 : vector<512xf32> to vector<1x512xf32>
    %cst_23 = arith.constant 1.000000e+01 : f32
    %63 = vector.broadcast %cst_23 : f32 to vector<1x512xf32>
    %64 = arith.divf %62, %63 : vector<1x512xf32>
    %cst_24 = arith.constant dense<0xFF800000> : vector<512xf32>
    %65 = vector.multi_reduction <maximumf>, %60, %cst_24 [0] : vector<10x512xf32> to vector<512xf32>
    %66 = vector.shape_cast %65 : vector<512xf32> to vector<1x512xf32>
    %c17_i32_25 = arith.constant 17 : i32
    %67 = tpu.dynamic_rotate %64 by %c17_i32_25 dim 1 : vector<1x512xf32>, i32 -> vector<1x512xf32>
    %68 = vector.extract_strided_slice %14 {offsets = [0, 0], sizes = [1, 512], strides = [1, 1]} : vector<9x512xf32> to vector<1x512xf32>
    %69 = arith.mulf %67, %68 : vector<1x512xf32>
    %c16_i32_26 = arith.constant 16 : i32
    %70 = tpu.dynamic_rotate %64 by %c16_i32_26 dim 1 : vector<1x512xf32>, i32 -> vector<1x512xf32>
    %71 = vector.extract_strided_slice %14 {offsets = [1, 0], sizes = [1, 512], strides = [1, 1]} : vector<9x512xf32> to vector<1x512xf32>
    %72 = arith.mulf %70, %71 : vector<1x512xf32>
    %c15_i32_27 = arith.constant 15 : i32
    %73 = tpu.dynamic_rotate %64 by %c15_i32_27 dim 1 : vector<1x512xf32>, i32 -> vector<1x512xf32>
    %74 = vector.extract_strided_slice %14 {offsets = [2, 0], sizes = [1, 512], strides = [1, 1]} : vector<9x512xf32> to vector<1x512xf32>
    %75 = arith.mulf %73, %74 : vector<1x512xf32>
    %c1_i32_28 = arith.constant 1 : i32
    %76 = tpu.dynamic_rotate %64 by %c1_i32_28 dim 1 : vector<1x512xf32>, i32 -> vector<1x512xf32>
    %77 = vector.extract_strided_slice %14 {offsets = [3, 0], sizes = [1, 512], strides = [1, 1]} : vector<9x512xf32> to vector<1x512xf32>
    %78 = arith.mulf %76, %77 : vector<1x512xf32>
    %79 = vector.extract_strided_slice %14 {offsets = [4, 0], sizes = [1, 512], strides = [1, 1]} : vector<9x512xf32> to vector<1x512xf32>
    %80 = arith.mulf %64, %79 : vector<1x512xf32>
    %c511_i32_29 = arith.constant 511 : i32
    %81 = tpu.dynamic_rotate %64 by %c511_i32_29 dim 1 : vector<1x512xf32>, i32 -> vector<1x512xf32>
    %82 = vector.extract_strided_slice %14 {offsets = [5, 0], sizes = [1, 512], strides = [1, 1]} : vector<9x512xf32> to vector<1x512xf32>
    %83 = arith.mulf %81, %82 : vector<1x512xf32>
    %c497_i32_30 = arith.constant 497 : i32
    %84 = tpu.dynamic_rotate %64 by %c497_i32_30 dim 1 : vector<1x512xf32>, i32 -> vector<1x512xf32>
    %85 = vector.extract_strided_slice %14 {offsets = [6, 0], sizes = [1, 512], strides = [1, 1]} : vector<9x512xf32> to vector<1x512xf32>
    %86 = arith.mulf %84, %85 : vector<1x512xf32>
    %c496_i32_31 = arith.constant 496 : i32
    %87 = tpu.dynamic_rotate %64 by %c496_i32_31 dim 1 : vector<1x512xf32>, i32 -> vector<1x512xf32>
    %88 = vector.extract_strided_slice %14 {offsets = [7, 0], sizes = [1, 512], strides = [1, 1]} : vector<9x512xf32> to vector<1x512xf32>
    %89 = arith.mulf %87, %88 : vector<1x512xf32>
    %c495_i32_32 = arith.constant 495 : i32
    %90 = tpu.dynamic_rotate %64 by %c495_i32_32 dim 1 : vector<1x512xf32>, i32 -> vector<1x512xf32>
    %91 = vector.extract_strided_slice %14 {offsets = [8, 0], sizes = [1, 512], strides = [1, 1]} : vector<9x512xf32> to vector<1x512xf32>
    %92 = arith.mulf %90, %91 : vector<1x512xf32>
    %c17_i32_33 = arith.constant 17 : i32
    %93 = tpu.dynamic_rotate %66 by %c17_i32_33 dim 1 : vector<1x512xf32>, i32 -> vector<1x512xf32>
    %94 = vector.extract_strided_slice %14 {offsets = [0, 0], sizes = [1, 512], strides = [1, 1]} : vector<9x512xf32> to vector<1x512xf32>
    %95 = arith.mulf %93, %94 : vector<1x512xf32>
    %c16_i32_34 = arith.constant 16 : i32
    %96 = tpu.dynamic_rotate %66 by %c16_i32_34 dim 1 : vector<1x512xf32>, i32 -> vector<1x512xf32>
    %97 = vector.extract_strided_slice %14 {offsets = [1, 0], sizes = [1, 512], strides = [1, 1]} : vector<9x512xf32> to vector<1x512xf32>
    %98 = arith.mulf %96, %97 : vector<1x512xf32>
    %c15_i32_35 = arith.constant 15 : i32
    %99 = tpu.dynamic_rotate %66 by %c15_i32_35 dim 1 : vector<1x512xf32>, i32 -> vector<1x512xf32>
    %100 = vector.extract_strided_slice %14 {offsets = [2, 0], sizes = [1, 512], strides = [1, 1]} : vector<9x512xf32> to vector<1x512xf32>
    %101 = arith.mulf %99, %100 : vector<1x512xf32>
    %c1_i32_36 = arith.constant 1 : i32
    %102 = tpu.dynamic_rotate %66 by %c1_i32_36 dim 1 : vector<1x512xf32>, i32 -> vector<1x512xf32>
    %103 = vector.extract_strided_slice %14 {offsets = [3, 0], sizes = [1, 512], strides = [1, 1]} : vector<9x512xf32> to vector<1x512xf32>
    %104 = arith.mulf %102, %103 : vector<1x512xf32>
    %105 = vector.extract_strided_slice %14 {offsets = [4, 0], sizes = [1, 512], strides = [1, 1]} : vector<9x512xf32> to vector<1x512xf32>
    %106 = arith.mulf %66, %105 : vector<1x512xf32>
    %c511_i32_37 = arith.constant 511 : i32
    %107 = tpu.dynamic_rotate %66 by %c511_i32_37 dim 1 : vector<1x512xf32>, i32 -> vector<1x512xf32>
    %108 = vector.extract_strided_slice %14 {offsets = [5, 0], sizes = [1, 512], strides = [1, 1]} : vector<9x512xf32> to vector<1x512xf32>
    %109 = arith.mulf %107, %108 : vector<1x512xf32>
    %c497_i32_38 = arith.constant 497 : i32
    %110 = tpu.dynamic_rotate %66 by %c497_i32_38 dim 1 : vector<1x512xf32>, i32 -> vector<1x512xf32>
    %111 = vector.extract_strided_slice %14 {offsets = [6, 0], sizes = [1, 512], strides = [1, 1]} : vector<9x512xf32> to vector<1x512xf32>
    %112 = arith.mulf %110, %111 : vector<1x512xf32>
    %c496_i32_39 = arith.constant 496 : i32
    %113 = tpu.dynamic_rotate %66 by %c496_i32_39 dim 1 : vector<1x512xf32>, i32 -> vector<1x512xf32>
    %114 = vector.extract_strided_slice %14 {offsets = [7, 0], sizes = [1, 512], strides = [1, 1]} : vector<9x512xf32> to vector<1x512xf32>
    %115 = arith.mulf %113, %114 : vector<1x512xf32>
    %c495_i32_40 = arith.constant 495 : i32
    %116 = tpu.dynamic_rotate %66 by %c495_i32_40 dim 1 : vector<1x512xf32>, i32 -> vector<1x512xf32>
    %117 = vector.extract_strided_slice %14 {offsets = [8, 0], sizes = [1, 512], strides = [1, 1]} : vector<9x512xf32> to vector<1x512xf32>
    %118 = arith.mulf %116, %117 : vector<1x512xf32>
    %119 = tpu.concatenate %69, %72, %75, %78, %80, %83, %86, %89, %92, %95, %98, %101, %104, %106, %109, %112 in 0 : vector<1x512xf32>, vector<1x512xf32>, vector<1x512xf32>, vector<1x512xf32>, vector<1x512xf32>, vector<1x512xf32>, vector<1x512xf32>, vector<1x512xf32>, vector<1x512xf32>, vector<1x512xf32>, vector<1x512xf32>, vector<1x512xf32>, vector<1x512xf32>, vector<1x512xf32>, vector<1x512xf32>, vector<1x512xf32> -> vector<16x512xf32>
    %120 = tpu.concatenate %115, %118 in 0 : vector<1x512xf32>, vector<1x512xf32> -> vector<2x512xf32>
    %121 = tpu.concatenate %119, %120 in 0 : vector<16x512xf32>, vector<2x512xf32> -> vector<18x512xf32>
    %c0_41 = arith.constant 0 : index
    %c0_42 = arith.constant 0 : index
    %122 = vector.load %arg8[%c0_41, %c0_42] : memref<1x18xf32, #tpu.memory_space<vmem>>, vector<1x18xf32>
    %cst_43 = arith.constant dense<0.000000e+00> : vector<1x512xf32>
    %123 = tpu.matmul %122, %121, %cst_43 {dimension_numbers = #tpu.dot_dimension_numbers<[1], [0], [0], [1], [0, 0, 1, 1], [], []>} : vector<1x18xf32>, vector<18x512xf32>, vector<1x512xf32> -> vector<1x512xf32>
    %cst_44 = arith.constant 0.000000e+00 : f32
    %124 = vector.broadcast %cst_44 : f32 to vector<1x512xf32>
    %125 = arith.subf %124, %123 : vector<1x512xf32>
    %126 = math.exp %125 : vector<1x512xf32>
    %cst_45 = arith.constant 1.000000e+00 : f32
    %127 = vector.broadcast %cst_45 : f32 to vector<1x512xf32>
    %128 = arith.addf %127, %126 : vector<1x512xf32>
    %cst_46 = arith.constant 1.000000e+00 : f32
    %129 = vector.broadcast %cst_46 : f32 to vector<1x512xf32>
    %130 = arith.divf %129, %128 : vector<1x512xf32>
    %131 = vector.broadcast %130 : vector<1x512xf32> to vector<10x512xf32>
    %132 = arith.mulf %60, %131 : vector<10x512xf32>
    %c511_i32_47 = arith.constant 511 : i32
    %133 = tpu.dynamic_rotate %132 by %c511_i32_47 dim 1 : vector<10x512xf32>, i32 -> vector<10x512xf32>
    %134 = arith.maximumf %132, %133 : vector<10x512xf32>
    %c496_i32_48 = arith.constant 496 : i32
    %135 = tpu.dynamic_rotate %134 by %c496_i32_48 dim 1 : vector<10x512xf32>, i32 -> vector<10x512xf32>
    %136 = arith.maximumf %134, %135 : vector<10x512xf32>
    %c0_49 = arith.constant 0 : index
    %c0_50 = arith.constant 0 : index
    %137 = vector.load %arg22[%c0_49, %c0_50] : memref<512x128xf32, #tpu.memory_space<vmem>>, vector<512x128xf32>
    %cst_51 = arith.constant dense<0.000000e+00> : vector<10x128xf32>
    %138 = tpu.matmul %136, %137, %cst_51 {dimension_numbers = #tpu.dot_dimension_numbers<[1], [0], [0], [1], [0, 0, 1, 1], [], []>} : vector<10x512xf32>, vector<512x128xf32>, vector<10x128xf32> -> vector<10x128xf32>
    %c9_i32 = arith.constant 9 : i32
    %139 = tpu.dynamic_rotate %138 by %c9_i32 dim 1 : vector<10x128xf32>, i32 -> vector<10x128xf32>
    %c8_i32 = arith.constant 8 : i32
    %140 = tpu.dynamic_rotate %138 by %c8_i32 dim 1 : vector<10x128xf32>, i32 -> vector<10x128xf32>
    %c7_i32 = arith.constant 7 : i32
    %141 = tpu.dynamic_rotate %138 by %c7_i32 dim 1 : vector<10x128xf32>, i32 -> vector<10x128xf32>
    %c1_i32_52 = arith.constant 1 : i32
    %142 = tpu.dynamic_rotate %138 by %c1_i32_52 dim 1 : vector<10x128xf32>, i32 -> vector<10x128xf32>
    %c127_i32 = arith.constant 127 : i32
    %143 = tpu.dynamic_rotate %138 by %c127_i32 dim 1 : vector<10x128xf32>, i32 -> vector<10x128xf32>
    %c121_i32 = arith.constant 121 : i32
    %144 = tpu.dynamic_rotate %138 by %c121_i32 dim 1 : vector<10x128xf32>, i32 -> vector<10x128xf32>
    %c120_i32 = arith.constant 120 : i32
    %145 = tpu.dynamic_rotate %138 by %c120_i32 dim 1 : vector<10x128xf32>, i32 -> vector<10x128xf32>
    %c119_i32 = arith.constant 119 : i32
    %146 = tpu.dynamic_rotate %138 by %c119_i32 dim 1 : vector<10x128xf32>, i32 -> vector<10x128xf32>
    %147 = tpu.concatenate %139, %140, %141, %142, %138, %143, %144, %145, %146 in 0 : vector<10x128xf32>, vector<10x128xf32>, vector<10x128xf32>, vector<10x128xf32>, vector<10x128xf32>, vector<10x128xf32>, vector<10x128xf32>, vector<10x128xf32>, vector<10x128xf32> -> vector<90x128xf32>
    %c0_53 = arith.constant 0 : index
    %c0_54 = arith.constant 0 : index
    %148 = vector.load %arg9[%c0_53, %c0_54] : memref<12x90xf32, #tpu.memory_space<vmem>>, vector<12x90xf32>
    %cst_55 = arith.constant dense<0.000000e+00> : vector<12x128xf32>
    %149 = tpu.matmul %148, %147, %cst_55 {dimension_numbers = #tpu.dot_dimension_numbers<[1], [0], [0], [1], [0, 0, 1, 1], [], []>} : vector<12x90xf32>, vector<90x128xf32>, vector<12x128xf32> -> vector<12x128xf32>
    %c0_56 = arith.constant 0 : index
    %c0_57 = arith.constant 0 : index
    %150 = vector.load %arg10[%c0_56, %c0_57] : memref<12x1xf32, #tpu.memory_space<vmem>>, vector<12x1xf32>
    %151 = vector.broadcast %150 : vector<12x1xf32> to vector<12x128xf32>
    %152 = arith.addf %149, %151 : vector<12x128xf32>
    %cst_58 = arith.constant 0.000000e+00 : f32
    %153 = vector.broadcast %cst_58 : f32 to vector<12x128xf32>
    %154 = arith.maximumf %152, %153 : vector<12x128xf32>
    %c0_59 = arith.constant 0 : index
    %c0_60 = arith.constant 0 : index
    %155 = vector.load %arg11[%c0_59, %c0_60] : memref<12x1xf32, #tpu.memory_space<vmem>>, vector<12x1xf32>
    %156 = vector.broadcast %155 : vector<12x1xf32> to vector<12x128xf32>
    %157 = arith.mulf %154, %156 : vector<12x128xf32>
    %c0_61 = arith.constant 0 : index
    %c0_62 = arith.constant 0 : index
    %158 = vector.load %arg12[%c0_61, %c0_62] : memref<12x1xf32, #tpu.memory_space<vmem>>, vector<12x1xf32>
    %159 = vector.broadcast %158 : vector<12x1xf32> to vector<12x128xf32>
    %160 = arith.addf %157, %159 : vector<12x128xf32>
    %c0_63 = arith.constant 0 : index
    %c0_64 = arith.constant 0 : index
    %161 = vector.load %arg21[%c0_63, %c0_64] : memref<1x128xf32, #tpu.memory_space<vmem>>, vector<1x128xf32>
    %162 = vector.broadcast %161 : vector<1x128xf32> to vector<12x128xf32>
    %163 = arith.mulf %160, %162 : vector<12x128xf32>
    %cst_65 = arith.constant dense<0.000000e+00> : vector<128xf32>
    %164 = vector.multi_reduction <add>, %163, %cst_65 [0] : vector<12x128xf32> to vector<128xf32>
    %165 = vector.shape_cast %164 : vector<128xf32> to vector<1x128xf32>
    %cst_66 = arith.constant 1.200000e+01 : f32
    %166 = vector.broadcast %cst_66 : f32 to vector<1x128xf32>
    %167 = arith.divf %165, %166 : vector<1x128xf32>
    %cst_67 = arith.constant dense<0xFF800000> : vector<128xf32>
    %168 = vector.multi_reduction <maximumf>, %163, %cst_67 [0] : vector<12x128xf32> to vector<128xf32>
    %169 = vector.shape_cast %168 : vector<128xf32> to vector<1x128xf32>
    %c9_i32_68 = arith.constant 9 : i32
    %170 = tpu.dynamic_rotate %167 by %c9_i32_68 dim 1 : vector<1x128xf32>, i32 -> vector<1x128xf32>
    %c8_i32_69 = arith.constant 8 : i32
    %171 = tpu.dynamic_rotate %167 by %c8_i32_69 dim 1 : vector<1x128xf32>, i32 -> vector<1x128xf32>
    %c7_i32_70 = arith.constant 7 : i32
    %172 = tpu.dynamic_rotate %167 by %c7_i32_70 dim 1 : vector<1x128xf32>, i32 -> vector<1x128xf32>
    %c1_i32_71 = arith.constant 1 : i32
    %173 = tpu.dynamic_rotate %167 by %c1_i32_71 dim 1 : vector<1x128xf32>, i32 -> vector<1x128xf32>
    %c127_i32_72 = arith.constant 127 : i32
    %174 = tpu.dynamic_rotate %167 by %c127_i32_72 dim 1 : vector<1x128xf32>, i32 -> vector<1x128xf32>
    %c121_i32_73 = arith.constant 121 : i32
    %175 = tpu.dynamic_rotate %167 by %c121_i32_73 dim 1 : vector<1x128xf32>, i32 -> vector<1x128xf32>
    %c120_i32_74 = arith.constant 120 : i32
    %176 = tpu.dynamic_rotate %167 by %c120_i32_74 dim 1 : vector<1x128xf32>, i32 -> vector<1x128xf32>
    %c119_i32_75 = arith.constant 119 : i32
    %177 = tpu.dynamic_rotate %167 by %c119_i32_75 dim 1 : vector<1x128xf32>, i32 -> vector<1x128xf32>
    %c9_i32_76 = arith.constant 9 : i32
    %178 = tpu.dynamic_rotate %169 by %c9_i32_76 dim 1 : vector<1x128xf32>, i32 -> vector<1x128xf32>
    %c8_i32_77 = arith.constant 8 : i32
    %179 = tpu.dynamic_rotate %169 by %c8_i32_77 dim 1 : vector<1x128xf32>, i32 -> vector<1x128xf32>
    %c7_i32_78 = arith.constant 7 : i32
    %180 = tpu.dynamic_rotate %169 by %c7_i32_78 dim 1 : vector<1x128xf32>, i32 -> vector<1x128xf32>
    %c1_i32_79 = arith.constant 1 : i32
    %181 = tpu.dynamic_rotate %169 by %c1_i32_79 dim 1 : vector<1x128xf32>, i32 -> vector<1x128xf32>
    %c127_i32_80 = arith.constant 127 : i32
    %182 = tpu.dynamic_rotate %169 by %c127_i32_80 dim 1 : vector<1x128xf32>, i32 -> vector<1x128xf32>
    %c121_i32_81 = arith.constant 121 : i32
    %183 = tpu.dynamic_rotate %169 by %c121_i32_81 dim 1 : vector<1x128xf32>, i32 -> vector<1x128xf32>
    %c120_i32_82 = arith.constant 120 : i32
    %184 = tpu.dynamic_rotate %169 by %c120_i32_82 dim 1 : vector<1x128xf32>, i32 -> vector<1x128xf32>
    %c119_i32_83 = arith.constant 119 : i32
    %185 = tpu.dynamic_rotate %169 by %c119_i32_83 dim 1 : vector<1x128xf32>, i32 -> vector<1x128xf32>
    %186 = tpu.concatenate %170, %171, %172, %173, %167, %174, %175, %176, %177, %178, %179, %180, %181, %169, %182, %183 in 0 : vector<1x128xf32>, vector<1x128xf32>, vector<1x128xf32>, vector<1x128xf32>, vector<1x128xf32>, vector<1x128xf32>, vector<1x128xf32>, vector<1x128xf32>, vector<1x128xf32>, vector<1x128xf32>, vector<1x128xf32>, vector<1x128xf32>, vector<1x128xf32>, vector<1x128xf32>, vector<1x128xf32>, vector<1x128xf32> -> vector<16x128xf32>
    %187 = tpu.concatenate %184, %185 in 0 : vector<1x128xf32>, vector<1x128xf32> -> vector<2x128xf32>
    %188 = tpu.concatenate %186, %187 in 0 : vector<16x128xf32>, vector<2x128xf32> -> vector<18x128xf32>
    %c0_84 = arith.constant 0 : index
    %c0_85 = arith.constant 0 : index
    %189 = vector.load %arg13[%c0_84, %c0_85] : memref<1x18xf32, #tpu.memory_space<vmem>>, vector<1x18xf32>
    %cst_86 = arith.constant dense<0.000000e+00> : vector<1x128xf32>
    %190 = tpu.matmul %189, %188, %cst_86 {dimension_numbers = #tpu.dot_dimension_numbers<[1], [0], [0], [1], [0, 0, 1, 1], [], []>} : vector<1x18xf32>, vector<18x128xf32>, vector<1x128xf32> -> vector<1x128xf32>
    %cst_87 = arith.constant 0.000000e+00 : f32
    %191 = vector.broadcast %cst_87 : f32 to vector<1x128xf32>
    %192 = arith.subf %191, %190 : vector<1x128xf32>
    %193 = math.exp %192 : vector<1x128xf32>
    %cst_88 = arith.constant 1.000000e+00 : f32
    %194 = vector.broadcast %cst_88 : f32 to vector<1x128xf32>
    %195 = arith.addf %194, %193 : vector<1x128xf32>
    %cst_89 = arith.constant 1.000000e+00 : f32
    %196 = vector.broadcast %cst_89 : f32 to vector<1x128xf32>
    %197 = arith.divf %196, %195 : vector<1x128xf32>
    %198 = vector.broadcast %197 : vector<1x128xf32> to vector<12x128xf32>
    %199 = arith.mulf %163, %198 : vector<12x128xf32>
    %c127_i32_90 = arith.constant 127 : i32
    %200 = tpu.dynamic_rotate %199 by %c127_i32_90 dim 1 : vector<12x128xf32>, i32 -> vector<12x128xf32>
    %201 = arith.maximumf %199, %200 : vector<12x128xf32>
    %c120_i32_91 = arith.constant 120 : i32
    %202 = tpu.dynamic_rotate %201 by %c120_i32_91 dim 1 : vector<12x128xf32>, i32 -> vector<12x128xf32>
    %203 = arith.maximumf %201, %202 : vector<12x128xf32>
    %c0_92 = arith.constant 0 : index
    %c0_93 = arith.constant 0 : index
    %204 = vector.load %arg23[%c0_92, %c0_93] : memref<128x18xf32, #tpu.memory_space<vmem>>, vector<128x18xf32>
    %cst_94 = arith.constant dense<0.000000e+00> : vector<12x18xf32>
    %205 = tpu.matmul %203, %204, %cst_94 {dimension_numbers = #tpu.dot_dimension_numbers<[1], [0], [0], [1], [0, 0, 1, 1], [], []>} : vector<12x128xf32>, vector<128x18xf32>, vector<12x18xf32> -> vector<12x18xf32>
    %206 = vector.extract_strided_slice %205 {offsets = [0, 0], sizes = [12, 2], strides = [1, 1]} : vector<12x18xf32> to vector<12x2xf32>
    %207 = vector.extract_strided_slice %205 {offsets = [0, 2], sizes = [12, 2], strides = [1, 1]} : vector<12x18xf32> to vector<12x2xf32>
    %208 = vector.extract_strided_slice %205 {offsets = [0, 4], sizes = [12, 2], strides = [1, 1]} : vector<12x18xf32> to vector<12x2xf32>
    %209 = vector.extract_strided_slice %205 {offsets = [0, 6], sizes = [12, 2], strides = [1, 1]} : vector<12x18xf32> to vector<12x2xf32>
    %210 = vector.extract_strided_slice %205 {offsets = [0, 8], sizes = [12, 2], strides = [1, 1]} : vector<12x18xf32> to vector<12x2xf32>
    %211 = vector.extract_strided_slice %205 {offsets = [0, 10], sizes = [12, 2], strides = [1, 1]} : vector<12x18xf32> to vector<12x2xf32>
    %212 = vector.extract_strided_slice %205 {offsets = [0, 12], sizes = [12, 2], strides = [1, 1]} : vector<12x18xf32> to vector<12x2xf32>
    %213 = vector.extract_strided_slice %205 {offsets = [0, 14], sizes = [12, 2], strides = [1, 1]} : vector<12x18xf32> to vector<12x2xf32>
    %214 = vector.extract_strided_slice %205 {offsets = [0, 16], sizes = [12, 2], strides = [1, 1]} : vector<12x18xf32> to vector<12x2xf32>
    %215 = tpu.concatenate %206, %207, %208, %209, %210, %211, %212, %213, %214 in 0 : vector<12x2xf32>, vector<12x2xf32>, vector<12x2xf32>, vector<12x2xf32>, vector<12x2xf32>, vector<12x2xf32>, vector<12x2xf32>, vector<12x2xf32>, vector<12x2xf32> -> vector<108x2xf32>
    %c0_95 = arith.constant 0 : index
    %c0_96 = arith.constant 0 : index
    %216 = vector.load %arg14[%c0_95, %c0_96] : memref<420x108xf32, #tpu.memory_space<vmem>>, vector<420x108xf32>
    %cst_97 = arith.constant dense<0.000000e+00> : vector<420x2xf32>
    %217 = tpu.matmul %216, %215, %cst_97 {dimension_numbers = #tpu.dot_dimension_numbers<[1], [0], [0], [1], [0, 0, 1, 1], [], []>} : vector<420x108xf32>, vector<108x2xf32>, vector<420x2xf32> -> vector<420x2xf32>
    %c0_98 = arith.constant 0 : index
    %c0_99 = arith.constant 0 : index
    %218 = vector.load %arg15[%c0_98, %c0_99] : memref<420x1xf32, #tpu.memory_space<vmem>>, vector<420x1xf32>
    %219 = vector.broadcast %218 : vector<420x1xf32> to vector<420x2xf32>
    %220 = arith.addf %217, %219 : vector<420x2xf32>
    %cst_100 = arith.constant 0.000000e+00 : f32
    %221 = vector.broadcast %cst_100 : f32 to vector<420x2xf32>
    %222 = arith.maximumf %220, %221 : vector<420x2xf32>
    %c0_101 = arith.constant 0 : index
    %c0_102 = arith.constant 0 : index
    %223 = vector.load %arg16[%c0_101, %c0_102] : memref<250x420xf32, #tpu.memory_space<vmem>>, vector<250x420xf32>
    %cst_103 = arith.constant dense<0.000000e+00> : vector<250x2xf32>
    %224 = tpu.matmul %223, %222, %cst_103 {dimension_numbers = #tpu.dot_dimension_numbers<[1], [0], [0], [1], [0, 0, 1, 1], [], []>} : vector<250x420xf32>, vector<420x2xf32>, vector<250x2xf32> -> vector<250x2xf32>
    %c0_104 = arith.constant 0 : index
    %c0_105 = arith.constant 0 : index
    %225 = vector.load %arg17[%c0_104, %c0_105] : memref<250x1xf32, #tpu.memory_space<vmem>>, vector<250x1xf32>
    %226 = vector.broadcast %225 : vector<250x1xf32> to vector<250x2xf32>
    %227 = arith.addf %224, %226 : vector<250x2xf32>
    %cst_106 = arith.constant 0.000000e+00 : f32
    %228 = vector.broadcast %cst_106 : f32 to vector<250x2xf32>
    %229 = arith.maximumf %227, %228 : vector<250x2xf32>
    %c0_107 = arith.constant 0 : index
    %c0_108 = arith.constant 0 : index
    %230 = vector.load %arg18[%c0_107, %c0_108] : memref<10x250xf32, #tpu.memory_space<vmem>>, vector<10x250xf32>
    %cst_109 = arith.constant dense<0.000000e+00> : vector<10x2xf32>
    %231 = tpu.matmul %230, %229, %cst_109 {dimension_numbers = #tpu.dot_dimension_numbers<[1], [0], [0], [1], [0, 0, 1, 1], [], []>} : vector<10x250xf32>, vector<250x2xf32>, vector<10x2xf32> -> vector<10x2xf32>
    %c0_110 = arith.constant 0 : index
    %c0_111 = arith.constant 0 : index
    %232 = vector.load %arg19[%c0_110, %c0_111] : memref<10x1xf32, #tpu.memory_space<vmem>>, vector<10x1xf32>
    %233 = vector.broadcast %232 : vector<10x1xf32> to vector<10x2xf32>
    %234 = arith.addf %231, %233 : vector<10x2xf32>
    %c0_112 = arith.constant 0 : index
    %c0_113 = arith.constant 0 : index
    %c0_114 = arith.constant 0 : index
    %235 = vector.load %arg24[%c0_112, %c0_113, %c0_114] : memref<1x10x2xf32, #tpu.memory_space<vmem>>, vector<1x10x2xf32>
    %236 = vector.shape_cast %235 : vector<1x10x2xf32> to vector<10x2xf32>
    %237 = vector.shape_cast %234 : vector<10x2xf32> to vector<1x10x2xf32>
    tpu.vector_store %arg24[%c0_112, %c0_113, %c0_114], %237 {strides = array<i32>} : memref<1x10x2xf32, #tpu.memory_space<vmem>>, vector<1x10x2xf32>,
    return
  }
  func.func @transform_0(%arg0: i32) -> (i32, i32) {
    %c0_i32 = arith.constant 0 : i32
    %c0_i32_0 = arith.constant 0 : i32
    return %c0_i32, %arg0 : i32, i32
  }
  func.func @transform_1(%arg0: i32) -> (i32, i32) {
    %c0_i32 = arith.constant 0 : i32
    %c0_i32_0 = arith.constant 0 : i32
    %c0_i32_1 = arith.constant 0 : i32
    return %c0_i32, %c0_i32_0 : i32, i32
  }
  func.func @transform_2(%arg0: i32) -> (i32, i32) {
    %c0_i32 = arith.constant 0 : i32
    %c0_i32_0 = arith.constant 0 : i32
    %c0_i32_1 = arith.constant 0 : i32
    return %c0_i32, %c0_i32_0 : i32, i32
  }
  func.func @transform_3(%arg0: i32) -> (i32, i32) {
    %c0_i32 = arith.constant 0 : i32
    %c0_i32_0 = arith.constant 0 : i32
    %c0_i32_1 = arith.constant 0 : i32
    return %c0_i32, %c0_i32_0 : i32, i32
  }
  func.func @transform_4(%arg0: i32) -> (i32, i32) {
    %c0_i32 = arith.constant 0 : i32
    %c0_i32_0 = arith.constant 0 : i32
    %c0_i32_1 = arith.constant 0 : i32
    return %c0_i32, %c0_i32_0 : i32, i32
  }
  func.func @transform_5(%arg0: i32) -> (i32, i32) {
    %c0_i32 = arith.constant 0 : i32
    %c0_i32_0 = arith.constant 0 : i32
    %c0_i32_1 = arith.constant 0 : i32
    return %c0_i32, %c0_i32_0 : i32, i32
  }
  func.func @transform_6(%arg0: i32) -> (i32, i32) {
    %c0_i32 = arith.constant 0 : i32
    %c0_i32_0 = arith.constant 0 : i32
    %c0_i32_1 = arith.constant 0 : i32
    return %c0_i32, %c0_i32_0 : i32, i32
  }
  func.func @transform_7(%arg0: i32) -> (i32, i32) {
    %c0_i32 = arith.constant 0 : i32
    %c0_i32_0 = arith.constant 0 : i32
    %c0_i32_1 = arith.constant 0 : i32
    return %c0_i32, %c0_i32_0 : i32, i32
  }
  func.func @transform_8(%arg0: i32) -> (i32, i32) {
    %c0_i32 = arith.constant 0 : i32
    %c0_i32_0 = arith.constant 0 : i32
    %c0_i32_1 = arith.constant 0 : i32
    return %c0_i32, %c0_i32_0 : i32, i32
  }
  func.func @transform_9(%arg0: i32) -> (i32, i32) {
    %c0_i32 = arith.constant 0 : i32
    %c0_i32_0 = arith.constant 0 : i32
    %c0_i32_1 = arith.constant 0 : i32
    return %c0_i32, %c0_i32_0 : i32, i32
  }
  func.func @transform_10(%arg0: i32) -> (i32, i32) {
    %c0_i32 = arith.constant 0 : i32
    %c0_i32_0 = arith.constant 0 : i32
    %c0_i32_1 = arith.constant 0 : i32
    return %c0_i32, %c0_i32_0 : i32, i32
  }
  func.func @transform_11(%arg0: i32) -> (i32, i32) {
    %c0_i32 = arith.constant 0 : i32
    %c0_i32_0 = arith.constant 0 : i32
    %c0_i32_1 = arith.constant 0 : i32
    return %c0_i32, %c0_i32_0 : i32, i32
  }
  func.func @transform_12(%arg0: i32) -> (i32, i32) {
    %c0_i32 = arith.constant 0 : i32
    %c0_i32_0 = arith.constant 0 : i32
    %c0_i32_1 = arith.constant 0 : i32
    return %c0_i32, %c0_i32_0 : i32, i32
  }
  func.func @transform_13(%arg0: i32) -> (i32, i32) {
    %c0_i32 = arith.constant 0 : i32
    %c0_i32_0 = arith.constant 0 : i32
    %c0_i32_1 = arith.constant 0 : i32
    return %c0_i32, %c0_i32_0 : i32, i32
  }
  func.func @transform_14(%arg0: i32) -> (i32, i32) {
    %c0_i32 = arith.constant 0 : i32
    %c0_i32_0 = arith.constant 0 : i32
    %c0_i32_1 = arith.constant 0 : i32
    return %c0_i32, %c0_i32_0 : i32, i32
  }
  func.func @transform_15(%arg0: i32) -> (i32, i32) {
    %c0_i32 = arith.constant 0 : i32
    %c0_i32_0 = arith.constant 0 : i32
    %c0_i32_1 = arith.constant 0 : i32
    return %c0_i32, %c0_i32_0 : i32, i32
  }
  func.func @transform_16(%arg0: i32) -> (i32, i32) {
    %c0_i32 = arith.constant 0 : i32
    %c0_i32_0 = arith.constant 0 : i32
    %c0_i32_1 = arith.constant 0 : i32
    return %c0_i32, %c0_i32_0 : i32, i32
  }
  func.func @transform_17(%arg0: i32) -> (i32, i32) {
    %c0_i32 = arith.constant 0 : i32
    %c0_i32_0 = arith.constant 0 : i32
    %c0_i32_1 = arith.constant 0 : i32
    return %c0_i32, %c0_i32_0 : i32, i32
  }
  func.func @transform_18(%arg0: i32) -> (i32, i32) {
    %c0_i32 = arith.constant 0 : i32
    %c0_i32_0 = arith.constant 0 : i32
    %c0_i32_1 = arith.constant 0 : i32
    return %c0_i32, %c0_i32_0 : i32, i32
  }
  func.func @transform_19(%arg0: i32) -> (i32, i32) {
    %c0_i32 = arith.constant 0 : i32
    %c0_i32_0 = arith.constant 0 : i32
    %c0_i32_1 = arith.constant 0 : i32
    return %c0_i32, %c0_i32_0 : i32, i32
  }
  func.func @transform_20(%arg0: i32) -> (i32, i32) {
    %c0_i32 = arith.constant 0 : i32
    %c0_i32_0 = arith.constant 0 : i32
    %c0_i32_1 = arith.constant 0 : i32
    return %c0_i32, %c0_i32_0 : i32, i32
  }
  func.func @transform_21(%arg0: i32) -> (i32, i32) {
    %c0_i32 = arith.constant 0 : i32
    %c0_i32_0 = arith.constant 0 : i32
    %c0_i32_1 = arith.constant 0 : i32
    return %c0_i32, %c0_i32_0 : i32, i32
  }
  func.func @transform_22(%arg0: i32) -> (i32, i32) {
    %c0_i32 = arith.constant 0 : i32
    %c0_i32_0 = arith.constant 0 : i32
    %c0_i32_1 = arith.constant 0 : i32
    return %c0_i32, %c0_i32_0 : i32, i32
  }
  func.func @transform_23(%arg0: i32) -> (i32, i32, i32) {
    %c0_i32 = arith.constant 0 : i32
    %c0_i32_0 = arith.constant 0 : i32
    %c0_i32_1 = arith.constant 0 : i32
    return %arg0, %c0_i32, %c0_i32_0 : i32, i32, i32
  }
}

</mosaic_0001>

<llo_original>
// kernel: nmnet_forward.1
$region0: #{nmnet_forward.1}
  #allocation0 [shape = 'u32[]', space=smem, size = 0x4, offset = 0x4, fixed_abs, tag = 'smem constant byte address 0x4 - core index']
  #allocation1 [shape = 'u32[144,128]{1,0:T(1,128)}', space=vmem, size = 0x12000, scoped, tag = 'internal scratch']
  #allocation2 [shape = 'f32[1,1]{1,0:T(1,128)S(1)}', space=vmem, size = 0x200, scoped, tag = 'scoped memory for nmnet_forward.1']
  %s0 = inlined_call_operand.vmem [shape: f32[4,512], index: 0, kind: input, shape index: {}]
  %s1 = inlined_call_operand.vmem [shape: f32[1,4], index: 1, kind: input, shape index: {}]
  %s2 = inlined_call_operand.<no memory space> [shape: f32[1,1], index: 2, kind: input, shape index: {}]
  %s3 = inlined_call_operand.vmem [shape: f32[10,9], index: 3, kind: input, shape index: {}]
  %s4 = inlined_call_operand.vmem [shape: f32[10,1], index: 4, kind: input, shape index: {}]
  %s5 = inlined_call_operand.vmem [shape: f32[10,1], index: 5, kind: input, shape index: {}]
  %s6 = inlined_call_operand.vmem [shape: f32[10,1], index: 6, kind: input, shape index: {}]
  %s7 = inlined_call_operand.vmem [shape: f32[1,18], index: 7, kind: input, shape index: {}]
  %s8 = inlined_call_operand.vmem [shape: f32[12,90], index: 8, kind: input, shape index: {}]
  %s9 = inlined_call_operand.vmem [shape: f32[12,1], index: 9, kind: input, shape index: {}]
  %s10 = inlined_call_operand.vmem [shape: f32[12,1], index: 10, kind: input, shape index: {}]
  %s11 = inlined_call_operand.vmem [shape: f32[12,1], index: 11, kind: input, shape index: {}]
  %s12 = inlined_call_operand.vmem [shape: f32[1,18], index: 12, kind: input, shape index: {}]
  %s13 = inlined_call_operand.vmem [shape: f32[420,108], index: 13, kind: input, shape index: {}]
  %s14 = inlined_call_operand.vmem [shape: f32[420,1], index: 14, kind: input, shape index: {}]
  %s15 = inlined_call_operand.vmem [shape: f32[250,420], index: 15, kind: input, shape index: {}]
  %s16 = inlined_call_operand.vmem [shape: f32[250,1], index: 16, kind: input, shape index: {}]
  %s17 = inlined_call_operand.vmem [shape: f32[10,250], index: 17, kind: input, shape index: {}]
  %s18 = inlined_call_operand.vmem [shape: f32[10,1], index: 18, kind: input, shape index: {}]
  %s19 = inlined_call_operand.vmem [shape: f32[9,512], index: 19, kind: input, shape index: {}]
  %s20 = inlined_call_operand.vmem [shape: f32[1,128], index: 20, kind: input, shape index: {}]
  %s21 = inlined_call_operand.vmem [shape: f32[512,128], index: 21, kind: input, shape index: {}]
  %s22 = inlined_call_operand.vmem [shape: f32[128,18], index: 22, kind: input, shape index: {}]
  %s23 = inlined_call_operand.vmem [shape: f32[1,10,2], index: 23, kind: output, shape index: {}]
  %s24 = sld [smem:[#allocation0]]
  $region102: #{nmnet_forward.1} parent=0
    _
  %s26 = ssub.s32 1, %s24
  %s27 = scalar_select 0, %s26, %s24
  %v28 = vstv %s2
  %29 = vst [vmem:[#allocation2] sm:$0x1] %v28
  // Predicated region
  $region2: #{nmnet_forward.1} parent=0 // pred_check
    _
  $region3: #{nmnet_forward.1} parent=0 // pred_check_branch
    %31 = sbr.rel (0) target = $region5
  $region4: #{nmnet_forward.1} parent=0 // pred_region
    _
  $region5: #{nmnet_forward.1} parent=0 // pred_fallthru
    _
  // Predicated region
  $region6: #{nmnet_forward.1} parent=0 // pred_check
    _
  $region7: #{nmnet_forward.1} parent=0 // pred_check_branch
    %33 = sbr.rel (0) target = $region9
  $region8: #{nmnet_forward.1} parent=0 // pred_region
    _
  $region9: #{nmnet_forward.1} parent=0 // pred_fallthru
    _
  // Predicated region
  $region10: #{nmnet_forward.1} parent=0 // pred_check
    _
  $region11: #{nmnet_forward.1} parent=0 // pred_check_branch
    %35 = sbr.rel (0) target = $region13
  $region12: #{nmnet_forward.1} parent=0 // pred_region
    _
  $region13: #{nmnet_forward.1} parent=0 // pred_fallthru
    _
  // Predicated region
  $region14: #{nmnet_forward.1} parent=0 // pred_check
    _
  $region15: #{nmnet_forward.1} parent=0 // pred_check_branch
    %37 = sbr.rel (0) target = $region17
  $region16: #{nmnet_forward.1} parent=0 // pred_region
    _
  $region17: #{nmnet_forward.1} parent=0 // pred_fallthru
    _
  // Predicated region
  $region18: #{nmnet_forward.1} parent=0 // pred_check
    _
  $region19: #{nmnet_forward.1} parent=0 // pred_check_branch
    %39 = sbr.rel (0) target = $region21
  $region20: #{nmnet_forward.1} parent=0 // pred_region
    _
  $region21: #{nmnet_forward.1} parent=0 // pred_fallthru
    _
  // Predicated region
  $region22: #{nmnet_forward.1} parent=0 // pred_check
    _
  $region23: #{nmnet_forward.1} parent=0 // pred_check_branch
    %41 = sbr.rel (0) target = $region25
  $region24: #{nmnet_forward.1} parent=0 // pred_region
    _
  $region25: #{nmnet_forward.1} parent=0 // pred_fallthru
    _
  // Predicated region
  $region26: #{nmnet_forward.1} parent=0 // pred_check
    _
  $region27: #{nmnet_forward.1} parent=0 // pred_check_branch
    %43 = sbr.rel (0) target = $region29
  $region28: #{nmnet_forward.1} parent=0 // pred_region
    _
  $region29: #{nmnet_forward.1} parent=0 // pred_fallthru
    _
  // Predicated region
  $region30: #{nmnet_forward.1} parent=0 // pred_check
    _
  $region31: #{nmnet_forward.1} parent=0 // pred_check_branch
    %45 = sbr.rel (0) target = $region33
  $region32: #{nmnet_forward.1} parent=0 // pred_region
    _
  $region33: #{nmnet_forward.1} parent=0 // pred_fallthru
    _
  // Predicated region
  $region34: #{nmnet_forward.1} parent=0 // pred_check
    _
  $region35: #{nmnet_forward.1} parent=0 // pred_check_branch
    %47 = sbr.rel (0) target = $region37
  $region36: #{nmnet_forward.1} parent=0 // pred_region
    _
  $region37: #{nmnet_forward.1} parent=0 // pred_fallthru
    _
  // Predicated region
  $region38: #{nmnet_forward.1} parent=0 // pred_check
    _
  $region39: #{nmnet_forward.1} parent=0 // pred_check_branch
    %49 = sbr.rel (0) target = $region41
  $region40: #{nmnet_forward.1} parent=0 // pred_region
    _
  $region41: #{nmnet_forward.1} parent=0 // pred_fallthru
    _
  // Predicated region
  $region42: #{nmnet_forward.1} parent=0 // pred_check
    _
  $region43: #{nmnet_forward.1} parent=0 // pred_check_branch
    %51 = sbr.rel (0) target = $region45
  $region44: #{nmnet_forward.1} parent=0 // pred_region
    _
  $region45: #{nmnet_forward.1} parent=0 // pred_fallthru
    _
  // Predicated region
  $region46: #{nmnet_forward.1} parent=0 // pred_check
    _
  $region47: #{nmnet_forward.1} parent=0 // pred_check_branch
    %53 = sbr.rel (0) target = $region49
  $region48: #{nmnet_forward.1} parent=0 // pred_region
    _
  $region49: #{nmnet_forward.1} parent=0 // pred_fallthru
    _
  // Predicated region
  $region50: #{nmnet_forward.1} parent=0 // pred_check
    _
  $region51: #{nmnet_forward.1} parent=0 // pred_check_branch
    %55 = sbr.rel (0) target = $region53
  $region52: #{nmnet_forward.1} parent=0 // pred_region
    _
  $region53: #{nmnet_forward.1} parent=0 // pred_fallthru
    _
  // Predicated region
  $region54: #{nmnet_forward.1} parent=0 // pred_check
    _
  $region55: #{nmnet_forward.1} parent=0 // pred_check_branch
    %57 = sbr.rel (0) target = $region57
  $region56: #{nmnet_forward.1} parent=0 // pred_region
    _
  $region57: #{nmnet_forward.1} parent=0 // pred_fallthru
    _
  // Predicated region
  $region58: #{nmnet_forward.1} parent=0 // pred_check
    _
  $region59: #{nmnet_forward.1} parent=0 // pred_check_branch
    %59 = sbr.rel (0) target = $region61
  $region60: #{nmnet_forward.1} parent=0 // pred_region
    _
  $region61: #{nmnet_forward.1} parent=0 // pred_fallthru
    _
  // Predicated region
  $region62: #{nmnet_forward.1} parent=0 // pred_check
    _
  $region63: #{nmnet_forward.1} parent=0 // pred_check_branch
    %61 = sbr.rel (0) target = $region65
  $region64: #{nmnet_forward.1} parent=0 // pred_region
    _
  $region65: #{nmnet_forward.1} parent=0 // pred_fallthru
    _
  // Predicated region
  $region66: #{nmnet_forward.1} parent=0 // pred_check
    _
  $region67: #{nmnet_forward.1} parent=0 // pred_check_branch
    %63 = sbr.rel (0) target = $region69
  $region68: #{nmnet_forward.1} parent=0 // pred_region
    _
  $region69: #{nmnet_forward.1} parent=0 // pred_fallthru
    _
  // Predicated region
  $region70: #{nmnet_forward.1} parent=0 // pred_check
    _
  $region71: #{nmnet_forward.1} parent=0 // pred_check_branch
    %65 = sbr.rel (0) target = $region73
  $region72: #{nmnet_forward.1} parent=0 // pred_region
    _
  $region73: #{nmnet_forward.1} parent=0 // pred_fallthru
    _
  // Predicated region
  $region74: #{nmnet_forward.1} parent=0 // pred_check
    _
  $region75: #{nmnet_forward.1} parent=0 // pred_check_branch
    %67 = sbr.rel (0) target = $region77
  $region76: #{nmnet_forward.1} parent=0 // pred_region
    _
  $region77: #{nmnet_forward.1} parent=0 // pred_fallthru
    _
  // Predicated region
  $region78: #{nmnet_forward.1} parent=0 // pred_check
    _
  $region79: #{nmnet_forward.1} parent=0 // pred_check_branch
    %69 = sbr.rel (0) target = $region81
  $region80: #{nmnet_forward.1} parent=0 // pred_region
    _
  $region81: #{nmnet_forward.1} parent=0 // pred_fallthru
    _
  // Predicated region
  $region82: #{nmnet_forward.1} parent=0 // pred_check
    _
  $region83: #{nmnet_forward.1} parent=0 // pred_check_branch
    %71 = sbr.rel (0) target = $region85
  $region84: #{nmnet_forward.1} parent=0 // pred_region
    _
  $region85: #{nmnet_forward.1} parent=0 // pred_fallthru
    _
  // Predicated region
  $region86: #{nmnet_forward.1} parent=0 // pred_check
    _
  $region87: #{nmnet_forward.1} parent=0 // pred_check_branch
    %73 = sbr.rel (0) target = $region89
  $region88: #{nmnet_forward.1} parent=0 // pred_region
    _
  $region89: #{nmnet_forward.1} parent=0 // pred_fallthru
    _
  // Predicated region
  $region90: #{nmnet_forward.1} parent=0 // pred_check
    _
  $region91: #{nmnet_forward.1} parent=0 // pred_check_branch
    %75 = sbr.rel (0) target = $region93
  $region92: #{nmnet_forward.1} parent=0 // pred_region
    _
  $region93: #{nmnet_forward.1} parent=0 // pred_fallthru
    _
  %v76 = vld [vmem:[%s0] sm:$0xff]
  %v77 = vld [vmem:[%s0 + $0x8] sm:$0xff]
  %v78 = vld [vmem:[%s1] sm:$0x1]
  %v79 = vld [vmem:[#allocation2] sm:$0x1]
  %81 = vset.pattern.permute.xlu0 0
  %82 = vperm.xlu0 %81, %v79
  %v83 = vpop.permute.xlu0 %82
  %v85 = vlaneseq
  %v86 = vshrl.u32 %v85, 7
  %v87 = vsub.s32 0, %v86
  %v88 = vrot.slane %v83, %v87
  %v91 = vcombine.high %v76, %v76
  %v92 = vcombine.high %v77, %v77
  %vm93 = vcmask 31744
  %v95 = vsel %vm93, %v78, 0
  %vm97 = vcmask 1043456
  %v98 = vsel %vm97, %v76, 0
  %v100 = vsel %vm97, %v91, 0
  %v102 = vsel %vm97, %v77, 0
  %v104 = vsel %vm97, %v92, 0
  %106 = vmatprep.subr.mxu0 0.0
  %107 = vmatpush1.msra.mxu0 0.0
  %108 = vmatprep.subr.mxu0 0.0
  %109 = vmatpush1.msra.mxu0 0.0
  %110 = vmatprep.subr.mxu0 0.0
  %111 = vmatpush1.msra.mxu0 0.0
  %112 = vmatprep.subr.mxu0 0.0
  %113 = vmatpush1.msra.mxu0 0.0
  %114 = vmatprep.subr.mxu0 0.0
  %115 = vmatpush1.msra.mxu0 0.0
  %116 = vmatprep.subr.mxu0 0.0
  %117 = vmatpush1.msra.mxu0 0.0
  %118 = vmatprep.subr.mxu0 0.0
  %119 = vmatpush1.msra.mxu0 0.0
  %120 = vmatprep.subr.mxu0 0.0
  %121 = vmatpush1.msra.mxu0 0.0
  %122 = vmatprep.subr.mxu0 0.0
  %123 = vmatpush1.msra.mxu0 0.0
  %124 = vmatprep.subr.mxu0 0.0
  %125 = vmatpush1.msra.mxu0 0.0
  %126 = vmatprep.subr.mxu0 0.0
  %127 = vmatpush1.msra.mxu0 0.0
  %128 = vmatprep.subr.mxu0 0.0
  %129 = vmatpush1.msra.mxu0 0.0
  %130 = vmatprep.subr.mxu0 0.0
  %131 = vmatpush1.msra.mxu0 0.0
  %132 = vmatprep.subr.mxu0 0.0
  %133 = vmatpush1.msra.mxu0 0.0
  %134 = vmatprep.subr.mxu0 0.0
  %135 = vmatpush1.msra.mxu0 0.0
  %136 = vmatprep.subr.mxu0 %v100
  %137 = vmatpush1.msra.mxu0 %v98
  %138 = vmatprep.subr.mxu0 0.0
  %139 = vmatpush2.msra.mxu0 0.0
  %140 = vmatprep.subr.mxu0 0.0
  %141 = vmatpush2.msra.mxu0 0.0
  %142 = vmatprep.subr.mxu0 0.0
  %143 = vmatpush2.msra.mxu0 0.0
  %144 = vmatprep.subr.mxu0 0.0
  %145 = vmatpush2.msra.mxu0 0.0
  %146 = vmatprep.subr.mxu0 0.0
  %147 = vmatpush2.msra.mxu0 0.0
  %148 = vmatprep.subr.mxu0 0.0
  %149 = vmatpush2.msra.mxu0 0.0
  %150 = vmatprep.subr.mxu0 0.0
  %151 = vmatpush2.msra.mxu0 0.0
  %152 = vmatprep.subr.mxu0 0.0
  %153 = vmatpush2.msra.mxu0 0.0
  %154 = vmatprep.subr.mxu0 0.0
  %155 = vmatpush2.msra.mxu0 0.0
  %156 = vmatprep.subr.mxu0 0.0
  %157 = vmatpush2.msra.mxu0 0.0
  %158 = vmatprep.subr.mxu0 0.0
  %159 = vmatpush2.msra.mxu0 0.0
  %160 = vmatprep.subr.mxu0 0.0
  %161 = vmatpush2.msra.mxu0 0.0
  %162 = vmatprep.subr.mxu0 0.0
  %163 = vmatpush2.msra.mxu0 0.0
  %164 = vmatprep.subr.mxu0 0.0
  %165 = vmatpush2.msra.mxu0 0.0
  %166 = vmatprep.subr.mxu0 0.0
  %167 = vmatpush2.msra.mxu0 0.0
  %168 = vmatprep.subr.mxu0 0.0
  %169 = vmatpush2.msra.mxu0 0.0
  %170 = vmatprep.mubr.f32.mxu0 0.0
  %171 = vmatmul.mubr.f32.gmra.mxu0 %v95
  %v172 = vpop.f32.mrf.mxu0
  %v173 = vadd.f32 %v88, %v172
  %v174 = vpop.f32.mrf.mxu0
  %v175 = vadd.f32 %v88, %v174
  %176 = vdwg.mxu0
  %177 = vmatprep.subr.mxu0 0.0
  %178 = vmatpush1.msra.mxu0 0.0
  %179 = vmatprep.subr.mxu0 0.0
  %180 = vmatpush1.msra.mxu0 0.0
  %181 = vmatprep.subr.mxu0 0.0
  %182 = vmatpush1.msra.mxu0 0.0
  %183 = vmatprep.subr.mxu0 0.0
  %184 = vmatpush1.msra.mxu0 0.0
  %185 = vmatprep.subr.mxu0 0.0
  %186 = vmatpush1.msra.mxu0 0.0
  %187 = vmatprep.subr.mxu0 0.0
  %188 = vmatpush1.msra.mxu0 0.0
  %189 = vmatprep.subr.mxu0 0.0
  %190 = vmatpush1.msra.mxu0 0.0
  %191 = vmatprep.subr.mxu0 0.0
  %192 = vmatpush1.msra.mxu0 0.0
  %193 = vmatprep.subr.mxu0 0.0
  %194 = vmatpush1.msra.mxu0 0.0
  %195 = vmatprep.subr.mxu0 0.0
  %196 = vmatpush1.msra.mxu0 0.0
  %197 = vmatprep.subr.mxu0 0.0
  %198 = vmatpush1.msra.mxu0 0.0
  %199 = vmatprep.subr.mxu0 0.0
  %200 = vmatpush1.msra.mxu0 0.0
  %201 = vmatprep.subr.mxu0 0.0
  %202 = vmatpush1.msra.mxu0 0.0
  %203 = vmatprep.subr.mxu0 0.0
  %204 = vmatpush1.msra.mxu0 0.0
  %205 = vmatprep.subr.mxu0 0.0
  %206 = vmatpush1.msra.mxu0 0.0
  %207 = vmatprep.subr.mxu0 %v104
  %208 = vmatpush1.msra.mxu0 %v102
  %209 = vmatprep.subr.mxu0 0.0
  %210 = vmatpush2.msra.mxu0 0.0
  %211 = vmatprep.subr.mxu0 0.0
  %212 = vmatpush2.msra.mxu0 0.0
  %213 = vmatprep.subr.mxu0 0.0
  %214 = vmatpush2.msra.mxu0 0.0
  %215 = vmatprep.subr.mxu0 0.0
  %216 = vmatpush2.msra.mxu0 0.0
  %217 = vmatprep.subr.mxu0 0.0
  %218 = vmatpush2.msra.mxu0 0.0
  %219 = vmatprep.subr.mxu0 0.0
  %220 = vmatpush2.msra.mxu0 0.0
  %221 = vmatprep.subr.mxu0 0.0
  %222 = vmatpush2.msra.mxu0 0.0
  %223 = vmatprep.subr.mxu0 0.0
  %224 = vmatpush2.msra.mxu0 0.0
  %225 = vmatprep.subr.mxu0 0.0
  %226 = vmatpush2.msra.mxu0 0.0
  %227 = vmatprep.subr.mxu0 0.0
  %228 = vmatpush2.msra.mxu0 0.0
  %229 = vmatprep.subr.mxu0 0.0
  %230 = vmatpush2.msra.mxu0 0.0
  %231 = vmatprep.subr.mxu0 0.0
  %232 = vmatpush2.msra.mxu0 0.0
  %233 = vmatprep.subr.mxu0 0.0
  %234 = vmatpush2.msra.mxu0 0.0
  %235 = vmatprep.subr.mxu0 0.0
  %236 = vmatpush2.msra.mxu0 0.0
  %237 = vmatprep.subr.mxu0 0.0
  %238 = vmatpush2.msra.mxu0 0.0
  %239 = vmatprep.subr.mxu0 0.0
  %240 = vmatpush2.msra.mxu0 0.0
  %241 = vmatprep.mubr.f32.mxu0 0.0
  %242 = vmatmul.mubr.f32.gmra.mxu0 %v95
  %v243 = vpop.f32.mrf.mxu0
  %v244 = vadd.f32 %v88, %v243
  %v245 = vpop.f32.mrf.mxu0
  %v246 = vadd.f32 %v88, %v245
  %247 = vdwg.mxu0
  %vm248 = vcmp.gt.f32.partialorder %v173, 0.0
  %vm249 = vcmp.gt.f32.partialorder %v175, 0.0
  %vm250 = vcmp.gt.f32.partialorder %v244, 0.0
  %vm251 = vcmp.gt.f32.partialorder %v246, 0.0
  %v252 = vmin.f32 %v173, 0.0
  %v253 = vmin.f32 %v175, 0.0
  %v254 = vmin.f32 %v244, 0.0
  %v255 = vmin.f32 %v246, 0.0
  %v256 = vmul.f32 %v252, 1.442695
  %v257 = vpow.pop %v256
  %v258 = vmul.f32 %v253, 1.442695
  %v259 = vpow.pop %v258
  %v260 = vmul.f32 %v254, 1.442695
  %v261 = vpow.pop %v260
  %v262 = vmul.f32 %v255, 1.442695
  %v263 = vpow.pop %v262
  %v264 = vsub.f32 %v257, 1.0
  %v265 = vsub.f32 %v259, 1.0
  %v266 = vsub.f32 %v261, 1.0
  %v267 = vsub.f32 %v263, 1.0
  %v268 = vsel %vm248, %v173, %v264
  %v269 = vsel %vm249, %v175, %v265
  %v270 = vsel %vm250, %v244, %v266
  %v271 = vsel %vm251, %v246, %v267
  %v272 = vld [vmem:[%s19] sm:$0xff]
  %v273 = vld [vmem:[%s19 + $0x8] sm:$0xff]
  %v274 = vld [vmem:[%s19 + $0x10] sm:$0xff]
  %v275 = vld [vmem:[%s19 + $0x18] sm:$0xff]
  %v276 = vld [vmem:[%s19 + $0x20] sm:$0x1]
  %v277 = vld [vmem:[%s19 + $0x28] sm:$0x1]
  %v278 = vld [vmem:[%s19 + $0x30] sm:$0x1]
  %v279 = vld [vmem:[%s19 + $0x38] sm:$0x1]
  %280 = vrot.lane.b32.xlu0 %v268, 17
  %v281 = vpop.permute.xlu0 %280
  %282 = vrot.lane.b32.xlu0 %v269, 17
  %v283 = vpop.permute.xlu0 %282
  %284 = vrot.lane.b32.xlu0 %v270, 17
  %v285 = vpop.permute.xlu0 %284
  %286 = vrot.lane.b32.xlu0 %v271, 17
  %v287 = vpop.permute.xlu0 %286
  %v288 = vlaneseq
  %v289 = vand.u32 %v288, 127
  %vm290 = vcmp.lt.s32.totalorder %v289, 17
  %v291 = vsel %vm290, %v285, %v287
  %v292 = vsel %vm290, %v283, %v285
  %v293 = vsel %vm290, %v281, %v283
  %v294 = vsel %vm290, %v287, %v281
  %v295 = vmul.f32 %v294, %v272
  %v296 = vmul.f32 %v293, %v273
  %v297 = vmul.f32 %v292, %v274
  %v298 = vmul.f32 %v291, %v275
  %299 = vrot.lane.b32.xlu0 %v268, 16
  %v300 = vpop.permute.xlu0 %299
  %301 = vrot.lane.b32.xlu0 %v269, 16
  %v302 = vpop.permute.xlu0 %301
  %303 = vrot.lane.b32.xlu0 %v270, 16
  %v304 = vpop.permute.xlu0 %303
  %305 = vrot.lane.b32.xlu0 %v271, 16
  %v306 = vpop.permute.xlu0 %305
  %vm307 = vcmp.lt.s32.totalorder %v289, 16
  %v308 = vsel %vm307, %v304, %v306
  %v309 = vsel %vm307, %v302, %v304
  %v310 = vsel %vm307, %v300, %v302
  %v311 = vsel %vm307, %v306, %v300
  %v316 = vrot.slane %v272, 1
  %v317 = vrot.slane %v273, 1
  %v318 = vrot.slane %v274, 1
  %v319 = vrot.slane %v275, 1
  %v324 = vmul.f32 %v311, %v316
  %v325 = vmul.f32 %v310, %v317
  %v326 = vmul.f32 %v309, %v318
  %v327 = vmul.f32 %v308, %v319
  %328 = vrot.lane.b32.xlu0 %v268, 15
  %v329 = vpop.permute.xlu0 %328
  %330 = vrot.lane.b32.xlu0 %v269, 15
  %v331 = vpop.permute.xlu0 %330
  %332 = vrot.lane.b32.xlu0 %v270, 15
  %v333 = vpop.permute.xlu0 %332
  %334 = vrot.lane.b32.xlu0 %v271, 15
  %v335 = vpop.permute.xlu0 %334
  %vm336 = vcmp.lt.s32.totalorder %v289, 15
  %v337 = vsel %vm336, %v333, %v335
  %v338 = vsel %vm336, %v331, %v333
  %v339 = vsel %vm336, %v329, %v331
  %v340 = vsel %vm336, %v335, %v329
  %v341 = vrot.slane %v272, 2
  %v342 = vrot.slane %v273, 2
  %v343 = vrot.slane %v274, 2
  %v344 = vrot.slane %v275, 2
  %v349 = vmul.f32 %v340, %v341
  %v350 = vmul.f32 %v339, %v342
  %v351 = vmul.f32 %v338, %v343
  %v352 = vmul.f32 %v337, %v344
  %353 = vrot.lane.b32.xlu0 %v268, 1
  %v354 = vpop.permute.xlu0 %353
  %355 = vrot.lane.b32.xlu0 %v269, 1
  %v356 = vpop.permute.xlu0 %355
  %357 = vrot.lane.b32.xlu0 %v270, 1
  %v358 = vpop.permute.xlu0 %357
  %359 = vrot.lane.b32.xlu0 %v271, 1
  %v360 = vpop.permute.xlu0 %359
  %vm361 = vcmp.lt.s32.totalorder %v289, 1
  %v362 = vsel %vm361, %v358, %v360
  %v363 = vsel %vm361, %v356, %v358
  %v364 = vsel %vm361, %v354, %v356
  %v365 = vsel %vm361, %v360, %v354
  %v366 = vrot.slane %v272, 3
  %v367 = vrot.slane %v273, 3
  %v368 = vrot.slane %v274, 3
  %v369 = vrot.slane %v275, 3
  %v374 = vmul.f32 %v365, %v366
  %v375 = vmul.f32 %v364, %v367
  %v376 = vmul.f32 %v363, %v368
  %v377 = vmul.f32 %v362, %v369
  %v378 = vrot.slane %v272, 4
  %v379 = vrot.slane %v273, 4
  %v380 = vrot.slane %v274, 4
  %v381 = vrot.slane %v275, 4
  %v386 = vmul.f32 %v268, %v378
  %v387 = vmul.f32 %v269, %v379
  %v388 = vmul.f32 %v270, %v380
  %v389 = vmul.f32 %v271, %v381
  %390 = vrot.lane.b32.xlu0 %v268, 127
  %v391 = vpop.permute.xlu0 %390
  %392 = vrot.lane.b32.xlu0 %v269, 127
  %v393 = vpop.permute.xlu0 %392
  %394 = vrot.lane.b32.xlu0 %v270, 127
  %v395 = vpop.permute.xlu0 %394
  %396 = vrot.lane.b32.xlu0 %v271, 127
  %v397 = vpop.permute.xlu0 %396
  %vm398 = vcmp.lt.s32.totalorder %v289, 127
  %v399 = vsel %vm398, %v395, %v397
  %v400 = vsel %vm398, %v393, %v395
  %v401 = vsel %vm398, %v391, %v393
  %v402 = vsel %vm398, %v397, %v391
  %v403 = vrot.slane %v272, 5
  %v404 = vrot.slane %v273, 5
  %v405 = vrot.slane %v274, 5
  %v406 = vrot.slane %v275, 5
  %v411 = vmul.f32 %v401, %v403
  %v412 = vmul.f32 %v400, %v404
  %v413 = vmul.f32 %v399, %v405
  %v414 = vmul.f32 %v402, %v406
  %415 = vrot.lane.b32.xlu0 %v268, 113
  %v416 = vpop.permute.xlu0 %415
  %417 = vrot.lane.b32.xlu0 %v269, 113
  %v418 = vpop.permute.xlu0 %417
  %419 = vrot.lane.b32.xlu0 %v270, 113
  %v420 = vpop.permute.xlu0 %419
  %421 = vrot.lane.b32.xlu0 %v271, 113
  %v422 = vpop.permute.xlu0 %421
  %vm423 = vcmp.lt.s32.totalorder %v289, 113
  %v424 = vsel %vm423, %v420, %v422
  %v425 = vsel %vm423, %v418, %v420
  %v426 = vsel %vm423, %v416, %v418
  %v427 = vsel %vm423, %v422, %v416
  %v428 = vrot.slane %v272, 6
  %v429 = vrot.slane %v273, 6
  %v430 = vrot.slane %v274, 6
  %v431 = vrot.slane %v275, 6
  %v436 = vmul.f32 %v426, %v428
  %v437 = vmul.f32 %v425, %v429
  %v438 = vmul.f32 %v424, %v430
  %v439 = vmul.f32 %v427, %v431
  %440 = vrot.lane.b32.xlu0 %v268, 112
  %v441 = vpop.permute.xlu0 %440
  %442 = vrot.lane.b32.xlu0 %v269, 112
  %v443 = vpop.permute.xlu0 %442
  %444 = vrot.lane.b32.xlu0 %v270, 112
  %v445 = vpop.permute.xlu0 %444
  %446 = vrot.lane.b32.xlu0 %v271, 112
  %v447 = vpop.permute.xlu0 %446
  %vm448 = vcmp.lt.s32.totalorder %v289, 112
  %v449 = vsel %vm448, %v445, %v447
  %v450 = vsel %vm448, %v443, %v445
  %v451 = vsel %vm448, %v441, %v443
  %v452 = vsel %vm448, %v447, %v441
  %v453 = vrot.slane %v272, 7
  %v454 = vrot.slane %v273, 7
  %v455 = vrot.slane %v274, 7
  %v456 = vrot.slane %v275, 7
  %v461 = vmul.f32 %v451, %v453
  %v462 = vmul.f32 %v450, %v454
  %v463 = vmul.f32 %v449, %v455
  %v464 = vmul.f32 %v452, %v456
  %465 = vrot.lane.b32.xlu0 %v268, 111
  %v466 = vpop.permute.xlu0 %465
  %467 = vrot.lane.b32.xlu0 %v269, 111
  %v468 = vpop.permute.xlu0 %467
  %469 = vrot.lane.b32.xlu0 %v270, 111
  %v470 = vpop.permute.xlu0 %469
  %471 = vrot.lane.b32.xlu0 %v271, 111
  %v472 = vpop.permute.xlu0 %471
  %vm473 = vcmp.lt.s32.totalorder %v289, 111
  %v474 = vsel %vm473, %v470, %v472
  %v475 = vsel %vm473, %v468, %v470
  %v476 = vsel %vm473, %v466, %v468
  %v477 = vsel %vm473, %v472, %v466
  %v478 = vmul.f32 %v476, %v276
  %v479 = vmul.f32 %v475, %v277
  %v480 = vmul.f32 %v474, %v278
  %v481 = vmul.f32 %v477, %v279
  %v486 = vrot.slane %v324, 7
  %v487 = vrot.slane %v325, 7
  %v488 = vrot.slane %v326, 7
  %v489 = vrot.slane %v327, 7
  %v498 = vrot.slane %v349, 6
  %v499 = vrot.slane %v350, 6
  %v500 = vrot.slane %v351, 6
  %v501 = vrot.slane %v352, 6
  %v510 = vrot.slane %v374, 5
  %v511 = vrot.slane %v375, 5
  %v512 = vrot.slane %v376, 5
  %v513 = vrot.slane %v377, 5
  %v522 = vrot.slane %v386, 4
  %v523 = vrot.slane %v387, 4
  %v524 = vrot.slane %v388, 4
  %v525 = vrot.slane %v389, 4
  %v534 = vrot.slane %v411, 3
  %v535 = vrot.slane %v412, 3
  %v536 = vrot.slane %v413, 3
  %v537 = vrot.slane %v414, 3
  %v546 = vrot.slane %v436, 2
  %v547 = vrot.slane %v437, 2
  %v548 = vrot.slane %v438, 2
  %v549 = vrot.slane %v439, 2
  %v558 = vrot.slane %v461, 1
  %v559 = vrot.slane %v462, 1
  %v560 = vrot.slane %v463, 1
  %v561 = vrot.slane %v464, 1
  %vm566 = vcmask 1040384
  %v567 = vsel %vm566, %v295, %v486
  %v568 = vsel %vm566, %v296, %v487
  %v569 = vsel %vm566, %v297, %v488
  %v570 = vsel %vm566, %v298, %v489
  %vm571 = vcmask 1041408
  %v572 = vsel %vm571, %v567, %v498
  %v573 = vsel %vm571, %v568, %v499
  %v574 = vsel %vm571, %v569, %v500
  %v575 = vsel %vm571, %v570, %v501
  %vm576 = vcmask 1042432
  %v577 = vsel %vm576, %v572, %v510
  %v578 = vsel %vm576, %v573, %v511
  %v579 = vsel %vm576, %v574, %v512
  %v580 = vsel %vm576, %v575, %v513
  %v581 = vsel %vm97, %v577, %v522
  %v582 = vsel %vm97, %v578, %v523
  %v583 = vsel %vm97, %v579, %v524
  %v584 = vsel %vm97, %v580, %v525
  %vm585 = vcmask 1044480
  %v586 = vsel %vm585, %v581, %v534
  %v587 = vsel %vm585, %v582, %v535
  %v588 = vsel %vm585, %v583, %v536
  %v589 = vsel %vm585, %v584, %v537
  %vm590 = vcmask 1045504
  %v591 = vsel %vm590, %v586, %v546
  %v592 = vsel %vm590, %v587, %v547
  %v593 = vsel %vm590, %v588, %v548
  %v594 = vsel %vm590, %v589, %v549
  %vm595 = vcmask 1046528
  %v596 = vsel %vm595, %v591, %v558
  %v597 = vsel %vm595, %v592, %v559
  %v598 = vsel %vm595, %v593, %v560
  %v599 = vsel %vm595, %v594, %v561
  %v600 = vld [vmem:[%s3] sm:$0xff]
  %v601 = vld [vmem:[%s3 + $0x8] sm:$0x3]
  %v602 = vld [vmem:[%s4] sm:$0xff]
  %v603 = vld [vmem:[%s4 + $0x8] sm:$0x3]
  %605 = vset.pattern.permute.xlu0 0
  %606 = vperm.xlu0 %605, %v602
  %v607 = vpop.permute.xlu0 %606
  %610 = vset.pattern.permute.xlu0 0
  %611 = vperm.xlu0 %610, %v603
  %v612 = vpop.permute.xlu0 %611
  %vm614 = vcmask 72704
  %v616 = vsel %vm614, %v600, 0
  %v619 = vsel %vm614, %v601, 0
  %v622 = vsel %vm566, %v478, 0
  %v625 = vsel %vm566, %v479, 0
  %v628 = vsel %vm566, %v480, 0
  %v631 = vsel %vm566, %v481, 0
  %633 = vmatprep.subr.mxu0 0.0
  %634 = vmatpush1.msra.mxu0 0.0
  %635 = vmatprep.subr.mxu0 0.0
  %636 = vmatpush1.msra.mxu0 0.0
  %637 = vmatprep.subr.mxu0 0.0
  %638 = vmatpush1.msra.mxu0 0.0
  %639 = vmatprep.subr.mxu0 0.0
  %640 = vmatpush1.msra.mxu0 0.0
  %641 = vmatprep.subr.mxu0 0.0
  %642 = vmatpush1.msra.mxu0 0.0
  %643 = vmatprep.subr.mxu0 0.0
  %644 = vmatpush1.msra.mxu0 0.0
  %645 = vmatprep.subr.mxu0 0.0
  %646 = vmatpush1.msra.mxu0 0.0
  %647 = vmatprep.subr.mxu0 0.0
  %648 = vmatpush1.msra.mxu0 0.0
  %649 = vmatprep.subr.mxu0 0.0
  %650 = vmatpush1.msra.mxu0 0.0
  %651 = vmatprep.subr.mxu0 0.0
  %652 = vmatpush1.msra.mxu0 0.0
  %653 = vmatprep.subr.mxu0 0.0
  %654 = vmatpush1.msra.mxu0 0.0
  %655 = vmatprep.subr.mxu0 0.0
  %656 = vmatpush1.msra.mxu0 0.0
  %657 = vmatprep.subr.mxu0 0.0
  %658 = vmatpush1.msra.mxu0 0.0
  %659 = vmatprep.subr.mxu0 0.0
  %660 = vmatpush1.msra.mxu0 0.0
  %661 = vmatprep.subr.mxu0 %v625
  %662 = vmatpush1.msra.mxu0 %v622
  %663 = vmatprep.subr.mxu0 %v597
  %664 = vmatpush1.msra.mxu0 %v596
  %665 = vmatprep.subr.mxu0 0.0
  %666 = vmatpush2.msra.mxu0 0.0
  %667 = vmatprep.subr.mxu0 0.0
  %668 = vmatpush2.msra.mxu0 0.0
  %669 = vmatprep.subr.mxu0 0.0
  %670 = vmatpush2.msra.mxu0 0.0
  %671 = vmatprep.subr.mxu0 0.0
  %672 = vmatpush2.msra.mxu0 0.0
  %673 = vmatprep.subr.mxu0 0.0
  %674 = vmatpush2.msra.mxu0 0.0
  %675 = vmatprep.subr.mxu0 0.0
  %676 = vmatpush2.msra.mxu0 0.0
  %677 = vmatprep.subr.mxu0 0.0
  %678 = vmatpush2.msra.mxu0 0.0
  %679 = vmatprep.subr.mxu0 0.0
  %680 = vmatpush2.msra.mxu0 0.0
  %681 = vmatprep.subr.mxu0 0.0
  %682 = vmatpush2.msra.mxu0 0.0
  %683 = vmatprep.subr.mxu0 0.0
  %684 = vmatpush2.msra.mxu0 0.0
  %685 = vmatprep.subr.mxu0 0.0
  %686 = vmatpush2.msra.mxu0 0.0
  %687 = vmatprep.subr.mxu0 0.0
  %688 = vmatpush2.msra.mxu0 0.0
  %689 = vmatprep.subr.mxu0 0.0
  %690 = vmatpush2.msra.mxu0 0.0
  %691 = vmatprep.subr.mxu0 0.0
  %692 = vmatpush2.msra.mxu0 0.0
  %693 = vmatprep.subr.mxu0 0.0
  %694 = vmatpush2.msra.mxu0 0.0
  %695 = vmatprep.subr.mxu0 0.0
  %696 = vmatpush2.msra.mxu0 0.0
  %697 = vmatprep.mubr.f32.mxu0 0.0
  %698 = vmatmul.mubr.f32.gmra.mxu0 %v616
  %v699 = vpop.f32.mrf.mxu0
  %v700 = vadd.f32 %v607, %v699
  %v701 = vpop.f32.mrf.mxu0
  %v702 = vadd.f32 %v607, %v701
  %703 = vmatprep.mubr.f32.mxu0 0.0
  %704 = vmatmul.mubr.f32.gmra.mxu0 %v619
  %v705 = vpop.f32.mrf.mxu0
  %v706 = vadd.f32 %v612, %v705
  %v707 = vpop.f32.mrf.mxu0
  %v708 = vadd.f32 %v612, %v707
  %709 = vdwg.mxu0
  %710 = vmatprep.subr.mxu0 0.0
  %711 = vmatpush1.msra.mxu0 0.0
  %712 = vmatprep.subr.mxu0 0.0
  %713 = vmatpush1.msra.mxu0 0.0
  %714 = vmatprep.subr.mxu0 0.0
  %715 = vmatpush1.msra.mxu0 0.0
  %716 = vmatprep.subr.mxu0 0.0
  %717 = vmatpush1.msra.mxu0 0.0
  %718 = vmatprep.subr.mxu0 0.0
  %719 = vmatpush1.msra.mxu0 0.0
  %720 = vmatprep.subr.mxu0 0.0
  %721 = vmatpush1.msra.mxu0 0.0
  %722 = vmatprep.subr.mxu0 0.0
  %723 = vmatpush1.msra.mxu0 0.0
  %724 = vmatprep.subr.mxu0 0.0
  %725 = vmatpush1.msra.mxu0 0.0
  %726 = vmatprep.subr.mxu0 0.0
  %727 = vmatpush1.msra.mxu0 0.0
  %728 = vmatprep.subr.mxu0 0.0
  %729 = vmatpush1.msra.mxu0 0.0
  %730 = vmatprep.subr.mxu0 0.0
  %731 = vmatpush1.msra.mxu0 0.0
  %732 = vmatprep.subr.mxu0 0.0
  %733 = vmatpush1.msra.mxu0 0.0
  %734 = vmatprep.subr.mxu0 0.0
  %735 = vmatpush1.msra.mxu0 0.0
  %736 = vmatprep.subr.mxu0 0.0
  %737 = vmatpush1.msra.mxu0 0.0
  %738 = vmatprep.subr.mxu0 %v631
  %739 = vmatpush1.msra.mxu0 %v628
  %740 = vmatprep.subr.mxu0 %v599
  %741 = vmatpush1.msra.mxu0 %v598
  %742 = vmatprep.subr.mxu0 0.0
  %743 = vmatpush2.msra.mxu0 0.0
  %744 = vmatprep.subr.mxu0 0.0
  %745 = vmatpush2.msra.mxu0 0.0
  %746 = vmatprep.subr.mxu0 0.0
  %747 = vmatpush2.msra.mxu0 0.0
  %748 = vmatprep.subr.mxu0 0.0
  %749 = vmatpush2.msra.mxu0 0.0
  %750 = vmatprep.subr.mxu0 0.0
  %751 = vmatpush2.msra.mxu0 0.0
  %752 = vmatprep.subr.mxu0 0.0
  %753 = vmatpush2.msra.mxu0 0.0
  %754 = vmatprep.subr.mxu0 0.0
  %755 = vmatpush2.msra.mxu0 0.0
  %756 = vmatprep.subr.mxu0 0.0
  %757 = vmatpush2.msra.mxu0 0.0
  %758 = vmatprep.subr.mxu0 0.0
  %759 = vmatpush2.msra.mxu0 0.0
  %760 = vmatprep.subr.mxu0 0.0
  %761 = vmatpush2.msra.mxu0 0.0
  %762 = vmatprep.subr.mxu0 0.0
  %763 = vmatpush2.msra.mxu0 0.0
  %764 = vmatprep.subr.mxu0 0.0
  %765 = vmatpush2.msra.mxu0 0.0
  %766 = vmatprep.subr.mxu0 0.0
  %767 = vmatpush2.msra.mxu0 0.0
  %768 = vmatprep.subr.mxu0 0.0
  %769 = vmatpush2.msra.mxu0 0.0
  %770 = vmatprep.subr.mxu0 0.0
  %771 = vmatpush2.msra.mxu0 0.0
  %772 = vmatprep.subr.mxu0 0.0
  %773 = vmatpush2.msra.mxu0 0.0
  %774 = vmatprep.mubr.f32.mxu0 0.0
  %775 = vmatmul.mubr.f32.gmra.mxu0 %v616
  %v776 = vpop.f32.mrf.mxu0
  %v777 = vadd.f32 %v607, %v776
  %v778 = vpop.f32.mrf.mxu0
  %v779 = vadd.f32 %v607, %v778
  %780 = vmatprep.mubr.f32.mxu0 0.0
  %781 = vmatmul.mubr.f32.gmra.mxu0 %v619
  %v782 = vpop.f32.mrf.mxu0
  %v783 = vadd.f32 %v612, %v782
  %v784 = vpop.f32.mrf.mxu0
  %v785 = vadd.f32 %v612, %v784
  %786 = vdwg.mxu0
  %vm787 = vcmp.gt.f32.partialorder %v700, 0.0
  %vm788 = vcmp.gt.f32.partialorder %v702, 0.0
  %vm789 = vcmp.gt.f32.partialorder %v777, 0.0
  %vm790 = vcmp.gt.f32.partialorder %v779, 0.0
  %vm791 = vcmp.gt.f32.partialorder %v706, 0.0
  %vm792 = vcmp.gt.f32.partialorder %v708, 0.0
  %vm793 = vcmp.gt.f32.partialorder %v783, 0.0
  %vm794 = vcmp.gt.f32.partialorder %v785, 0.0
  %v795 = vmin.f32 %v700, 0.0
  %v796 = vmin.f32 %v702, 0.0
  %v797 = vmin.f32 %v777, 0.0
  %v798 = vmin.f32 %v779, 0.0
  %v799 = vmin.f32 %v706, 0.0
  %v800 = vmin.f32 %v708, 0.0
  %v801 = vmin.f32 %v783, 0.0
  %v802 = vmin.f32 %v785, 0.0
  %v803 = vmul.f32 %v795, 1.442695
  %v804 = vpow.pop %v803
  %v805 = vmul.f32 %v796, 1.442695
  %v806 = vpow.pop %v805
  %v807 = vmul.f32 %v797, 1.442695
  %v808 = vpow.pop %v807
  %v809 = vmul.f32 %v798, 1.442695
  %v810 = vpow.pop %v809
  %v811 = vmul.f32 %v799, 1.442695
  %v812 = vpow.pop %v811
  %v813 = vmul.f32 %v800, 1.442695
  %v814 = vpow.pop %v813
  %v815 = vmul.f32 %v801, 1.442695
  %v816 = vpow.pop %v815
  %v817 = vmul.f32 %v802, 1.442695
  %v818 = vpow.pop %v817
  %v819 = vsub.f32 %v804, 1.0
  %v820 = vsub.f32 %v806, 1.0
  %v821 = vsub.f32 %v808, 1.0
  %v822 = vsub.f32 %v810, 1.0
  %v823 = vsub.f32 %v812, 1.0
  %v824 = vsub.f32 %v814, 1.0
  %v825 = vsub.f32 %v816, 1.0
  %v826 = vsub.f32 %v818, 1.0
  %v827 = vsel %vm787, %v700, %v819
  %v828 = vsel %vm788, %v702, %v820
  %v829 = vsel %vm789, %v777, %v821
  %v830 = vsel %vm790, %v779, %v822
  %v831 = vsel %vm791, %v706, %v823
  %v832 = vsel %vm792, %v708, %v824
  %v833 = vsel %vm793, %v783, %v825
  %v834 = vsel %vm794, %v785, %v826
  %v835 = vld [vmem:[%s5] sm:$0xff]
  %v836 = vld [vmem:[%s5 + $0x8] sm:$0x3]
  %838 = vset.pattern.permute.xlu0 0
  %839 = vperm.xlu0 %838, %v835
  %v840 = vpop.permute.xlu0 %839
  %843 = vset.pattern.permute.xlu0 0
  %844 = vperm.xlu0 %843, %v836
  %v845 = vpop.permute.xlu0 %844
  %v847 = vmul.f32 %v827, %v840
  %v848 = vmul.f32 %v828, %v840
  %v849 = vmul.f32 %v829, %v840
  %v850 = vmul.f32 %v830, %v840
  %v851 = vmul.f32 %v831, %v845
  %v852 = vmul.f32 %v832, %v845
  %v853 = vmul.f32 %v833, %v845
  %v854 = vmul.f32 %v834, %v845
  %v855 = vld [vmem:[%s6] sm:$0xff]
  %v856 = vld [vmem:[%s6 + $0x8] sm:$0x3]
  %858 = vset.pattern.permute.xlu0 0
  %859 = vperm.xlu0 %858, %v855
  %v860 = vpop.permute.xlu0 %859
  %863 = vset.pattern.permute.xlu0 0
  %864 = vperm.xlu0 %863, %v856
  %v865 = vpop.permute.xlu0 %864
  %v867 = vadd.f32 %v847, %v860
  %v868 = vadd.f32 %v848, %v860
  %v869 = vadd.f32 %v849, %v860
  %v870 = vadd.f32 %v850, %v860
  %v871 = vadd.f32 %v851, %v865
  %v872 = vadd.f32 %v852, %v865
  %v873 = vadd.f32 %v853, %v865
  %v874 = vadd.f32 %v854, %v865
  %v875 = vsel %vm571, %v871, 0.0
  %v876 = vadd.f32 %v867, %v875
  %v877 = vrot.slane %v876, 4
  %v878 = vadd.f32 %v876, %v877
  %v879 = vrot.slane %v878, 2
  %v880 = vadd.f32 %v878, %v879
  %v881 = vrot.slane %v880, 1
  %v882 = vadd.f32 %v880, %v881
  %v883 = vsel %vm571, %v872, 0.0
  %v884 = vadd.f32 %v868, %v883
  %v885 = vrot.slane %v884, 4
  %v886 = vadd.f32 %v884, %v885
  %v887 = vrot.slane %v886, 2
  %v888 = vadd.f32 %v886, %v887
  %v889 = vrot.slane %v888, 1
  %v890 = vadd.f32 %v888, %v889
  %v891 = vsel %vm571, %v873, 0.0
  %v892 = vadd.f32 %v869, %v891
  %v893 = vrot.slane %v892, 4
  %v894 = vadd.f32 %v892, %v893
  %v895 = vrot.slane %v894, 2
  %v896 = vadd.f32 %v894, %v895
  %v897 = vrot.slane %v896, 1
  %v898 = vadd.f32 %v896, %v897
  %v899 = vsel %vm571, %v874, 0.0
  %v900 = vadd.f32 %v870, %v899
  %v901 = vrot.slane %v900, 4
  %v902 = vadd.f32 %v900, %v901
  %v903 = vrot.slane %v902, 2
  %v904 = vadd.f32 %v902, %v903
  %v905 = vrot.slane %v904, 1
  %v906 = vadd.f32 %v904, %v905
  %v907 = vrcp.pop 10.0
  %v908 = vmul.f32 %v882, %v907
  %v909 = vmul.f32 %v890, %v907
  %v910 = vmul.f32 %v898, %v907
  %v911 = vmul.f32 %v906, %v907
  %v912 = vsel %vm571, %v871, -inf
  %v913 = vmax.f32 %v867, %v912
  %v914 = vrot.slane %v913, 4
  %v915 = vmax.f32 %v913, %v914
  %v916 = vrot.slane %v915, 2
  %v917 = vmax.f32 %v915, %v916
  %v918 = vrot.slane %v917, 1
  %v919 = vmax.f32 %v917, %v918
  %v920 = vsel %vm571, %v872, -inf
  %v921 = vmax.f32 %v868, %v920
  %v922 = vrot.slane %v921, 4
  %v923 = vmax.f32 %v921, %v922
  %v924 = vrot.slane %v923, 2
  %v925 = vmax.f32 %v923, %v924
  %v926 = vrot.slane %v925, 1
  %v927 = vmax.f32 %v925, %v926
  %v928 = vsel %vm571, %v873, -inf
  %v929 = vmax.f32 %v869, %v928
  %v930 = vrot.slane %v929, 4
  %v931 = vmax.f32 %v929, %v930
  %v932 = vrot.slane %v931, 2
  %v933 = vmax.f32 %v931, %v932
  %v934 = vrot.slane %v933, 1
  %v935 = vmax.f32 %v933, %v934
  %v936 = vsel %vm571, %v874, -inf
  %v937 = vmax.f32 %v870, %v936
  %v938 = vrot.slane %v937, 4
  %v939 = vmax.f32 %v937, %v938
  %v940 = vrot.slane %v939, 2
  %v941 = vmax.f32 %v939, %v940
  %v942 = vrot.slane %v941, 1
  %v943 = vmax.f32 %v941, %v942
  %944 = vrot.lane.b32.xlu0 %v908, 17
  %v945 = vpop.permute.xlu0 %944
  %946 = vrot.lane.b32.xlu0 %v909, 17
  %v947 = vpop.permute.xlu0 %946
  %948 = vrot.lane.b32.xlu0 %v910, 17
  %v949 = vpop.permute.xlu0 %948
  %950 = vrot.lane.b32.xlu0 %v911, 17
  %v951 = vpop.permute.xlu0 %950
  %v952 = vsel %vm290, %v949, %v951
  %v953 = vsel %vm290, %v947, %v949
  %v954 = vsel %vm290, %v945, %v947
  %v955 = vsel %vm290, %v951, %v945
  %v956 = vmul.f32 %v955, %v272
  %v957 = vmul.f32 %v954, %v273
  %v958 = vmul.f32 %v953, %v274
  %v959 = vmul.f32 %v952, %v275
  %960 = vrot.lane.b32.xlu0 %v908, 16
  %v961 = vpop.permute.xlu0 %960
  %962 = vrot.lane.b32.xlu0 %v909, 16
  %v963 = vpop.permute.xlu0 %962
  %964 = vrot.lane.b32.xlu0 %v910, 16
  %v965 = vpop.permute.xlu0 %964
  %966 = vrot.lane.b32.xlu0 %v911, 16
  %v967 = vpop.permute.xlu0 %966
  %v968 = vsel %vm307, %v965, %v967
  %v969 = vsel %vm307, %v963, %v965
  %v970 = vsel %vm307, %v961, %v963
  %v971 = vsel %vm307, %v967, %v961
  %v972 = vmul.f32 %v971, %v316
  %v973 = vmul.f32 %v970, %v317
  %v974 = vmul.f32 %v969, %v318
  %v975 = vmul.f32 %v968, %v319
  %976 = vrot.lane.b32.xlu0 %v908, 15
  %v977 = vpop.permute.xlu0 %976
  %978 = vrot.lane.b32.xlu0 %v909, 15
  %v979 = vpop.permute.xlu0 %978
  %980 = vrot.lane.b32.xlu0 %v910, 15
  %v981 = vpop.permute.xlu0 %980
  %982 = vrot.lane.b32.xlu0 %v911, 15
  %v983 = vpop.permute.xlu0 %982
  %v984 = vsel %vm336, %v981, %v983
  %v985 = vsel %vm336, %v979, %v981
  %v986 = vsel %vm336, %v977, %v979
  %v987 = vsel %vm336, %v983, %v977
  %v988 = vmul.f32 %v987, %v341
  %v989 = vmul.f32 %v986, %v342
  %v990 = vmul.f32 %v985, %v343
  %v991 = vmul.f32 %v984, %v344
  %992 = vrot.lane.b32.xlu0 %v908, 1
  %v993 = vpop.permute.xlu0 %992
  %994 = vrot.lane.b32.xlu0 %v909, 1
  %v995 = vpop.permute.xlu0 %994
  %996 = vrot.lane.b32.xlu0 %v910, 1
  %v997 = vpop.permute.xlu0 %996
  %998 = vrot.lane.b32.xlu0 %v911, 1
  %v999 = vpop.permute.xlu0 %998
  %v1000 = vsel %vm361, %v997, %v999
  %v1001 = vsel %vm361, %v995, %v997
  %v1002 = vsel %vm361, %v993, %v995
  %v1003 = vsel %vm361, %v999, %v993
  %v1004 = vmul.f32 %v1003, %v366
  %v1005 = vmul.f32 %v1002, %v367
  %v1006 = vmul.f32 %v1001, %v368
  %v1007 = vmul.f32 %v1000, %v369
  %v1008 = vmul.f32 %v908, %v272
  %v1009 = vmul.f32 %v909, %v273
  %v1010 = vmul.f32 %v910, %v274
  %v1011 = vmul.f32 %v911, %v275
  %1012 = vrot.lane.b32.xlu0 %v908, 127
  %v1013 = vpop.permute.xlu0 %1012
  %1014 = vrot.lane.b32.xlu0 %v909, 127
  %v1015 = vpop.permute.xlu0 %1014
  %1016 = vrot.lane.b32.xlu0 %v910, 127
  %v1017 = vpop.permute.xlu0 %1016
  %1018 = vrot.lane.b32.xlu0 %v911, 127
  %v1019 = vpop.permute.xlu0 %1018
  %v1020 = vsel %vm398, %v1017, %v1019
  %v1021 = vsel %vm398, %v1015, %v1017
  %v1022 = vsel %vm398, %v1013, %v1015
  %v1023 = vsel %vm398, %v1019, %v1013
  %v1024 = vmul.f32 %v1022, %v403
  %v1025 = vmul.f32 %v1021, %v404
  %v1026 = vmul.f32 %v1020, %v405
  %v1027 = vmul.f32 %v1023, %v406
  %1028 = vrot.lane.b32.xlu0 %v908, 113
  %v1029 = vpop.permute.xlu0 %1028
  %1030 = vrot.lane.b32.xlu0 %v909, 113
  %v1031 = vpop.permute.xlu0 %1030
  %1032 = vrot.lane.b32.xlu0 %v910, 113
  %v1033 = vpop.permute.xlu0 %1032
  %1034 = vrot.lane.b32.xlu0 %v911, 113
  %v1035 = vpop.permute.xlu0 %1034
  %v1036 = vsel %vm423, %v1033, %v1035
  %v1037 = vsel %vm423, %v1031, %v1033
  %v1038 = vsel %vm423, %v1029, %v1031
  %v1039 = vsel %vm423, %v1035, %v1029
  %v1040 = vmul.f32 %v1038, %v428
  %v1041 = vmul.f32 %v1037, %v429
  %v1042 = vmul.f32 %v1036, %v430
  %v1043 = vmul.f32 %v1039, %v431
  %1044 = vrot.lane.b32.xlu0 %v908, 112
  %v1045 = vpop.permute.xlu0 %1044
  %1046 = vrot.lane.b32.xlu0 %v909, 112
  %v1047 = vpop.permute.xlu0 %1046
  %1048 = vrot.lane.b32.xlu0 %v910, 112
  %v1049 = vpop.permute.xlu0 %1048
  %1050 = vrot.lane.b32.xlu0 %v911, 112
  %v1051 = vpop.permute.xlu0 %1050
  %v1052 = vsel %vm448, %v1049, %v1051
  %v1053 = vsel %vm448, %v1047, %v1049
  %v1054 = vsel %vm448, %v1045, %v1047
  %v1055 = vsel %vm448, %v1051, %v1045
  %v1056 = vmul.f32 %v1054, %v453
  %v1057 = vmul.f32 %v1053, %v454
  %v1058 = vmul.f32 %v1052, %v455
  %v1059 = vmul.f32 %v1055, %v456
  %1060 = vrot.lane.b32.xlu0 %v908, 111
  %v1061 = vpop.permute.xlu0 %1060
  %1062 = vrot.lane.b32.xlu0 %v909, 111
  %v1063 = vpop.permute.xlu0 %1062
  %1064 = vrot.lane.b32.xlu0 %v910, 111
  %v1065 = vpop.permute.xlu0 %1064
  %1066 = vrot.lane.b32.xlu0 %v911, 111
  %v1067 = vpop.permute.xlu0 %1066
  %v1068 = vsel %vm473, %v1065, %v1067
  %v1069 = vsel %vm473, %v1063, %v1065
  %v1070 = vsel %vm473, %v1061, %v1063
  %v1071 = vsel %vm473, %v1067, %v1061
  %v1072 = vmul.f32 %v1070, %v276
  %v1073 = vmul.f32 %v1069, %v277
  %v1074 = vmul.f32 %v1068, %v278
  %v1075 = vmul.f32 %v1071, %v279
  %1076 = vrot.lane.b32.xlu0 %v919, 17
  %v1077 = vpop.permute.xlu0 %1076
  %1078 = vrot.lane.b32.xlu0 %v927, 17
  %v1079 = vpop.permute.xlu0 %1078
  %1080 = vrot.lane.b32.xlu0 %v935, 17
  %v1081 = vpop.permute.xlu0 %1080
  %1082 = vrot.lane.b32.xlu0 %v943, 17
  %v1083 = vpop.permute.xlu0 %1082
  %v1084 = vsel %vm290, %v1081, %v1083
  %v1085 = vsel %vm290, %v1079, %v1081
  %v1086 = vsel %vm290, %v1077, %v1079
  %v1087 = vsel %vm290, %v1083, %v1077
  %v1088 = vmul.f32 %v1087, %v272
  %v1089 = vmul.f32 %v1086, %v273
  %v1090 = vmul.f32 %v1085, %v274
  %v1091 = vmul.f32 %v1084, %v275
  %1092 = vrot.lane.b32.xlu0 %v919, 16
  %v1093 = vpop.permute.xlu0 %1092
  %1094 = vrot.lane.b32.xlu0 %v927, 16
  %v1095 = vpop.permute.xlu0 %1094
  %1096 = vrot.lane.b32.xlu0 %v935, 16
  %v1097 = vpop.permute.xlu0 %1096
  %1098 = vrot.lane.b32.xlu0 %v943, 16
  %v1099 = vpop.permute.xlu0 %1098
  %v1100 = vsel %vm307, %v1097, %v1099
  %v1101 = vsel %vm307, %v1095, %v1097
  %v1102 = vsel %vm307, %v1093, %v1095
  %v1103 = vsel %vm307, %v1099, %v1093
  %v1104 = vmul.f32 %v1103, %v316
  %v1105 = vmul.f32 %v1102, %v317
  %v1106 = vmul.f32 %v1101, %v318
  %v1107 = vmul.f32 %v1100, %v319
  %1108 = vrot.lane.b32.xlu0 %v919, 15
  %v1109 = vpop.permute.xlu0 %1108
  %1110 = vrot.lane.b32.xlu0 %v927, 15
  %v1111 = vpop.permute.xlu0 %1110
  %1112 = vrot.lane.b32.xlu0 %v935, 15
  %v1113 = vpop.permute.xlu0 %1112
  %1114 = vrot.lane.b32.xlu0 %v943, 15
  %v1115 = vpop.permute.xlu0 %1114
  %v1116 = vsel %vm336, %v1113, %v1115
  %v1117 = vsel %vm336, %v1111, %v1113
  %v1118 = vsel %vm336, %v1109, %v1111
  %v1119 = vsel %vm336, %v1115, %v1109
  %v1120 = vmul.f32 %v1119, %v341
  %v1121 = vmul.f32 %v1118, %v342
  %v1122 = vmul.f32 %v1117, %v343
  %v1123 = vmul.f32 %v1116, %v344
  %1124 = vrot.lane.b32.xlu0 %v919, 1
  %v1125 = vpop.permute.xlu0 %1124
  %1126 = vrot.lane.b32.xlu0 %v927, 1
  %v1127 = vpop.permute.xlu0 %1126
  %1128 = vrot.lane.b32.xlu0 %v935, 1
  %v1129 = vpop.permute.xlu0 %1128
  %1130 = vrot.lane.b32.xlu0 %v943, 1
  %v1131 = vpop.permute.xlu0 %1130
  %v1132 = vsel %vm361, %v1129, %v1131
  %v1133 = vsel %vm361, %v1127, %v1129
  %v1134 = vsel %vm361, %v1125, %v1127
  %v1135 = vsel %vm361, %v1131, %v1125
  %v1136 = vmul.f32 %v1135, %v366
  %v1137 = vmul.f32 %v1134, %v367
  %v1138 = vmul.f32 %v1133, %v368
  %v1139 = vmul.f32 %v1132, %v369
  %v1140 = vmul.f32 %v919, %v272
  %v1141 = vmul.f32 %v927, %v273
  %v1142 = vmul.f32 %v935, %v274
  %v1143 = vmul.f32 %v943, %v275
  %1144 = vrot.lane.b32.xlu0 %v919, 127
  %v1145 = vpop.permute.xlu0 %1144
  %1146 = vrot.lane.b32.xlu0 %v927, 127
  %v1147 = vpop.permute.xlu0 %1146
  %1148 = vrot.lane.b32.xlu0 %v935, 127
  %v1149 = vpop.permute.xlu0 %1148
  %1150 = vrot.lane.b32.xlu0 %v943, 127
  %v1151 = vpop.permute.xlu0 %1150
  %v1152 = vsel %vm398, %v1149, %v1151
  %v1153 = vsel %vm398, %v1147, %v1149
  %v1154 = vsel %vm398, %v1145, %v1147
  %v1155 = vsel %vm398, %v1151, %v1145
  %v1156 = vmul.f32 %v1154, %v403
  %v1157 = vmul.f32 %v1153, %v404
  %v1158 = vmul.f32 %v1152, %v405
  %v1159 = vmul.f32 %v1155, %v406
  %1160 = vrot.lane.b32.xlu0 %v919, 113
  %v1161 = vpop.permute.xlu0 %1160
  %1162 = vrot.lane.b32.xlu0 %v927, 113
  %v1163 = vpop.permute.xlu0 %1162
  %1164 = vrot.lane.b32.xlu0 %v935, 113
  %v1165 = vpop.permute.xlu0 %1164
  %1166 = vrot.lane.b32.xlu0 %v943, 113
  %v1167 = vpop.permute.xlu0 %1166
  %v1168 = vsel %vm423, %v1165, %v1167
  %v1169 = vsel %vm423, %v1163, %v1165
  %v1170 = vsel %vm423, %v1161, %v1163
  %v1171 = vsel %vm423, %v1167, %v1161
  %v1172 = vmul.f32 %v1170, %v428
  %v1173 = vmul.f32 %v1169, %v429
  %v1174 = vmul.f32 %v1168, %v430
  %v1175 = vmul.f32 %v1171, %v431
  %1176 = vrot.lane.b32.xlu0 %v919, 112
  %v1177 = vpop.permute.xlu0 %1176
  %1178 = vrot.lane.b32.xlu0 %v927, 112
  %v1179 = vpop.permute.xlu0 %1178
  %1180 = vrot.lane.b32.xlu0 %v935, 112
  %v1181 = vpop.permute.xlu0 %1180
  %1182 = vrot.lane.b32.xlu0 %v943, 112
  %v1183 = vpop.permute.xlu0 %1182
  %v1184 = vsel %vm448, %v1181, %v1183
  %v1185 = vsel %vm448, %v1179, %v1181
  %v1186 = vsel %vm448, %v1177, %v1179
  %v1187 = vsel %vm448, %v1183, %v1177
  %v1188 = vmul.f32 %v1186, %v453
  %v1189 = vmul.f32 %v1185, %v454
  %v1190 = vmul.f32 %v1184, %v455
  %v1191 = vmul.f32 %v1187, %v456
  %1192 = vrot.lane.b32.xlu0 %v919, 111
  %v1193 = vpop.permute.xlu0 %1192
  %1194 = vrot.lane.b32.xlu0 %v927, 111
  %v1195 = vpop.permute.xlu0 %1194
  %1196 = vrot.lane.b32.xlu0 %v935, 111
  %v1197 = vpop.permute.xlu0 %1196
  %1198 = vrot.lane.b32.xlu0 %v943, 111
  %v1199 = vpop.permute.xlu0 %1198
  %v1200 = vsel %vm473, %v1197, %v1199
  %v1201 = vsel %vm473, %v1195, %v1197
  %v1202 = vsel %vm473, %v1193, %v1195
  %v1203 = vsel %vm473, %v1199, %v1193
  %v1204 = vmul.f32 %v1202, %v276
  %v1205 = vmul.f32 %v1201, %v277
  %v1206 = vmul.f32 %v1200, %v278
  %v1207 = vmul.f32 %v1203, %v279
  %v1212 = vrot.slane %v972, 7
  %v1213 = vrot.slane %v973, 7
  %v1214 = vrot.slane %v974, 7
  %v1215 = vrot.slane %v975, 7
  %v1224 = vrot.slane %v988, 6
  %v1225 = vrot.slane %v989, 6
  %v1226 = vrot.slane %v990, 6
  %v1227 = vrot.slane %v991, 6
  %v1236 = vrot.slane %v1004, 5
  %v1237 = vrot.slane %v1005, 5
  %v1238 = vrot.slane %v1006, 5
  %v1239 = vrot.slane %v1007, 5
  %v1248 = vrot.slane %v1024, 3
  %v1249 = vrot.slane %v1025, 3
  %v1250 = vrot.slane %v1026, 3
  %v1251 = vrot.slane %v1027, 3
  %v1260 = vrot.slane %v1040, 2
  %v1261 = vrot.slane %v1041, 2
  %v1262 = vrot.slane %v1042, 2
  %v1263 = vrot.slane %v1043, 2
  %v1272 = vrot.slane %v1056, 1
  %v1273 = vrot.slane %v1057, 1
  %v1274 = vrot.slane %v1058, 1
  %v1275 = vrot.slane %v1059, 1
  %v1284 = vrot.slane %v1088, 7
  %v1285 = vrot.slane %v1089, 7
  %v1286 = vrot.slane %v1090, 7
  %v1287 = vrot.slane %v1091, 7
  %v1296 = vrot.slane %v1104, 6
  %v1297 = vrot.slane %v1105, 6
  %v1298 = vrot.slane %v1106, 6
  %v1299 = vrot.slane %v1107, 6
  %v1308 = vrot.slane %v1120, 5
  %v1309 = vrot.slane %v1121, 5
  %v1310 = vrot.slane %v1122, 5
  %v1311 = vrot.slane %v1123, 5
  %v1320 = vrot.slane %v1136, 4
  %v1321 = vrot.slane %v1137, 4
  %v1322 = vrot.slane %v1138, 4
  %v1323 = vrot.slane %v1139, 4
  %v1332 = vrot.slane %v1140, 7
  %v1333 = vrot.slane %v1141, 7
  %v1334 = vrot.slane %v1142, 7
  %v1335 = vrot.slane %v1143, 7
  %v1344 = vrot.slane %v1156, 2
  %v1345 = vrot.slane %v1157, 2
  %v1346 = vrot.slane %v1158, 2
  %v1347 = vrot.slane %v1159, 2
  %v1356 = vrot.slane %v1172, 1
  %v1357 = vrot.slane %v1173, 1
  %v1358 = vrot.slane %v1174, 1
  %v1359 = vrot.slane %v1175, 1
  %v1364 = vsel %vm566, %v956, %v1212
  %v1365 = vsel %vm566, %v957, %v1213
  %v1366 = vsel %vm566, %v958, %v1214
  %v1367 = vsel %vm566, %v959, %v1215
  %v1368 = vsel %vm571, %v1364, %v1224
  %v1369 = vsel %vm571, %v1365, %v1225
  %v1370 = vsel %vm571, %v1366, %v1226
  %v1371 = vsel %vm571, %v1367, %v1227
  %v1372 = vsel %vm576, %v1368, %v1236
  %v1373 = vsel %vm576, %v1369, %v1237
  %v1374 = vsel %vm576, %v1370, %v1238
  %v1375 = vsel %vm576, %v1371, %v1239
  %v1376 = vsel %vm97, %v1372, %v1008
  %v1377 = vsel %vm97, %v1373, %v1009
  %v1378 = vsel %vm97, %v1374, %v1010
  %v1379 = vsel %vm97, %v1375, %v1011
  %v1380 = vsel %vm585, %v1376, %v1248
  %v1381 = vsel %vm585, %v1377, %v1249
  %v1382 = vsel %vm585, %v1378, %v1250
  %v1383 = vsel %vm585, %v1379, %v1251
  %v1384 = vsel %vm590, %v1380, %v1260
  %v1385 = vsel %vm590, %v1381, %v1261
  %v1386 = vsel %vm590, %v1382, %v1262
  %v1387 = vsel %vm590, %v1383, %v1263
  %v1388 = vsel %vm595, %v1384, %v1272
  %v1389 = vsel %vm595, %v1385, %v1273
  %v1390 = vsel %vm595, %v1386, %v1274
  %v1391 = vsel %vm595, %v1387, %v1275
  %v1392 = vsel %vm566, %v1072, %v1284
  %v1393 = vsel %vm566, %v1073, %v1285
  %v1394 = vsel %vm566, %v1074, %v1286
  %v1395 = vsel %vm566, %v1075, %v1287
  %v1396 = vsel %vm571, %v1392, %v1296
  %v1397 = vsel %vm571, %v1393, %v1297
  %v1398 = vsel %vm571, %v1394, %v1298
  %v1399 = vsel %vm571, %v1395, %v1299
  %v1400 = vsel %vm576, %v1396, %v1308
  %v1401 = vsel %vm576, %v1397, %v1309
  %v1402 = vsel %vm576, %v1398, %v1310
  %v1403 = vsel %vm576, %v1399, %v1311
  %v1404 = vsel %vm97, %v1400, %v1320
  %v1405 = vsel %vm97, %v1401, %v1321
  %v1406 = vsel %vm97, %v1402, %v1322
  %v1407 = vsel %vm97, %v1403, %v1323
  %v1408 = vsel %vm585, %v1404, %v1332
  %v1409 = vsel %vm585, %v1405, %v1333
  %v1410 = vsel %vm585, %v1406, %v1334
  %v1411 = vsel %vm585, %v1407, %v1335
  %v1412 = vsel %vm590, %v1408, %v1344
  %v1413 = vsel %vm590, %v1409, %v1345
  %v1414 = vsel %vm590, %v1410, %v1346
  %v1415 = vsel %vm590, %v1411, %v1347
  %v1416 = vsel %vm595, %v1412, %v1356
  %v1417 = vsel %vm595, %v1413, %v1357
  %v1418 = vsel %vm595, %v1414, %v1358
  %v1419 = vsel %vm595, %v1415, %v1359
  %v1424 = vrot.slane %v1204, 7
  %v1425 = vrot.slane %v1205, 7
  %v1426 = vrot.slane %v1206, 7
  %v1427 = vrot.slane %v1207, 7
  %v1432 = vsel %vm566, %v1188, %v1424
  %v1433 = vsel %vm566, %v1189, %v1425
  %v1434 = vsel %vm566, %v1190, %v1426
  %v1435 = vsel %vm566, %v1191, %v1427
  %v1436 = vld [vmem:[%s7] sm:$0x1]
  %vm1437 = vcmask 146432
  %v1439 = vsel %vm1437, %v1436, 0
  %v1442 = vsel %vm571, %v1432, 0
  %v1445 = vsel %vm571, %v1433, 0
  %v1448 = vsel %vm571, %v1434, 0
  %v1451 = vsel %vm571, %v1435, 0
  %1453 = vmatprep.subr.mxu0 0.0
  %1454 = vmatpush1.msra.mxu0 0.0
  %1455 = vmatprep.subr.mxu0 0.0
  %1456 = vmatpush1.msra.mxu0 0.0
  %1457 = vmatprep.subr.mxu0 0.0
  %1458 = vmatpush1.msra.mxu0 0.0
  %1459 = vmatprep.subr.mxu0 0.0
  %1460 = vmatpush1.msra.mxu0 0.0
  %1461 = vmatprep.subr.mxu0 0.0
  %1462 = vmatpush1.msra.mxu0 0.0
  %1463 = vmatprep.subr.mxu0 0.0
  %1464 = vmatpush1.msra.mxu0 0.0
  %1465 = vmatprep.subr.mxu0 0.0
  %1466 = vmatpush1.msra.mxu0 0.0
  %1467 = vmatprep.subr.mxu0 0.0
  %1468 = vmatpush1.msra.mxu0 0.0
  %1469 = vmatprep.subr.mxu0 0.0
  %1470 = vmatpush1.msra.mxu0 0.0
  %1471 = vmatprep.subr.mxu0 0.0
  %1472 = vmatpush1.msra.mxu0 0.0
  %1473 = vmatprep.subr.mxu0 0.0
  %1474 = vmatpush1.msra.mxu0 0.0
  %1475 = vmatprep.subr.mxu0 0.0
  %1476 = vmatpush1.msra.mxu0 0.0
  %1477 = vmatprep.subr.mxu0 0.0
  %1478 = vmatpush1.msra.mxu0 0.0
  %1479 = vmatprep.subr.mxu0 %v1445
  %1480 = vmatpush1.msra.mxu0 %v1442
  %1481 = vmatprep.subr.mxu0 %v1417
  %1482 = vmatpush1.msra.mxu0 %v1416
  %1483 = vmatprep.subr.mxu0 %v1389
  %1484 = vmatpush1.msra.mxu0 %v1388
  %1485 = vmatprep.subr.mxu0 0.0
  %1486 = vmatpush2.msra.mxu0 0.0
  %1487 = vmatprep.subr.mxu0 0.0
  %1488 = vmatpush2.msra.mxu0 0.0
  %1489 = vmatprep.subr.mxu0 0.0
  %1490 = vmatpush2.msra.mxu0 0.0
  %1491 = vmatprep.subr.mxu0 0.0
  %1492 = vmatpush2.msra.mxu0 0.0
  %1493 = vmatprep.subr.mxu0 0.0
  %1494 = vmatpush2.msra.mxu0 0.0
  %1495 = vmatprep.subr.mxu0 0.0
  %1496 = vmatpush2.msra.mxu0 0.0
  %1497 = vmatprep.subr.mxu0 0.0
  %1498 = vmatpush2.msra.mxu0 0.0
  %1499 = vmatprep.subr.mxu0 0.0
  %1500 = vmatpush2.msra.mxu0 0.0
  %1501 = vmatprep.subr.mxu0 0.0
  %1502 = vmatpush2.msra.mxu0 0.0
  %1503 = vmatprep.subr.mxu0 0.0
  %1504 = vmatpush2.msra.mxu0 0.0
  %1505 = vmatprep.subr.mxu0 0.0
  %1506 = vmatpush2.msra.mxu0 0.0
  %1507 = vmatprep.subr.mxu0 0.0
  %1508 = vmatpush2.msra.mxu0 0.0
  %1509 = vmatprep.subr.mxu0 0.0
  %1510 = vmatpush2.msra.mxu0 0.0
  %1511 = vmatprep.subr.mxu0 0.0
  %1512 = vmatpush2.msra.mxu0 0.0
  %1513 = vmatprep.subr.mxu0 0.0
  %1514 = vmatpush2.msra.mxu0 0.0
  %1515 = vmatprep.subr.mxu0 0.0
  %1516 = vmatpush2.msra.mxu0 0.0
  %1517 = vmatprep.mubr.f32.mxu0 0.0
  %1518 = vmatmul.mubr.f32.gmra.mxu0 %v1439
  %v1519 = vpop.f32.mrf.mxu0
  %v1520 = vadd.f32 0.0, %v1519
  %v1521 = vpop.f32.mrf.mxu0
  %v1522 = vadd.f32 0.0, %v1521
  %1523 = vdwg.mxu0
  %1524 = vmatprep.subr.mxu0 0.0
  %1525 = vmatpush1.msra.mxu0 0.0
  %1526 = vmatprep.subr.mxu0 0.0
  %1527 = vmatpush1.msra.mxu0 0.0
  %1528 = vmatprep.subr.mxu0 0.0
  %1529 = vmatpush1.msra.mxu0 0.0
  %1530 = vmatprep.subr.mxu0 0.0
  %1531 = vmatpush1.msra.mxu0 0.0
  %1532 = vmatprep.subr.mxu0 0.0
  %1533 = vmatpush1.msra.mxu0 0.0
  %1534 = vmatprep.subr.mxu0 0.0
  %1535 = vmatpush1.msra.mxu0 0.0
  %1536 = vmatprep.subr.mxu0 0.0
  %1537 = vmatpush1.msra.mxu0 0.0
  %1538 = vmatprep.subr.mxu0 0.0
  %1539 = vmatpush1.msra.mxu0 0.0
  %1540 = vmatprep.subr.mxu0 0.0
  %1541 = vmatpush1.msra.mxu0 0.0
  %1542 = vmatprep.subr.mxu0 0.0
  %1543 = vmatpush1.msra.mxu0 0.0
  %1544 = vmatprep.subr.mxu0 0.0
  %1545 = vmatpush1.msra.mxu0 0.0
  %1546 = vmatprep.subr.mxu0 0.0
  %1547 = vmatpush1.msra.mxu0 0.0
  %1548 = vmatprep.subr.mxu0 0.0
  %1549 = vmatpush1.msra.mxu0 0.0
  %1550 = vmatprep.subr.mxu0 %v1451
  %1551 = vmatpush1.msra.mxu0 %v1448
  %1552 = vmatprep.subr.mxu0 %v1419
  %1553 = vmatpush1.msra.mxu0 %v1418
  %1554 = vmatprep.subr.mxu0 %v1391
  %1555 = vmatpush1.msra.mxu0 %v1390
  %1556 = vmatprep.subr.mxu0 0.0
  %1557 = vmatpush2.msra.mxu0 0.0
  %1558 = vmatprep.subr.mxu0 0.0
  %1559 = vmatpush2.msra.mxu0 0.0
  %1560 = vmatprep.subr.mxu0 0.0
  %1561 = vmatpush2.msra.mxu0 0.0
  %1562 = vmatprep.subr.mxu0 0.0
  %1563 = vmatpush2.msra.mxu0 0.0
  %1564 = vmatprep.subr.mxu0 0.0
  %1565 = vmatpush2.msra.mxu0 0.0
  %1566 = vmatprep.subr.mxu0 0.0
  %1567 = vmatpush2.msra.mxu0 0.0
  %1568 = vmatprep.subr.mxu0 0.0
  %1569 = vmatpush2.msra.mxu0 0.0
  %1570 = vmatprep.subr.mxu0 0.0
  %1571 = vmatpush2.msra.mxu0 0.0
  %1572 = vmatprep.subr.mxu0 0.0
  %1573 = vmatpush2.msra.mxu0 0.0
  %1574 = vmatprep.subr.mxu0 0.0
  %1575 = vmatpush2.msra.mxu0 0.0
  %1576 = vmatprep.subr.mxu0 0.0
  %1577 = vmatpush2.msra.mxu0 0.0
  %1578 = vmatprep.subr.mxu0 0.0
  %1579 = vmatpush2.msra.mxu0 0.0
  %1580 = vmatprep.subr.mxu0 0.0
  %1581 = vmatpush2.msra.mxu0 0.0
  %1582 = vmatprep.subr.mxu0 0.0
  %1583 = vmatpush2.msra.mxu0 0.0
  %1584 = vmatprep.subr.mxu0 0.0
  %1585 = vmatpush2.msra.mxu0 0.0
  %1586 = vmatprep.subr.mxu0 0.0
  %1587 = vmatpush2.msra.mxu0 0.0
  %1588 = vmatprep.mubr.f32.mxu0 0.0
  %1589 = vmatmul.mubr.f32.gmra.mxu0 %v1439
  %v1590 = vpop.f32.mrf.mxu0
  %v1591 = vadd.f32 0.0, %v1590
  %v1592 = vpop.f32.mrf.mxu0
  %v1593 = vadd.f32 0.0, %v1592
  %1594 = vdwg.mxu0
  %v1595 = vsub.f32 0.0, %v1520
  %v1596 = vsub.f32 0.0, %v1522
  %v1597 = vsub.f32 0.0, %v1591
  %v1598 = vsub.f32 0.0, %v1593
  %v1599 = vmul.f32 %v1595, 1.442695
  %v1600 = vpow.pop %v1599
  %v1601 = vmul.f32 %v1596, 1.442695
  %v1602 = vpow.pop %v1601
  %v1603 = vmul.f32 %v1597, 1.442695
  %v1604 = vpow.pop %v1603
  %v1605 = vmul.f32 %v1598, 1.442695
  %v1606 = vpow.pop %v1605
  %v1607 = vadd.f32 %v1600, 1.0
  %v1608 = vadd.f32 %v1602, 1.0
  %v1609 = vadd.f32 %v1604, 1.0
  %v1610 = vadd.f32 %v1606, 1.0
  %v1611 = vrcp.pop %v1607
  %v1612 = vmul.f32 1.0, %v1611
  %v1613 = vrcp.pop %v1608
  %v1614 = vmul.f32 1.0, %v1613
  %v1615 = vrcp.pop %v1609
  %v1616 = vmul.f32 1.0, %v1615
  %v1617 = vrcp.pop %v1610
  %v1618 = vmul.f32 1.0, %v1617
  %v1619 = vlaneseq
  %v1620 = vshrl.u32 %v1619, 7
  %v1621 = vsub.s32 0, %v1620
  %v1622 = vrot.slane %v1612, %v1621
  %v1623 = vlaneseq
  %v1624 = vshrl.u32 %v1623, 7
  %v1625 = vsub.s32 0, %v1624
  %v1626 = vrot.slane %v1614, %v1625
  %v1627 = vlaneseq
  %v1628 = vshrl.u32 %v1627, 7
  %v1629 = vsub.s32 0, %v1628
  %v1630 = vrot.slane %v1616, %v1629
  %v1631 = vlaneseq
  %v1632 = vshrl.u32 %v1631, 7
  %v1633 = vsub.s32 0, %v1632
  %v1634 = vrot.slane %v1618, %v1633
  %v1635 = vmul.f32 %v867, %v1622
  %v1636 = vmul.f32 %v868, %v1626
  %v1637 = vmul.f32 %v869, %v1630
  %v1638 = vmul.f32 %v870, %v1634
  %v1639 = vmul.f32 %v871, %v1622
  %v1640 = vmul.f32 %v872, %v1626
  %v1641 = vmul.f32 %v873, %v1630
  %v1642 = vmul.f32 %v874, %v1634
  %1643 = vrot.lane.b32.xlu0 %v1635, 127
  %v1644 = vpop.permute.xlu0 %1643
  %1645 = vrot.lane.b32.xlu0 %v1639, 127
  %v1646 = vpop.permute.xlu0 %1645
  %1647 = vrot.lane.b32.xlu0 %v1636, 127
  %v1648 = vpop.permute.xlu0 %1647
  %1649 = vrot.lane.b32.xlu0 %v1640, 127
  %v1650 = vpop.permute.xlu0 %1649
  %1651 = vrot.lane.b32.xlu0 %v1637, 127
  %v1652 = vpop.permute.xlu0 %1651
  %1653 = vrot.lane.b32.xlu0 %v1641, 127
  %v1654 = vpop.permute.xlu0 %1653
  %1655 = vrot.lane.b32.xlu0 %v1638, 127
  %v1656 = vpop.permute.xlu0 %1655
  %1657 = vrot.lane.b32.xlu0 %v1642, 127
  %v1658 = vpop.permute.xlu0 %1657
  %v1659 = vsel %vm398, %v1652, %v1656
  %v1660 = vsel %vm398, %v1654, %v1658
  %v1661 = vsel %vm398, %v1648, %v1652
  %v1662 = vsel %vm398, %v1650, %v1654
  %v1663 = vsel %vm398, %v1644, %v1648
  %v1664 = vsel %vm398, %v1646, %v1650
  %v1665 = vsel %vm398, %v1656, %v1644
  %v1666 = vsel %vm398, %v1658, %v1646
  %v1667 = vmax.f32 %v1635, %v1663
  %v1668 = vmax.f32 %v1636, %v1661
  %v1669 = vmax.f32 %v1637, %v1659
  %v1670 = vmax.f32 %v1638, %v1665
  %v1671 = vmax.f32 %v1639, %v1664
  %v1672 = vmax.f32 %v1640, %v1662
  %v1673 = vmax.f32 %v1641, %v1660
  %v1674 = vmax.f32 %v1642, %v1666
  %1675 = vrot.lane.b32.xlu0 %v1667, 112
  %v1676 = vpop.permute.xlu0 %1675
  %1677 = vrot.lane.b32.xlu0 %v1671, 112
  %v1678 = vpop.permute.xlu0 %1677
  %1679 = vrot.lane.b32.xlu0 %v1668, 112
  %v1680 = vpop.permute.xlu0 %1679
  %1681 = vrot.lane.b32.xlu0 %v1672, 112
  %v1682 = vpop.permute.xlu0 %1681
  %1683 = vrot.lane.b32.xlu0 %v1669, 112
  %v1684 = vpop.permute.xlu0 %1683
  %1685 = vrot.lane.b32.xlu0 %v1673, 112
  %v1686 = vpop.permute.xlu0 %1685
  %1687 = vrot.lane.b32.xlu0 %v1670, 112
  %v1688 = vpop.permute.xlu0 %1687
  %1689 = vrot.lane.b32.xlu0 %v1674, 112
  %v1690 = vpop.permute.xlu0 %1689
  %v1691 = vsel %vm448, %v1684, %v1688
  %v1692 = vsel %vm448, %v1686, %v1690
  %v1693 = vsel %vm448, %v1680, %v1684
  %v1694 = vsel %vm448, %v1682, %v1686
  %v1695 = vsel %vm448, %v1676, %v1680
  %v1696 = vsel %vm448, %v1678, %v1682
  %v1697 = vsel %vm448, %v1688, %v1676
  %v1698 = vsel %vm448, %v1690, %v1678
  %v1699 = vmax.f32 %v1667, %v1695
  %v1700 = vmax.f32 %v1668, %v1693
  %v1701 = vmax.f32 %v1669, %v1691
  %v1702 = vmax.f32 %v1670, %v1697
  %v1703 = vmax.f32 %v1671, %v1696
  %v1704 = vmax.f32 %v1672, %v1694
  %v1705 = vmax.f32 %v1673, %v1692
  %v1706 = vmax.f32 %v1674, %v1698
  %v1707 = vld [vmem:[%s21] sm:$0xff]
  %v1708 = vld [vmem:[%s21 + $0x8] sm:$0xff]
  %v1709 = vld [vmem:[%s21 + $0x10] sm:$0xff]
  %v1710 = vld [vmem:[%s21 + $0x18] sm:$0xff]
  %v1711 = vld [vmem:[%s21 + $0x20] sm:$0xff]
  %v1712 = vld [vmem:[%s21 + $0x28] sm:$0xff]
  %v1713 = vld [vmem:[%s21 + $0x30] sm:$0xff]
  %v1714 = vld [vmem:[%s21 + $0x38] sm:$0xff]
  %v1715 = vld [vmem:[%s21 + $0x40] sm:$0xff]
  %v1716 = vld [vmem:[%s21 + $0x48] sm:$0xff]
  %v1717 = vld [vmem:[%s21 + $0x50] sm:$0xff]
  %v1718 = vld [vmem:[%s21 + $0x58] sm:$0xff]
  %v1719 = vld [vmem:[%s21 + $0x60] sm:$0xff]
  %v1720 = vld [vmem:[%s21 + $0x68] sm:$0xff]
  %v1721 = vld [vmem:[%s21 + $0x70] sm:$0xff]
  %v1722 = vld [vmem:[%s21 + $0x78] sm:$0xff]
  %v1723 = vld [vmem:[%s21 + $0x80] sm:$0xff]
  %v1724 = vld [vmem:[%s21 + $0x88] sm:$0xff]
  %v1725 = vld [vmem:[%s21 + $0x90] sm:$0xff]
  %v1726 = vld [vmem:[%s21 + $0x98] sm:$0xff]
  %v1727 = vld [vmem:[%s21 + $0xa0] sm:$0xff]
  %v1728 = vld [vmem:[%s21 + $0xa8] sm:$0xff]
  %v1729 = vld [vmem:[%s21 + $0xb0] sm:$0xff]
  %v1730 = vld [vmem:[%s21 + $0xb8] sm:$0xff]
  %v1731 = vld [vmem:[%s21 + $0xc0] sm:$0xff]
  %v1732 = vld [vmem:[%s21 + $0xc8] sm:$0xff]
  %v1733 = vld [vmem:[%s21 + $0xd0] sm:$0xff]
  %v1734 = vld [vmem:[%s21 + $0xd8] sm:$0xff]
  %v1735 = vld [vmem:[%s21 + $0xe0] sm:$0xff]
  %v1736 = vld [vmem:[%s21 + $0xe8] sm:$0xff]
  %v1737 = vld [vmem:[%s21 + $0xf0] sm:$0xff]
  %v1738 = vld [vmem:[%s21 + $0xf8] sm:$0xff]
  %v1739 = vld [vmem:[%s21 + $0x100] sm:$0xff]
  %v1740 = vld [vmem:[%s21 + $0x108] sm:$0xff]
  %v1741 = vld [vmem:[%s21 + $0x110] sm:$0xff]
  %v1742 = vld [vmem:[%s21 + $0x118] sm:$0xff]
  %v1743 = vld [vmem:[%s21 + $0x120] sm:$0xff]
  %v1744 = vld [vmem:[%s21 + $0x128] sm:$0xff]
  %v1745 = vld [vmem:[%s21 + $0x130] sm:$0xff]
  %v1746 = vld [vmem:[%s21 + $0x138] sm:$0xff]
  %v1747 = vld [vmem:[%s21 + $0x140] sm:$0xff]
  %v1748 = vld [vmem:[%s21 + $0x148] sm:$0xff]
  %v1749 = vld [vmem:[%s21 + $0x150] sm:$0xff]
  %v1750 = vld [vmem:[%s21 + $0x158] sm:$0xff]
  %v1751 = vld [vmem:[%s21 + $0x160] sm:$0xff]
  %v1752 = vld [vmem:[%s21 + $0x168] sm:$0xff]
  %v1753 = vld [vmem:[%s21 + $0x170] sm:$0xff]
  %v1754 = vld [vmem:[%s21 + $0x178] sm:$0xff]
  %v1755 = vld [vmem:[%s21 + $0x180] sm:$0xff]
  %v1756 = vld [vmem:[%s21 + $0x188] sm:$0xff]
  %v1757 = vld [vmem:[%s21 + $0x190] sm:$0xff]
  %v1758 = vld [vmem:[%s21 + $0x198] sm:$0xff]
  %v1759 = vld [vmem:[%s21 + $0x1a0] sm:$0xff]
  %v1760 = vld [vmem:[%s21 + $0x1a8] sm:$0xff]
  %v1761 = vld [vmem:[%s21 + $0x1b0] sm:$0xff]
  %v1762 = vld [vmem:[%s21 + $0x1b8] sm:$0xff]
  %v1763 = vld [vmem:[%s21 + $0x1c0] sm:$0xff]
  %v1764 = vld [vmem:[%s21 + $0x1c8] sm:$0xff]
  %v1765 = vld [vmem:[%s21 + $0x1d0] sm:$0xff]
  %v1766 = vld [vmem:[%s21 + $0x1d8] sm:$0xff]
  %v1767 = vld [vmem:[%s21 + $0x1e0] sm:$0xff]
  %v1768 = vld [vmem:[%s21 + $0x1e8] sm:$0xff]
  %v1769 = vld [vmem:[%s21 + $0x1f0] sm:$0xff]
  %v1770 = vld [vmem:[%s21 + $0x1f8] sm:$0xff]
  %1771 = vmatprep.subr.mxu0 0.0
  %1772 = vmatpush1.msra.mxu0 %v1722
  %1773 = vmatprep.subr.mxu0 0.0
  %1774 = vmatpush1.msra.mxu0 %v1721
  %1775 = vmatprep.subr.mxu0 0.0
  %1776 = vmatpush1.msra.mxu0 %v1720
  %1777 = vmatprep.subr.mxu0 0.0
  %1778 = vmatpush1.msra.mxu0 %v1719
  %1779 = vmatprep.subr.mxu0 0.0
  %1780 = vmatpush1.msra.mxu0 %v1718
  %1781 = vmatprep.subr.mxu0 0.0
  %1782 = vmatpush1.msra.mxu0 %v1717
  %1783 = vmatprep.subr.mxu0 0.0
  %1784 = vmatpush1.msra.mxu0 %v1716
  %1785 = vmatprep.subr.mxu0 0.0
  %1786 = vmatpush1.msra.mxu0 %v1715
  %1787 = vmatprep.subr.mxu0 0.0
  %1788 = vmatpush1.msra.mxu0 %v1714
  %1789 = vmatprep.subr.mxu0 0.0
  %1790 = vmatpush1.msra.mxu0 %v1713
  %1791 = vmatprep.subr.mxu0 0.0
  %1792 = vmatpush1.msra.mxu0 %v1712
  %1793 = vmatprep.subr.mxu0 0.0
  %1794 = vmatpush1.msra.mxu0 %v1711
  %1795 = vmatprep.subr.mxu0 0.0
  %1796 = vmatpush1.msra.mxu0 %v1710
  %1797 = vmatprep.subr.mxu0 0.0
  %1798 = vmatpush1.msra.mxu0 %v1709
  %1799 = vmatprep.subr.mxu0 0.0
  %1800 = vmatpush1.msra.mxu0 %v1708
  %1801 = vmatprep.subr.mxu0 0.0
  %1802 = vmatpush1.msra.mxu0 %v1707
  %1803 = vmatprep.subr.mxu0 0.0
  %1804 = vmatpush2.msra.mxu0 %v1738
  %1805 = vmatprep.subr.mxu0 0.0
  %1806 = vmatpush2.msra.mxu0 %v1737
  %1807 = vmatprep.subr.mxu0 0.0
  %1808 = vmatpush2.msra.mxu0 %v1736
  %1809 = vmatprep.subr.mxu0 0.0
  %1810 = vmatpush2.msra.mxu0 %v1735
  %1811 = vmatprep.subr.mxu0 0.0
  %1812 = vmatpush2.msra.mxu0 %v1734
  %1813 = vmatprep.subr.mxu0 0.0
  %1814 = vmatpush2.msra.mxu0 %v1733
  %1815 = vmatprep.subr.mxu0 0.0
  %1816 = vmatpush2.msra.mxu0 %v1732
  %1817 = vmatprep.subr.mxu0 0.0
  %1818 = vmatpush2.msra.mxu0 %v1731
  %1819 = vmatprep.subr.mxu0 0.0
  %1820 = vmatpush2.msra.mxu0 %v1730
  %1821 = vmatprep.subr.mxu0 0.0
  %1822 = vmatpush2.msra.mxu0 %v1729
  %1823 = vmatprep.subr.mxu0 0.0
  %1824 = vmatpush2.msra.mxu0 %v1728
  %1825 = vmatprep.subr.mxu0 0.0
  %1826 = vmatpush2.msra.mxu0 %v1727
  %1827 = vmatprep.subr.mxu0 0.0
  %1828 = vmatpush2.msra.mxu0 %v1726
  %1829 = vmatprep.subr.mxu0 0.0
  %1830 = vmatpush2.msra.mxu0 %v1725
  %1831 = vmatprep.subr.mxu0 0.0
  %1832 = vmatpush2.msra.mxu0 %v1724
  %1833 = vmatprep.subr.mxu0 0.0
  %1834 = vmatpush2.msra.mxu0 %v1723
  %1835 = vmatprep.mubr.f32.mxu0 %v1700
  %1836 = vmatmul.mubr.f32.gmra.mxu0 %v1699
  %v1837 = vpop.f32.mrf.mxu0
  %v1838 = vadd.f32 0.0, %v1837
  %v1839 = vpop.f32.mrf.mxu0
  %1840 = vmatprep.mubr.f32.mxu0 %v1704
  %1841 = vmatmul.mubr.f32.gmra.mxu0 %v1703
  %v1842 = vpop.f32.mrf.mxu0
  %v1843 = vadd.f32 0.0, %v1842
  %v1844 = vpop.f32.mrf.mxu0
  %1845 = vdwg.mxu0
  %1846 = vmatprep.subr.mxu0 0.0
  %1847 = vmatpush1.msra.mxu0 %v1754
  %1848 = vmatprep.subr.mxu0 0.0
  %1849 = vmatpush1.msra.mxu0 %v1753
  %1850 = vmatprep.subr.mxu0 0.0
  %1851 = vmatpush1.msra.mxu0 %v1752
  %1852 = vmatprep.subr.mxu0 0.0
  %1853 = vmatpush1.msra.mxu0 %v1751
  %1854 = vmatprep.subr.mxu0 0.0
  %1855 = vmatpush1.msra.mxu0 %v1750
  %1856 = vmatprep.subr.mxu0 0.0
  %1857 = vmatpush1.msra.mxu0 %v1749
  %1858 = vmatprep.subr.mxu0 0.0
  %1859 = vmatpush1.msra.mxu0 %v1748
  %1860 = vmatprep.subr.mxu0 0.0
  %1861 = vmatpush1.msra.mxu0 %v1747
  %1862 = vmatprep.subr.mxu0 0.0
  %1863 = vmatpush1.msra.mxu0 %v1746
  %1864 = vmatprep.subr.mxu0 0.0
  %1865 = vmatpush1.msra.mxu0 %v1745
  %1866 = vmatprep.subr.mxu0 0.0
  %1867 = vmatpush1.msra.mxu0 %v1744
  %1868 = vmatprep.subr.mxu0 0.0
  %1869 = vmatpush1.msra.mxu0 %v1743
  %1870 = vmatprep.subr.mxu0 0.0
  %1871 = vmatpush1.msra.mxu0 %v1742
  %1872 = vmatprep.subr.mxu0 0.0
  %1873 = vmatpush1.msra.mxu0 %v1741
  %1874 = vmatprep.subr.mxu0 0.0
  %1875 = vmatpush1.msra.mxu0 %v1740
  %1876 = vmatprep.subr.mxu0 0.0
  %1877 = vmatpush1.msra.mxu0 %v1739
  %1878 = vmatprep.subr.mxu0 0.0
  %1879 = vmatpush2.msra.mxu0 %v1770
  %1880 = vmatprep.subr.mxu0 0.0
  %1881 = vmatpush2.msra.mxu0 %v1769
  %1882 = vmatprep.subr.mxu0 0.0
  %1883 = vmatpush2.msra.mxu0 %v1768
  %1884 = vmatprep.subr.mxu0 0.0
  %1885 = vmatpush2.msra.mxu0 %v1767
  %1886 = vmatprep.subr.mxu0 0.0
  %1887 = vmatpush2.msra.mxu0 %v1766
  %1888 = vmatprep.subr.mxu0 0.0
  %1889 = vmatpush2.msra.mxu0 %v1765
  %1890 = vmatprep.subr.mxu0 0.0
  %1891 = vmatpush2.msra.mxu0 %v1764
  %1892 = vmatprep.subr.mxu0 0.0
  %1893 = vmatpush2.msra.mxu0 %v1763
  %1894 = vmatprep.subr.mxu0 0.0
  %1895 = vmatpush2.msra.mxu0 %v1762
  %1896 = vmatprep.subr.mxu0 0.0
  %1897 = vmatpush2.msra.mxu0 %v1761
  %1898 = vmatprep.subr.mxu0 0.0
  %1899 = vmatpush2.msra.mxu0 %v1760
  %1900 = vmatprep.subr.mxu0 0.0
  %1901 = vmatpush2.msra.mxu0 %v1759
  %1902 = vmatprep.subr.mxu0 0.0
  %1903 = vmatpush2.msra.mxu0 %v1758
  %1904 = vmatprep.subr.mxu0 0.0
  %1905 = vmatpush2.msra.mxu0 %v1757
  %1906 = vmatprep.subr.mxu0 0.0
  %1907 = vmatpush2.msra.mxu0 %v1756
  %1908 = vmatprep.subr.mxu0 0.0
  %1909 = vmatpush2.msra.mxu0 %v1755
  %1910 = vmatprep.mubr.f32.mxu0 %v1702
  %1911 = vmatmul.mubr.f32.gmra.mxu0 %v1701
  %v1912 = vpop.f32.mrf.mxu0
  %v1913 = vadd.f32 %v1838, %v1912
  %v1914 = vpop.f32.mrf.mxu0
  %1915 = vmatprep.mubr.f32.mxu0 %v1706
  %1916 = vmatmul.mubr.f32.gmra.mxu0 %v1705
  %v1917 = vpop.f32.mrf.mxu0
  %v1918 = vadd.f32 %v1843, %v1917
  %v1919 = vpop.f32.mrf.mxu0
  %1920 = vdwg.mxu0
  %1921 = vrot.lane.b32.xlu0 %v1913, 9
  %v1922 = vpop.permute.xlu0 %1921
  %1923 = vrot.lane.b32.xlu0 %v1918, 9
  %v1924 = vpop.permute.xlu0 %1923
  %1925 = vrot.lane.b32.xlu0 %v1913, 8
  %v1926 = vpop.permute.xlu0 %1925
  %1927 = vrot.lane.b32.xlu0 %v1918, 8
  %v1928 = vpop.permute.xlu0 %1927
  %1929 = vrot.lane.b32.xlu0 %v1913, 7
  %v1930 = vpop.permute.xlu0 %1929
  %1931 = vrot.lane.b32.xlu0 %v1918, 7
  %v1932 = vpop.permute.xlu0 %1931
  %1933 = vrot.lane.b32.xlu0 %v1913, 1
  %v1934 = vpop.permute.xlu0 %1933
  %1935 = vrot.lane.b32.xlu0 %v1918, 1
  %v1936 = vpop.permute.xlu0 %1935
  %1937 = vrot.lane.b32.xlu0 %v1913, 127
  %v1938 = vpop.permute.xlu0 %1937
  %1939 = vrot.lane.b32.xlu0 %v1918, 127
  %v1940 = vpop.permute.xlu0 %1939
  %1941 = vrot.lane.b32.xlu0 %v1913, 121
  %v1942 = vpop.permute.xlu0 %1941
  %1943 = vrot.lane.b32.xlu0 %v1918, 121
  %v1944 = vpop.permute.xlu0 %1943
  %1945 = vrot.lane.b32.xlu0 %v1913, 120
  %v1946 = vpop.permute.xlu0 %1945
  %1947 = vrot.lane.b32.xlu0 %v1918, 120
  %v1948 = vpop.permute.xlu0 %1947
  %1949 = vrot.lane.b32.xlu0 %v1913, 119
  %v1950 = vpop.permute.xlu0 %1949
  %1951 = vrot.lane.b32.xlu0 %v1918, 119
  %v1952 = vpop.permute.xlu0 %1951
  %v1955 = vrot.slane %v1926, 6
  %v1956 = vrot.slane %v1928, 6
  %v1957 = vsel %vm571, %v1955, %v1956
  %v1962 = vrot.slane %v1930, 4
  %v1963 = vrot.slane %v1932, 4
  %v1964 = vsel %vm97, %v1962, %v1963
  %v1969 = vrot.slane %v1934, 2
  %v1970 = vrot.slane %v1936, 2
  %v1971 = vsel %vm590, %v1969, %v1970
  %v1976 = vrot.slane %v1938, 6
  %v1977 = vrot.slane %v1940, 6
  %v1978 = vsel %vm571, %v1976, %v1977
  %v1983 = vrot.slane %v1942, 4
  %v1984 = vrot.slane %v1944, 4
  %v1985 = vsel %vm97, %v1983, %v1984
  %v1990 = vrot.slane %v1946, 2
  %v1991 = vrot.slane %v1948, 2
  %v1992 = vsel %vm590, %v1990, %v1991
  %v1995 = vsel %vm571, %v1924, %v1955
  %v1996 = vsel %vm97, %v1957, %v1962
  %v1997 = vsel %vm590, %v1964, %v1969
  %v1998 = vsel %vm571, %v1918, %v1976
  %v1999 = vsel %vm97, %v1978, %v1983
  %v2000 = vsel %vm590, %v1985, %v1990
  %v2001 = vld [vmem:[%s8] sm:$0xff]
  %v2002 = vld [vmem:[%s8 + $0x8] sm:$0xf]
  %v2003 = vld [vmem:[%s9] sm:$0xff]
  %v2004 = vld [vmem:[%s9 + $0x8] sm:$0xf]
  %2006 = vset.pattern.permute.xlu0 0
  %2007 = vperm.xlu0 %2006, %v2003
  %v2008 = vpop.permute.xlu0 %2007
  %2011 = vset.pattern.permute.xlu0 0
  %2012 = vperm.xlu0 %2011, %v2004
  %v2013 = vpop.permute.xlu0 %2012
  %vm2015 = vcmask 736256
  %v2017 = vsel %vm2015, %v2001, 0
  %v2020 = vsel %vm2015, %v2002, 0
  %v2023 = vsel %vm571, %v1952, 0
  %2025 = vmatprep.subr.mxu0 0.0
  %2026 = vmatpush1.msra.mxu0 0.0
  %2027 = vmatprep.subr.mxu0 0.0
  %2028 = vmatpush1.msra.mxu0 0.0
  %2029 = vmatprep.subr.mxu0 0.0
  %2030 = vmatpush1.msra.mxu0 0.0
  %2031 = vmatprep.subr.mxu0 0.0
  %2032 = vmatpush1.msra.mxu0 0.0
  %2033 = vmatprep.subr.mxu0 0.0
  %2034 = vmatpush1.msra.mxu0 %v2023
  %2035 = vmatprep.subr.mxu0 0.0
  %2036 = vmatpush1.msra.mxu0 %v1950
  %2037 = vmatprep.subr.mxu0 0.0
  %2038 = vmatpush1.msra.mxu0 %v1992
  %2039 = vmatprep.subr.mxu0 0.0
  %2040 = vmatpush1.msra.mxu0 %v2000
  %2041 = vmatprep.subr.mxu0 0.0
  %2042 = vmatpush1.msra.mxu0 %v1999
  %2043 = vmatprep.subr.mxu0 0.0
  %2044 = vmatpush1.msra.mxu0 %v1998
  %2045 = vmatprep.subr.mxu0 0.0
  %2046 = vmatpush1.msra.mxu0 %v1913
  %2047 = vmatprep.subr.mxu0 0.0
  %2048 = vmatpush1.msra.mxu0 %v1971
  %2049 = vmatprep.subr.mxu0 0.0
  %2050 = vmatpush1.msra.mxu0 %v1997
  %2051 = vmatprep.subr.mxu0 0.0
  %2052 = vmatpush1.msra.mxu0 %v1996
  %2053 = vmatprep.subr.mxu0 0.0
  %2054 = vmatpush1.msra.mxu0 %v1995
  %2055 = vmatprep.subr.mxu0 0.0
  %2056 = vmatpush1.msra.mxu0 %v1922
  %2057 = vmatprep.subr.mxu0 0.0
  %2058 = vmatpush2.msra.mxu0 0.0
  %2059 = vmatprep.subr.mxu0 0.0
  %2060 = vmatpush2.msra.mxu0 0.0
  %2061 = vmatprep.subr.mxu0 0.0
  %2062 = vmatpush2.msra.mxu0 0.0
  %2063 = vmatprep.subr.mxu0 0.0
  %2064 = vmatpush2.msra.mxu0 0.0
  %2065 = vmatprep.subr.mxu0 0.0
  %2066 = vmatpush2.msra.mxu0 0.0
  %2067 = vmatprep.subr.mxu0 0.0
  %2068 = vmatpush2.msra.mxu0 0.0
  %2069 = vmatprep.subr.mxu0 0.0
  %2070 = vmatpush2.msra.mxu0 0.0
  %2071 = vmatprep.subr.mxu0 0.0
  %2072 = vmatpush2.msra.mxu0 0.0
  %2073 = vmatprep.subr.mxu0 0.0
  %2074 = vmatpush2.msra.mxu0 0.0
  %2075 = vmatprep.subr.mxu0 0.0
  %2076 = vmatpush2.msra.mxu0 0.0
  %2077 = vmatprep.subr.mxu0 0.0
  %2078 = vmatpush2.msra.mxu0 0.0
  %2079 = vmatprep.subr.mxu0 0.0
  %2080 = vmatpush2.msra.mxu0 0.0
  %2081 = vmatprep.subr.mxu0 0.0
  %2082 = vmatpush2.msra.mxu0 0.0
  %2083 = vmatprep.subr.mxu0 0.0
  %2084 = vmatpush2.msra.mxu0 0.0
  %2085 = vmatprep.subr.mxu0 0.0
  %2086 = vmatpush2.msra.mxu0 0.0
  %2087 = vmatprep.subr.mxu0 0.0
  %2088 = vmatpush2.msra.mxu0 0.0
  %2089 = vmatprep.mubr.f32.mxu0 0.0
  %2090 = vmatmul.mubr.f32.gmra.mxu0 %v2017
  %v2091 = vpop.f32.mrf.mxu0
  %v2092 = vadd.f32 %v2008, %v2091
  %v2093 = vpop.f32.mrf.mxu0
  %2094 = vmatprep.mubr.f32.mxu0 0.0
  %2095 = vmatmul.mubr.f32.gmra.mxu0 %v2020
  %v2096 = vpop.f32.mrf.mxu0
  %v2097 = vadd.f32 %v2013, %v2096
  %v2098 = vpop.f32.mrf.mxu0
  %2099 = vdwg.mxu0
  %v2100 = vmax.f32 %v2092, 0.0
  %v2101 = vmax.f32 %v2097, 0.0
  %v2102 = vld [vmem:[%s10] sm:$0xff]
  %v2103 = vld [vmem:[%s10 + $0x8] sm:$0xf]
  %2105 = vset.pattern.permute.xlu0 0
  %2106 = vperm.xlu0 %2105, %v2102
  %v2107 = vpop.permute.xlu0 %2106
  %2110 = vset.pattern.permute.xlu0 0
  %2111 = vperm.xlu0 %2110, %v2103
  %v2112 = vpop.permute.xlu0 %2111
  %v2114 = vmul.f32 %v2100, %v2107
  %v2115 = vmul.f32 %v2101, %v2112
  %v2116 = vld [vmem:[%s11] sm:$0xff]
  %v2117 = vld [vmem:[%s11 + $0x8] sm:$0xf]
  %2119 = vset.pattern.permute.xlu0 0
  %2120 = vperm.xlu0 %2119, %v2116
  %v2121 = vpop.permute.xlu0 %2120
  %2124 = vset.pattern.permute.xlu0 0
  %2125 = vperm.xlu0 %2124, %v2117
  %v2126 = vpop.permute.xlu0 %2125
  %v2128 = vadd.f32 %v2114, %v2121
  %v2129 = vadd.f32 %v2115, %v2126
  %v2130 = vld [vmem:[%s20] sm:$0x1]
  %v2132 = vlaneseq
  %v2133 = vshrl.u32 %v2132, 7
  %v2134 = vsub.s32 0, %v2133
  %v2135 = vrot.slane %v2130, %v2134
  %v2137 = vmul.f32 %v2128, %v2135
  %v2138 = vmul.f32 %v2129, %v2135
  %v2139 = vsel %vm97, %v2138, 0.0
  %v2140 = vadd.f32 %v2137, %v2139
  %v2141 = vrot.slane %v2140, 4
  %v2142 = vadd.f32 %v2140, %v2141
  %v2143 = vrot.slane %v2142, 2
  %v2144 = vadd.f32 %v2142, %v2143
  %v2145 = vrot.slane %v2144, 1
  %v2146 = vadd.f32 %v2144, %v2145
  %v2147 = vrcp.pop 12.0
  %v2148 = vmul.f32 %v2146, %v2147
  %v2149 = vsel %vm97, %v2138, -inf
  %v2150 = vmax.f32 %v2137, %v2149
  %v2151 = vrot.slane %v2150, 4
  %v2152 = vmax.f32 %v2150, %v2151
  %v2153 = vrot.slane %v2152, 2
  %v2154 = vmax.f32 %v2152, %v2153
  %v2155 = vrot.slane %v2154, 1
  %v2156 = vmax.f32 %v2154, %v2155
  %2157 = vrot.lane.b32.xlu0 %v2148, 9
  %v2158 = vpop.permute.xlu0 %2157
  %2159 = vrot.lane.b32.xlu0 %v2148, 8
  %v2160 = vpop.permute.xlu0 %2159
  %2161 = vrot.lane.b32.xlu0 %v2148, 7
  %v2162 = vpop.permute.xlu0 %2161
  %2163 = vrot.lane.b32.xlu0 %v2148, 1
  %v2164 = vpop.permute.xlu0 %2163
  %2165 = vrot.lane.b32.xlu0 %v2148, 127
  %v2166 = vpop.permute.xlu0 %2165
  %2167 = vrot.lane.b32.xlu0 %v2148, 121
  %v2168 = vpop.permute.xlu0 %2167
  %2169 = vrot.lane.b32.xlu0 %v2148, 120
  %v2170 = vpop.permute.xlu0 %2169
  %2171 = vrot.lane.b32.xlu0 %v2148, 119
  %v2172 = vpop.permute.xlu0 %2171
  %2173 = vrot.lane.b32.xlu0 %v2156, 9
  %v2174 = vpop.permute.xlu0 %2173
  %2175 = vrot.lane.b32.xlu0 %v2156, 8
  %v2176 = vpop.permute.xlu0 %2175
  %2177 = vrot.lane.b32.xlu0 %v2156, 7
  %v2178 = vpop.permute.xlu0 %2177
  %2179 = vrot.lane.b32.xlu0 %v2156, 1
  %v2180 = vpop.permute.xlu0 %2179
  %2181 = vrot.lane.b32.xlu0 %v2156, 127
  %v2182 = vpop.permute.xlu0 %2181
  %2183 = vrot.lane.b32.xlu0 %v2156, 121
  %v2184 = vpop.permute.xlu0 %2183
  %2185 = vrot.lane.b32.xlu0 %v2156, 120
  %v2186 = vpop.permute.xlu0 %2185
  %2187 = vrot.lane.b32.xlu0 %v2156, 119
  %v2188 = vpop.permute.xlu0 %2187
  %v2190 = vrot.slane %v2160, 7
  %v2193 = vrot.slane %v2162, 6
  %v2196 = vrot.slane %v2164, 5
  %v2199 = vrot.slane %v2166, 3
  %v2202 = vrot.slane %v2168, 2
  %v2205 = vrot.slane %v2170, 1
  %v2208 = vrot.slane %v2174, 7
  %v2211 = vrot.slane %v2176, 6
  %v2214 = vrot.slane %v2178, 5
  %v2217 = vrot.slane %v2180, 4
  %v2220 = vrot.slane %v2182, 2
  %v2223 = vrot.slane %v2184, 1
  %v2225 = vsel %vm566, %v2158, %v2190
  %v2226 = vsel %vm571, %v2225, %v2193
  %v2227 = vsel %vm576, %v2226, %v2196
  %v2228 = vsel %vm97, %v2227, %v2148
  %v2229 = vsel %vm585, %v2228, %v2199
  %v2230 = vsel %vm590, %v2229, %v2202
  %v2231 = vsel %vm595, %v2230, %v2205
  %v2232 = vsel %vm566, %v2172, %v2208
  %v2233 = vsel %vm571, %v2232, %v2211
  %v2234 = vsel %vm576, %v2233, %v2214
  %v2235 = vsel %vm97, %v2234, %v2217
  %v2236 = vsel %vm585, %v2235, %v2156
  %v2237 = vsel %vm590, %v2236, %v2220
  %v2238 = vsel %vm595, %v2237, %v2223
  %v2240 = vrot.slane %v2188, 7
  %v2242 = vsel %vm566, %v2186, %v2240
  %v2243 = vld [vmem:[%s12] sm:$0x1]
  %v2245 = vsel %vm1437, %v2243, 0
  %v2248 = vsel %vm571, %v2242, 0
  %2250 = vmatprep.subr.mxu0 0.0
  %2251 = vmatpush1.msra.mxu0 0.0
  %2252 = vmatprep.subr.mxu0 0.0
  %2253 = vmatpush1.msra.mxu0 0.0
  %2254 = vmatprep.subr.mxu0 0.0
  %2255 = vmatpush1.msra.mxu0 0.0
  %2256 = vmatprep.subr.mxu0 0.0
  %2257 = vmatpush1.msra.mxu0 0.0
  %2258 = vmatprep.subr.mxu0 0.0
  %2259 = vmatpush1.msra.mxu0 0.0
  %2260 = vmatprep.subr.mxu0 0.0
  %2261 = vmatpush1.msra.mxu0 0.0
  %2262 = vmatprep.subr.mxu0 0.0
  %2263 = vmatpush1.msra.mxu0 0.0
  %2264 = vmatprep.subr.mxu0 0.0
  %2265 = vmatpush1.msra.mxu0 0.0
  %2266 = vmatprep.subr.mxu0 0.0
  %2267 = vmatpush1.msra.mxu0 0.0
  %2268 = vmatprep.subr.mxu0 0.0
  %2269 = vmatpush1.msra.mxu0 0.0
  %2270 = vmatprep.subr.mxu0 0.0
  %2271 = vmatpush1.msra.mxu0 0.0
  %2272 = vmatprep.subr.mxu0 0.0
  %2273 = vmatpush1.msra.mxu0 0.0
  %2274 = vmatprep.subr.mxu0 0.0
  %2275 = vmatpush1.msra.mxu0 0.0
  %2276 = vmatprep.subr.mxu0 0.0
  %2277 = vmatpush1.msra.mxu0 %v2248
  %2278 = vmatprep.subr.mxu0 0.0
  %2279 = vmatpush1.msra.mxu0 %v2238
  %2280 = vmatprep.subr.mxu0 0.0
  %2281 = vmatpush1.msra.mxu0 %v2231
  %2282 = vmatprep.subr.mxu0 0.0
  %2283 = vmatpush2.msra.mxu0 0.0
  %2284 = vmatprep.subr.mxu0 0.0
  %2285 = vmatpush2.msra.mxu0 0.0
  %2286 = vmatprep.subr.mxu0 0.0
  %2287 = vmatpush2.msra.mxu0 0.0
  %2288 = vmatprep.subr.mxu0 0.0
  %2289 = vmatpush2.msra.mxu0 0.0
  %2290 = vmatprep.subr.mxu0 0.0
  %2291 = vmatpush2.msra.mxu0 0.0
  %2292 = vmatprep.subr.mxu0 0.0
  %2293 = vmatpush2.msra.mxu0 0.0
  %2294 = vmatprep.subr.mxu0 0.0
  %2295 = vmatpush2.msra.mxu0 0.0
  %2296 = vmatprep.subr.mxu0 0.0
  %2297 = vmatpush2.msra.mxu0 0.0
  %2298 = vmatprep.subr.mxu0 0.0
  %2299 = vmatpush2.msra.mxu0 0.0
  %2300 = vmatprep.subr.mxu0 0.0
  %2301 = vmatpush2.msra.mxu0 0.0
  %2302 = vmatprep.subr.mxu0 0.0
  %2303 = vmatpush2.msra.mxu0 0.0
  %2304 = vmatprep.subr.mxu0 0.0
  %2305 = vmatpush2.msra.mxu0 0.0
  %2306 = vmatprep.subr.mxu0 0.0
  %2307 = vmatpush2.msra.mxu0 0.0
  %2308 = vmatprep.subr.mxu0 0.0
  %2309 = vmatpush2.msra.mxu0 0.0
  %2310 = vmatprep.subr.mxu0 0.0
  %2311 = vmatpush2.msra.mxu0 0.0
  %2312 = vmatprep.subr.mxu0 0.0
  %2313 = vmatpush2.msra.mxu0 0.0
  %2314 = vmatprep.mubr.f32.mxu0 0.0
  %2315 = vmatmul.mubr.f32.gmra.mxu0 %v2245
  %v2316 = vpop.f32.mrf.mxu0
  %v2317 = vadd.f32 0.0, %v2316
  %v2318 = vpop.f32.mrf.mxu0
  %2319 = vdwg.mxu0
  %v2320 = vsub.f32 0.0, %v2317
  %v2321 = vmul.f32 %v2320, 1.442695
  %v2322 = vpow.pop %v2321
  %v2323 = vadd.f32 %v2322, 1.0
  %v2324 = vrcp.pop %v2323
  %v2325 = vmul.f32 1.0, %v2324
  %v2326 = vlaneseq
  %v2327 = vshrl.u32 %v2326, 7
  %v2328 = vsub.s32 0, %v2327
  %v2329 = vrot.slane %v2325, %v2328
  %v2330 = vmul.f32 %v2137, %v2329
  %v2331 = vmul.f32 %v2138, %v2329
  %2332 = vrot.lane.b32.xlu0 %v2330, 127
  %v2333 = vpop.permute.xlu0 %2332
  %2334 = vrot.lane.b32.xlu0 %v2331, 127
  %v2335 = vpop.permute.xlu0 %2334
  %v2336 = vmax.f32 %v2330, %v2333
  %v2337 = vmax.f32 %v2331, %v2335
  %2338 = vrot.lane.b32.xlu0 %v2336, 120
  %v2339 = vpop.permute.xlu0 %2338
  %2340 = vrot.lane.b32.xlu0 %v2337, 120
  %v2341 = vpop.permute.xlu0 %2340
  %v2342 = vmax.f32 %v2336, %v2339
  %v2343 = vmax.f32 %v2337, %v2341
  %v2344 = vld [vmem:[%s22] sm:$0xff]
  %v2345 = vld [vmem:[%s22 + $0x8] sm:$0xff]
  %v2346 = vld [vmem:[%s22 + $0x10] sm:$0xff]
  %v2347 = vld [vmem:[%s22 + $0x18] sm:$0xff]
  %v2348 = vld [vmem:[%s22 + $0x20] sm:$0xff]
  %v2349 = vld [vmem:[%s22 + $0x28] sm:$0xff]
  %v2350 = vld [vmem:[%s22 + $0x30] sm:$0xff]
  %v2351 = vld [vmem:[%s22 + $0x38] sm:$0xff]
  %v2352 = vld [vmem:[%s22 + $0x40] sm:$0xff]
  %v2353 = vld [vmem:[%s22 + $0x48] sm:$0xff]
  %v2354 = vld [vmem:[%s22 + $0x50] sm:$0xff]
  %v2355 = vld [vmem:[%s22 + $0x58] sm:$0xff]
  %v2356 = vld [vmem:[%s22 + $0x60] sm:$0xff]
  %v2357 = vld [vmem:[%s22 + $0x68] sm:$0xff]
  %v2358 = vld [vmem:[%s22 + $0x70] sm:$0xff]
  %v2359 = vld [vmem:[%s22 + $0x78] sm:$0xff]
  %2360 = vmatprep.subr.mxu0 0.0
  %2361 = vmatpush1.msra.mxu0 %v2359
  %2362 = vmatprep.subr.mxu0 0.0
  %2363 = vmatpush1.msra.mxu0 %v2358
  %2364 = vmatprep.subr.mxu0 0.0
  %2365 = vmatpush1.msra.mxu0 %v2357
  %2366 = vmatprep.subr.mxu0 0.0
  %2367 = vmatpush1.msra.mxu0 %v2356
  %2368 = vmatprep.subr.mxu0 0.0
  %2369 = vmatpush1.msra.mxu0 %v2355
  %2370 = vmatprep.subr.mxu0 0.0
  %2371 = vmatpush1.msra.mxu0 %v2354
  %2372 = vmatprep.subr.mxu0 0.0
  %2373 = vmatpush1.msra.mxu0 %v2353
  %2374 = vmatprep.subr.mxu0 0.0
  %2375 = vmatpush1.msra.mxu0 %v2352
  %2376 = vmatprep.subr.mxu0 0.0
  %2377 = vmatpush1.msra.mxu0 %v2351
  %2378 = vmatprep.subr.mxu0 0.0
  %2379 = vmatpush1.msra.mxu0 %v2350
  %2380 = vmatprep.subr.mxu0 0.0
  %2381 = vmatpush1.msra.mxu0 %v2349
  %2382 = vmatprep.subr.mxu0 0.0
  %2383 = vmatpush1.msra.mxu0 %v2348
  %2384 = vmatprep.subr.mxu0 0.0
  %2385 = vmatpush1.msra.mxu0 %v2347
  %2386 = vmatprep.subr.mxu0 0.0
  %2387 = vmatpush1.msra.mxu0 %v2346
  %2388 = vmatprep.subr.mxu0 0.0
  %2389 = vmatpush1.msra.mxu0 %v2345
  %2390 = vmatprep.subr.mxu0 0.0
  %2391 = vmatpush1.msra.mxu0 %v2344
  %2392 = vmatprep.subr.mxu0 0.0
  %2393 = vmatpush2.msra.mxu0 0.0
  %2394 = vmatprep.subr.mxu0 0.0
  %2395 = vmatpush2.msra.mxu0 0.0
  %2396 = vmatprep.subr.mxu0 0.0
  %2397 = vmatpush2.msra.mxu0 0.0
  %2398 = vmatprep.subr.mxu0 0.0
  %2399 = vmatpush2.msra.mxu0 0.0
  %2400 = vmatprep.subr.mxu0 0.0
  %2401 = vmatpush2.msra.mxu0 0.0
  %2402 = vmatprep.subr.mxu0 0.0
  %2403 = vmatpush2.msra.mxu0 0.0
  %2404 = vmatprep.subr.mxu0 0.0
  %2405 = vmatpush2.msra.mxu0 0.0
  %2406 = vmatprep.subr.mxu0 0.0
  %2407 = vmatpush2.msra.mxu0 0.0
  %2408 = vmatprep.subr.mxu0 0.0
  %2409 = vmatpush2.msra.mxu0 0.0
  %2410 = vmatprep.subr.mxu0 0.0
  %2411 = vmatpush2.msra.mxu0 0.0
  %2412 = vmatprep.subr.mxu0 0.0
  %2413 = vmatpush2.msra.mxu0 0.0
  %2414 = vmatprep.subr.mxu0 0.0
  %2415 = vmatpush2.msra.mxu0 0.0
  %2416 = vmatprep.subr.mxu0 0.0
  %2417 = vmatpush2.msra.mxu0 0.0
  %2418 = vmatprep.subr.mxu0 0.0
  %2419 = vmatpush2.msra.mxu0 0.0
  %2420 = vmatprep.subr.mxu0 0.0
  %2421 = vmatpush2.msra.mxu0 0.0
  %2422 = vmatprep.subr.mxu0 0.0
  %2423 = vmatpush2.msra.mxu0 0.0
  %2424 = vmatprep.mubr.f32.mxu0 0.0
  %2425 = vmatmul.mubr.f32.gmra.mxu0 %v2342
  %v2426 = vpop.f32.mrf.mxu0
  %v2427 = vadd.f32 0.0, %v2426
  %v2428 = vpop.f32.mrf.mxu0
  %2429 = vmatprep.mubr.f32.mxu0 0.0
  %2430 = vmatmul.mubr.f32.gmra.mxu0 %v2343
  %v2431 = vpop.f32.mrf.mxu0
  %v2432 = vadd.f32 0.0, %v2431
  %v2433 = vpop.f32.mrf.mxu0
  %2434 = vdwg.mxu0
  %v2437 = vrot.slane %v2427, 4
  %v2438 = vrot.slane %v2432, 4
  %v2439 = vsel %vm97, %v2437, %v2438
  %2440 = vrot.lane.b32.xlu0 %v2437, 126
  %v2441 = vpop.permute.xlu0 %2440
  %2442 = vrot.lane.b32.xlu0 %v2439, 126
  %v2443 = vpop.permute.xlu0 %2442
  %2446 = vrot.lane.b32.xlu0 %v2427, 124
  %v2447 = vpop.permute.xlu0 %2446
  %2448 = vrot.lane.b32.xlu0 %v2432, 124
  %v2449 = vpop.permute.xlu0 %2448
  %2452 = vrot.lane.b32.xlu0 %v2437, 122
  %v2453 = vpop.permute.xlu0 %2452
  %2454 = vrot.lane.b32.xlu0 %v2439, 122
  %v2455 = vpop.permute.xlu0 %2454
  %2458 = vrot.lane.b32.xlu0 %v2427, 120
  %v2459 = vpop.permute.xlu0 %2458
  %2460 = vrot.lane.b32.xlu0 %v2432, 120
  %v2461 = vpop.permute.xlu0 %2460
  %2464 = vrot.lane.b32.xlu0 %v2437, 118
  %v2465 = vpop.permute.xlu0 %2464
  %2466 = vrot.lane.b32.xlu0 %v2439, 118
  %v2467 = vpop.permute.xlu0 %2466
  %2470 = vrot.lane.b32.xlu0 %v2427, 116
  %v2471 = vpop.permute.xlu0 %2470
  %2472 = vrot.lane.b32.xlu0 %v2432, 116
  %v2473 = vpop.permute.xlu0 %2472
  %2476 = vrot.lane.b32.xlu0 %v2437, 114
  %v2477 = vpop.permute.xlu0 %2476
  %2478 = vrot.lane.b32.xlu0 %v2439, 114
  %v2479 = vpop.permute.xlu0 %2478
  %2482 = vrot.lane.b32.xlu0 %v2427, 112
  %v2483 = vpop.permute.xlu0 %2482
  %2484 = vrot.lane.b32.xlu0 %v2432, 112
  %v2485 = vpop.permute.xlu0 %2484
  %v2487 = vsel %vm97, %v2432, %v2441
  %v2488 = vsel %vm97, %v2449, %v2453
  %v2489 = vsel %vm97, %v2461, %v2465
  %v2490 = vsel %vm97, %v2473, %v2477
  %v2491 = vld [vmem:[%s13] sm:$0xff]
  %v2492 = vld [vmem:[%s13 + $0x8] sm:$0xff]
  %v2493 = vld [vmem:[%s13 + $0x10] sm:$0xff]
  %v2494 = vld [vmem:[%s13 + $0x18] sm:$0xff]
  %v2495 = vld [vmem:[%s13 + $0x20] sm:$0xff]
  %v2496 = vld [vmem:[%s13 + $0x28] sm:$0xff]
  %v2497 = vld [vmem:[%s13 + $0x30] sm:$0xff]
  %v2498 = vld [vmem:[%s13 + $0x38] sm:$0xff]
  %v2499 = vld [vmem:[%s13 + $0x40] sm:$0xff]
  %v2500 = vld [vmem:[%s13 + $0x48] sm:$0xff]
  %v2501 = vld [vmem:[%s13 + $0x50] sm:$0xff]
  %v2502 = vld [vmem:[%s13 + $0x58] sm:$0xff]
  %v2503 = vld [vmem:[%s13 + $0x60] sm:$0xff]
  %v2504 = vld [vmem:[%s13 + $0x68] sm:$0xff]
  %v2505 = vld [vmem:[%s13 + $0x70] sm:$0xff]
  %v2506 = vld [vmem:[%s13 + $0x78] sm:$0xff]
  %v2507 = vld [vmem:[%s13 + $0x80] sm:$0xff]
  %v2508 = vld [vmem:[%s13 + $0x88] sm:$0xff]
  %v2509 = vld [vmem:[%s13 + $0x90] sm:$0xff]
  %v2510 = vld [vmem:[%s13 + $0x98] sm:$0xff]
  %v2511 = vld [vmem:[%s13 + $0xa0] sm:$0xff]
  %v2512 = vld [vmem:[%s13 + $0xa8] sm:$0xff]
  %v2513 = vld [vmem:[%s13 + $0xb0] sm:$0xff]
  %v2514 = vld [vmem:[%s13 + $0xb8] sm:$0xff]
  %v2515 = vld [vmem:[%s13 + $0xc0] sm:$0xff]
  %v2516 = vld [vmem:[%s13 + $0xc8] sm:$0xff]
  %v2517 = vld [vmem:[%s13 + $0xd0] sm:$0xff]
  %v2518 = vld [vmem:[%s13 + $0xd8] sm:$0xff]
  %v2519 = vld [vmem:[%s13 + $0xe0] sm:$0xff]
  %v2520 = vld [vmem:[%s13 + $0xe8] sm:$0xff]
  %v2521 = vld [vmem:[%s13 + $0xf0] sm:$0xff]
  %v2522 = vld [vmem:[%s13 + $0xf8] sm:$0xff]
  %v2523 = vld [vmem:[%s13 + $0x100] sm:$0xff]
  %v2524 = vld [vmem:[%s13 + $0x108] sm:$0xff]
  %v2525 = vld [vmem:[%s13 + $0x110] sm:$0xff]
  %v2526 = vld [vmem:[%s13 + $0x118] sm:$0xff]
  %v2527 = vld [vmem:[%s13 + $0x120] sm:$0xff]
  %v2528 = vld [vmem:[%s13 + $0x128] sm:$0xff]
  %v2529 = vld [vmem:[%s13 + $0x130] sm:$0xff]
  %v2530 = vld [vmem:[%s13 + $0x138] sm:$0xff]
  %v2531 = vld [vmem:[%s13 + $0x140] sm:$0xff]
  %v2532 = vld [vmem:[%s13 + $0x148] sm:$0xff]
  %v2533 = vld [vmem:[%s13 + $0x150] sm:$0xff]
  %v2534 = vld [vmem:[%s13 + $0x158] sm:$0xff]
  %v2535 = vld [vmem:[%s13 + $0x160] sm:$0xff]
  %v2536 = vld [vmem:[%s13 + $0x168] sm:$0xff]
  %v2537 = vld [vmem:[%s13 + $0x170] sm:$0xff]
  %v2538 = vld [vmem:[%s13 + $0x178] sm:$0xff]
  %v2539 = vld [vmem:[%s13 + $0x180] sm:$0xff]
  %v2540 = vld [vmem:[%s13 + $0x188] sm:$0xff]
  %v2541 = vld [vmem:[%s13 + $0x190] sm:$0xff]
  %v2542 = vld [vmem:[%s13 + $0x198] sm:$0xff]
  %v2543 = vld [vmem:[%s13 + $0x1a0] sm:$0xf]
  %v2544 = vld [vmem:[%s14] sm:$0xff]
  %v2545 = vld [vmem:[%s14 + $0x8] sm:$0xff]
  %v2546 = vld [vmem:[%s14 + $0x10] sm:$0xff]
  %v2547 = vld [vmem:[%s14 + $0x18] sm:$0xff]
  %v2548 = vld [vmem:[%s14 + $0x20] sm:$0xff]
  %v2549 = vld [vmem:[%s14 + $0x28] sm:$0xff]
  %v2550 = vld [vmem:[%s14 + $0x30] sm:$0xff]
  %v2551 = vld [vmem:[%s14 + $0x38] sm:$0xff]
  %v2552 = vld [vmem:[%s14 + $0x40] sm:$0xff]
  %v2553 = vld [vmem:[%s14 + $0x48] sm:$0xff]
  %v2554 = vld [vmem:[%s14 + $0x50] sm:$0xff]
  %v2555 = vld [vmem:[%s14 + $0x58] sm:$0xff]
  %v2556 = vld [vmem:[%s14 + $0x60] sm:$0xff]
  %v2557 = vld [vmem:[%s14 + $0x68] sm:$0xff]
  %v2558 = vld [vmem:[%s14 + $0x70] sm:$0xff]
  %v2559 = vld [vmem:[%s14 + $0x78] sm:$0xff]
  %v2560 = vld [vmem:[%s14 + $0x80] sm:$0xff]
  %v2561 = vld [vmem:[%s14 + $0x88] sm:$0xff]
  %v2562 = vld [vmem:[%s14 + $0x90] sm:$0xff]
  %v2563 = vld [vmem:[%s14 + $0x98] sm:$0xff]
  %v2564 = vld [vmem:[%s14 + $0xa0] sm:$0xff]
  %v2565 = vld [vmem:[%s14 + $0xa8] sm:$0xff]
  %v2566 = vld [vmem:[%s14 + $0xb0] sm:$0xff]
  %v2567 = vld [vmem:[%s14 + $0xb8] sm:$0xff]
  %v2568 = vld [vmem:[%s14 + $0xc0] sm:$0xff]
  %v2569 = vld [vmem:[%s14 + $0xc8] sm:$0xff]
  %v2570 = vld [vmem:[%s14 + $0xd0] sm:$0xff]
  %v2571 = vld [vmem:[%s14 + $0xd8] sm:$0xff]
  %v2572 = vld [vmem:[%s14 + $0xe0] sm:$0xff]
  %v2573 = vld [vmem:[%s14 + $0xe8] sm:$0xff]
  %v2574 = vld [vmem:[%s14 + $0xf0] sm:$0xff]
  %v2575 = vld [vmem:[%s14 + $0xf8] sm:$0xff]
  %v2576 = vld [vmem:[%s14 + $0x100] sm:$0xff]
  %v2577 = vld [vmem:[%s14 + $0x108] sm:$0xff]
  %v2578 = vld [vmem:[%s14 + $0x110] sm:$0xff]
  %v2579 = vld [vmem:[%s14 + $0x118] sm:$0xff]
  %v2580 = vld [vmem:[%s14 + $0x120] sm:$0xff]
  %v2581 = vld [vmem:[%s14 + $0x128] sm:$0xff]
  %v2582 = vld [vmem:[%s14 + $0x130] sm:$0xff]
  %v2583 = vld [vmem:[%s14 + $0x138] sm:$0xff]
  %v2584 = vld [vmem:[%s14 + $0x140] sm:$0xff]
  %v2585 = vld [vmem:[%s14 + $0x148] sm:$0xff]
  %v2586 = vld [vmem:[%s14 + $0x150] sm:$0xff]
  %v2587 = vld [vmem:[%s14 + $0x158] sm:$0xff]
  %v2588 = vld [vmem:[%s14 + $0x160] sm:$0xff]
  %v2589 = vld [vmem:[%s14 + $0x168] sm:$0xff]
  %v2590 = vld [vmem:[%s14 + $0x170] sm:$0xff]
  %v2591 = vld [vmem:[%s14 + $0x178] sm:$0xff]
  %v2592 = vld [vmem:[%s14 + $0x180] sm:$0xff]
  %v2593 = vld [vmem:[%s14 + $0x188] sm:$0xff]
  %v2594 = vld [vmem:[%s14 + $0x190] sm:$0xff]
  %v2595 = vld [vmem:[%s14 + $0x198] sm:$0xff]
  %v2596 = vld [vmem:[%s14 + $0x1a0] sm:$0xf]
  %2598 = vset.pattern.permute.xlu0 0
  %2599 = vperm.xlu0 %2598, %v2544
  %v2600 = vpop.permute.xlu0 %2599
  %2603 = vset.pattern.permute.xlu0 0
  %2604 = vperm.xlu0 %2603, %v2545
  %v2605 = vpop.permute.xlu0 %2604
  %2608 = vset.pattern.permute.xlu0 0
  %2609 = vperm.xlu0 %2608, %v2546
  %v2610 = vpop.permute.xlu0 %2609
  %2613 = vset.pattern.permute.xlu0 0
  %2614 = vperm.xlu0 %2613, %v2547
  %v2615 = vpop.permute.xlu0 %2614
  %2618 = vset.pattern.permute.xlu0 0
  %2619 = vperm.xlu0 %2618, %v2548
  %v2620 = vpop.permute.xlu0 %2619
  %2623 = vset.pattern.permute.xlu0 0
  %2624 = vperm.xlu0 %2623, %v2549
  %v2625 = vpop.permute.xlu0 %2624
  %2628 = vset.pattern.permute.xlu0 0
  %2629 = vperm.xlu0 %2628, %v2550
  %v2630 = vpop.permute.xlu0 %2629
  %2633 = vset.pattern.permute.xlu0 0
  %2634 = vperm.xlu0 %2633, %v2551
  %v2635 = vpop.permute.xlu0 %2634
  %2638 = vset.pattern.permute.xlu0 0
  %2639 = vperm.xlu0 %2638, %v2552
  %v2640 = vpop.permute.xlu0 %2639
  %2643 = vset.pattern.permute.xlu0 0
  %2644 = vperm.xlu0 %2643, %v2553
  %v2645 = vpop.permute.xlu0 %2644
  %2648 = vset.pattern.permute.xlu0 0
  %2649 = vperm.xlu0 %2648, %v2554
  %v2650 = vpop.permute.xlu0 %2649
  %2653 = vset.pattern.permute.xlu0 0
  %2654 = vperm.xlu0 %2653, %v2555
  %v2655 = vpop.permute.xlu0 %2654
  %2658 = vset.pattern.permute.xlu0 0
  %2659 = vperm.xlu0 %2658, %v2556
  %v2660 = vpop.permute.xlu0 %2659
  %2663 = vset.pattern.permute.xlu0 0
  %2664 = vperm.xlu0 %2663, %v2557
  %v2665 = vpop.permute.xlu0 %2664
  %2668 = vset.pattern.permute.xlu0 0
  %2669 = vperm.xlu0 %2668, %v2558
  %v2670 = vpop.permute.xlu0 %2669
  %2673 = vset.pattern.permute.xlu0 0
  %2674 = vperm.xlu0 %2673, %v2559
  %v2675 = vpop.permute.xlu0 %2674
  %2678 = vset.pattern.permute.xlu0 0
  %2679 = vperm.xlu0 %2678, %v2560
  %v2680 = vpop.permute.xlu0 %2679
  %2683 = vset.pattern.permute.xlu0 0
  %2684 = vperm.xlu0 %2683, %v2561
  %v2685 = vpop.permute.xlu0 %2684
  %2688 = vset.pattern.permute.xlu0 0
  %2689 = vperm.xlu0 %2688, %v2562
  %v2690 = vpop.permute.xlu0 %2689
  %2693 = vset.pattern.permute.xlu0 0
  %2694 = vperm.xlu0 %2693, %v2563
  %v2695 = vpop.permute.xlu0 %2694
  %2698 = vset.pattern.permute.xlu0 0
  %2699 = vperm.xlu0 %2698, %v2564
  %v2700 = vpop.permute.xlu0 %2699
  %2703 = vset.pattern.permute.xlu0 0
  %2704 = vperm.xlu0 %2703, %v2565
  %v2705 = vpop.permute.xlu0 %2704
  %2708 = vset.pattern.permute.xlu0 0
  %2709 = vperm.xlu0 %2708, %v2566
  %v2710 = vpop.permute.xlu0 %2709
  %2713 = vset.pattern.permute.xlu0 0
  %2714 = vperm.xlu0 %2713, %v2567
  %v2715 = vpop.permute.xlu0 %2714
  %2718 = vset.pattern.permute.xlu0 0
  %2719 = vperm.xlu0 %2718, %v2568
  %v2720 = vpop.permute.xlu0 %2719
  %2723 = vset.pattern.permute.xlu0 0
  %2724 = vperm.xlu0 %2723, %v2569
  %v2725 = vpop.permute.xlu0 %2724
  %2728 = vset.pattern.permute.xlu0 0
  %2729 = vperm.xlu0 %2728, %v2570
  %v2730 = vpop.permute.xlu0 %2729
  %2733 = vset.pattern.permute.xlu0 0
  %2734 = vperm.xlu0 %2733, %v2571
  %v2735 = vpop.permute.xlu0 %2734
  %2738 = vset.pattern.permute.xlu0 0
  %2739 = vperm.xlu0 %2738, %v2572
  %v2740 = vpop.permute.xlu0 %2739
  %2743 = vset.pattern.permute.xlu0 0
  %2744 = vperm.xlu0 %2743, %v2573
  %v2745 = vpop.permute.xlu0 %2744
  %2748 = vset.pattern.permute.xlu0 0
  %2749 = vperm.xlu0 %2748, %v2574
  %v2750 = vpop.permute.xlu0 %2749
  %2753 = vset.pattern.permute.xlu0 0
  %2754 = vperm.xlu0 %2753, %v2575
  %v2755 = vpop.permute.xlu0 %2754
  %2758 = vset.pattern.permute.xlu0 0
  %2759 = vperm.xlu0 %2758, %v2576
  %v2760 = vpop.permute.xlu0 %2759
  %2763 = vset.pattern.permute.xlu0 0
  %2764 = vperm.xlu0 %2763, %v2577
  %v2765 = vpop.permute.xlu0 %2764
  %2768 = vset.pattern.permute.xlu0 0
  %2769 = vperm.xlu0 %2768, %v2578
  %v2770 = vpop.permute.xlu0 %2769
  %2773 = vset.pattern.permute.xlu0 0
  %2774 = vperm.xlu0 %2773, %v2579
  %v2775 = vpop.permute.xlu0 %2774
  %2778 = vset.pattern.permute.xlu0 0
  %2779 = vperm.xlu0 %2778, %v2580
  %v2780 = vpop.permute.xlu0 %2779
  %2783 = vset.pattern.permute.xlu0 0
  %2784 = vperm.xlu0 %2783, %v2581
  %v2785 = vpop.permute.xlu0 %2784
  %2788 = vset.pattern.permute.xlu0 0
  %2789 = vperm.xlu0 %2788, %v2582
  %v2790 = vpop.permute.xlu0 %2789
  %2793 = vset.pattern.permute.xlu0 0
  %2794 = vperm.xlu0 %2793, %v2583
  %v2795 = vpop.permute.xlu0 %2794
  %2798 = vset.pattern.permute.xlu0 0
  %2799 = vperm.xlu0 %2798, %v2584
  %v2800 = vpop.permute.xlu0 %2799
  %2803 = vset.pattern.permute.xlu0 0
  %2804 = vperm.xlu0 %2803, %v2585
  %v2805 = vpop.permute.xlu0 %2804
  %2808 = vset.pattern.permute.xlu0 0
  %2809 = vperm.xlu0 %2808, %v2586
  %v2810 = vpop.permute.xlu0 %2809
  %2813 = vset.pattern.permute.xlu0 0
  %2814 = vperm.xlu0 %2813, %v2587
  %v2815 = vpop.permute.xlu0 %2814
  %2818 = vset.pattern.permute.xlu0 0
  %2819 = vperm.xlu0 %2818, %v2588
  %v2820 = vpop.permute.xlu0 %2819
  %2823 = vset.pattern.permute.xlu0 0
  %2824 = vperm.xlu0 %2823, %v2589
  %v2825 = vpop.permute.xlu0 %2824
  %2828 = vset.pattern.permute.xlu0 0
  %2829 = vperm.xlu0 %2828, %v2590
  %v2830 = vpop.permute.xlu0 %2829
  %2833 = vset.pattern.permute.xlu0 0
  %2834 = vperm.xlu0 %2833, %v2591
  %v2835 = vpop.permute.xlu0 %2834
  %2838 = vset.pattern.permute.xlu0 0
  %2839 = vperm.xlu0 %2838, %v2592
  %v2840 = vpop.permute.xlu0 %2839
  %2843 = vset.pattern.permute.xlu0 0
  %2844 = vperm.xlu0 %2843, %v2593
  %v2845 = vpop.permute.xlu0 %2844
  %2848 = vset.pattern.permute.xlu0 0
  %2849 = vperm.xlu0 %2848, %v2594
  %v2850 = vpop.permute.xlu0 %2849
  %2853 = vset.pattern.permute.xlu0 0
  %2854 = vperm.xlu0 %2853, %v2595
  %v2855 = vpop.permute.xlu0 %2854
  %2858 = vset.pattern.permute.xlu0 0
  %2859 = vperm.xlu0 %2858, %v2596
  %v2860 = vpop.permute.xlu0 %2859
  %vm2862 = vcmask 883712
  %v2864 = vsel %vm2862, %v2491, 0
  %v2867 = vsel %vm2862, %v2492, 0
  %v2870 = vsel %vm2862, %v2493, 0
  %v2873 = vsel %vm2862, %v2494, 0
  %v2876 = vsel %vm2862, %v2495, 0
  %v2879 = vsel %vm2862, %v2496, 0
  %v2882 = vsel %vm2862, %v2497, 0
  %v2885 = vsel %vm2862, %v2498, 0
  %v2888 = vsel %vm2862, %v2499, 0
  %v2891 = vsel %vm2862, %v2500, 0
  %v2894 = vsel %vm2862, %v2501, 0
  %v2897 = vsel %vm2862, %v2502, 0
  %v2900 = vsel %vm2862, %v2503, 0
  %v2903 = vsel %vm2862, %v2504, 0
  %v2906 = vsel %vm2862, %v2505, 0
  %v2909 = vsel %vm2862, %v2506, 0
  %v2912 = vsel %vm2862, %v2507, 0
  %v2915 = vsel %vm2862, %v2508, 0
  %v2918 = vsel %vm2862, %v2509, 0
  %v2921 = vsel %vm2862, %v2510, 0
  %v2924 = vsel %vm2862, %v2511, 0
  %v2927 = vsel %vm2862, %v2512, 0
  %v2930 = vsel %vm2862, %v2513, 0
  %v2933 = vsel %vm2862, %v2514, 0
  %v2936 = vsel %vm2862, %v2515, 0
  %v2939 = vsel %vm2862, %v2516, 0
  %v2942 = vsel %vm2862, %v2517, 0
  %v2945 = vsel %vm2862, %v2518, 0
  %v2948 = vsel %vm2862, %v2519, 0
  %v2951 = vsel %vm2862, %v2520, 0
  %v2954 = vsel %vm2862, %v2521, 0
  %v2957 = vsel %vm2862, %v2522, 0
  %v2960 = vsel %vm2862, %v2523, 0
  %v2963 = vsel %vm2862, %v2524, 0
  %v2966 = vsel %vm2862, %v2525, 0
  %v2969 = vsel %vm2862, %v2526, 0
  %v2972 = vsel %vm2862, %v2527, 0
  %v2975 = vsel %vm2862, %v2528, 0
  %v2978 = vsel %vm2862, %v2529, 0
  %v2981 = vsel %vm2862, %v2530, 0
  %v2984 = vsel %vm2862, %v2531, 0
  %v2987 = vsel %vm2862, %v2532, 0
  %v2990 = vsel %vm2862, %v2533, 0
  %v2993 = vsel %vm2862, %v2534, 0
  %v2996 = vsel %vm2862, %v2535, 0
  %v2999 = vsel %vm2862, %v2536, 0
  %v3002 = vsel %vm2862, %v2537, 0
  %v3005 = vsel %vm2862, %v2538, 0
  %v3008 = vsel %vm2862, %v2539, 0
  %v3011 = vsel %vm2862, %v2540, 0
  %v3014 = vsel %vm2862, %v2541, 0
  %v3017 = vsel %vm2862, %v2542, 0
  %v3020 = vsel %vm2862, %v2543, 0
  %v3022 = vsel %vm97, %v2485, 0
  %3024 = vmatprep.subr.mxu0 0.0
  %3025 = vmatpush1.msra.mxu0 0.0
  %3026 = vmatprep.subr.mxu0 0.0
  %3027 = vmatpush1.msra.mxu0 0.0
  %3028 = vmatprep.subr.mxu0 0.0
  %3029 = vmatpush1.msra.mxu0 %v3022
  %3030 = vmatprep.subr.mxu0 0.0
  %3031 = vmatpush1.msra.mxu0 %v2483
  %3032 = vmatprep.subr.mxu0 0.0
  %3033 = vmatpush1.msra.mxu0 %v2479
  %3034 = vmatprep.subr.mxu0 0.0
  %3035 = vmatpush1.msra.mxu0 %v2490
  %3036 = vmatprep.subr.mxu0 0.0
  %3037 = vmatpush1.msra.mxu0 %v2471
  %3038 = vmatprep.subr.mxu0 0.0
  %3039 = vmatpush1.msra.mxu0 %v2467
  %3040 = vmatprep.subr.mxu0 0.0
  %3041 = vmatpush1.msra.mxu0 %v2489
  %3042 = vmatprep.subr.mxu0 0.0
  %3043 = vmatpush1.msra.mxu0 %v2459
  %3044 = vmatprep.subr.mxu0 0.0
  %3045 = vmatpush1.msra.mxu0 %v2455
  %3046 = vmatprep.subr.mxu0 0.0
  %3047 = vmatpush1.msra.mxu0 %v2488
  %3048 = vmatprep.subr.mxu0 0.0
  %3049 = vmatpush1.msra.mxu0 %v2447
  %3050 = vmatprep.subr.mxu0 0.0
  %3051 = vmatpush1.msra.mxu0 %v2443
  %3052 = vmatprep.subr.mxu0 0.0
  %3053 = vmatpush1.msra.mxu0 %v2487
  %3054 = vmatprep.subr.mxu0 0.0
  %3055 = vmatpush1.msra.mxu0 %v2427
  %3056 = vmatprep.subr.mxu0 0.0
  %3057 = vmatpush2.msra.mxu0 0.0
  %3058 = vmatprep.subr.mxu0 0.0
  %3059 = vmatpush2.msra.mxu0 0.0
  %3060 = vmatprep.subr.mxu0 0.0
  %3061 = vmatpush2.msra.mxu0 0.0
  %3062 = vmatprep.subr.mxu0 0.0
  %3063 = vmatpush2.msra.mxu0 0.0
  %3064 = vmatprep.subr.mxu0 0.0
  %3065 = vmatpush2.msra.mxu0 0.0
  %3066 = vmatprep.subr.mxu0 0.0
  %3067 = vmatpush2.msra.mxu0 0.0
  %3068 = vmatprep.subr.mxu0 0.0
  %3069 = vmatpush2.msra.mxu0 0.0
  %3070 = vmatprep.subr.mxu0 0.0
  %3071 = vmatpush2.msra.mxu0 0.0
  %3072 = vmatprep.subr.mxu0 0.0
  %3073 = vmatpush2.msra.mxu0 0.0
  %3074 = vmatprep.subr.mxu0 0.0
  %3075 = vmatpush2.msra.mxu0 0.0
  %3076 = vmatprep.subr.mxu0 0.0
  %3077 = vmatpush2.msra.mxu0 0.0
  %3078 = vmatprep.subr.mxu0 0.0
  %3079 = vmatpush2.msra.mxu0 0.0
  %3080 = vmatprep.subr.mxu0 0.0
  %3081 = vmatpush2.msra.mxu0 0.0
  %3082 = vmatprep.subr.mxu0 0.0
  %3083 = vmatpush2.msra.mxu0 0.0
  %3084 = vmatprep.subr.mxu0 0.0
  %3085 = vmatpush2.msra.mxu0 0.0
  %3086 = vmatprep.subr.mxu0 0.0
  %3087 = vmatpush2.msra.mxu0 0.0
  %3088 = vmatprep.mubr.f32.mxu0 0.0
  %3089 = vmatmul.mubr.f32.gmra.mxu0 %v2864
  %v3090 = vpop.f32.mrf.mxu0
  %v3091 = vadd.f32 %v2600, %v3090
  %v3092 = vpop.f32.mrf.mxu0
  %3093 = vmatprep.mubr.f32.mxu0 0.0
  %3094 = vmatmul.mubr.f32.gmra.mxu0 %v2867
  %v3095 = vpop.f32.mrf.mxu0
  %v3096 = vadd.f32 %v2605, %v3095
  %v3097 = vpop.f32.mrf.mxu0
  %3098 = vmatprep.mubr.f32.mxu0 0.0
  %3099 = vmatmul.mubr.f32.gmra.mxu0 %v2870
  %v3100 = vpop.f32.mrf.mxu0
  %v3101 = vadd.f32 %v2610, %v3100
  %v3102 = vpop.f32.mrf.mxu0
  %3103 = vmatprep.mubr.f32.mxu0 0.0
  %3104 = vmatmul.mubr.f32.gmra.mxu0 %v2873
  %v3105 = vpop.f32.mrf.mxu0
  %v3106 = vadd.f32 %v2615, %v3105
  %v3107 = vpop.f32.mrf.mxu0
  %3108 = vmatprep.mubr.f32.mxu0 0.0
  %3109 = vmatmul.mubr.f32.gmra.mxu0 %v2876
  %v3110 = vpop.f32.mrf.mxu0
  %v3111 = vadd.f32 %v2620, %v3110
  %v3112 = vpop.f32.mrf.mxu0
  %3113 = vmatprep.mubr.f32.mxu0 0.0
  %3114 = vmatmul.mubr.f32.gmra.mxu0 %v2879
  %v3115 = vpop.f32.mrf.mxu0
  %v3116 = vadd.f32 %v2625, %v3115
  %v3117 = vpop.f32.mrf.mxu0
  %3118 = vmatprep.mubr.f32.mxu0 0.0
  %3119 = vmatmul.mubr.f32.gmra.mxu0 %v2882
  %v3120 = vpop.f32.mrf.mxu0
  %v3121 = vadd.f32 %v2630, %v3120
  %v3122 = vpop.f32.mrf.mxu0
  %3123 = vmatprep.mubr.f32.mxu0 0.0
  %3124 = vmatmul.mubr.f32.gmra.mxu0 %v2885
  %v3125 = vpop.f32.mrf.mxu0
  %v3126 = vadd.f32 %v2635, %v3125
  %v3127 = vpop.f32.mrf.mxu0
  %3128 = vmatprep.mubr.f32.mxu0 0.0
  %3129 = vmatmul.mubr.f32.gmra.mxu0 %v2888
  %v3130 = vpop.f32.mrf.mxu0
  %v3131 = vadd.f32 %v2640, %v3130
  %v3132 = vpop.f32.mrf.mxu0
  %3133 = vmatprep.mubr.f32.mxu0 0.0
  %3134 = vmatmul.mubr.f32.gmra.mxu0 %v2891
  %v3135 = vpop.f32.mrf.mxu0
  %v3136 = vadd.f32 %v2645, %v3135
  %v3137 = vpop.f32.mrf.mxu0
  %3138 = vmatprep.mubr.f32.mxu0 0.0
  %3139 = vmatmul.mubr.f32.gmra.mxu0 %v2894
  %v3140 = vpop.f32.mrf.mxu0
  %v3141 = vadd.f32 %v2650, %v3140
  %v3142 = vpop.f32.mrf.mxu0
  %3143 = vmatprep.mubr.f32.mxu0 0.0
  %3144 = vmatmul.mubr.f32.gmra.mxu0 %v2897
  %v3145 = vpop.f32.mrf.mxu0
  %v3146 = vadd.f32 %v2655, %v3145
  %v3147 = vpop.f32.mrf.mxu0
  %3148 = vmatprep.mubr.f32.mxu0 0.0
  %3149 = vmatmul.mubr.f32.gmra.mxu0 %v2900
  %v3150 = vpop.f32.mrf.mxu0
  %v3151 = vadd.f32 %v2660, %v3150
  %v3152 = vpop.f32.mrf.mxu0
  %3153 = vmatprep.mubr.f32.mxu0 0.0
  %3154 = vmatmul.mubr.f32.gmra.mxu0 %v2903
  %v3155 = vpop.f32.mrf.mxu0
  %v3156 = vadd.f32 %v2665, %v3155
  %v3157 = vpop.f32.mrf.mxu0
  %3158 = vmatprep.mubr.f32.mxu0 0.0
  %3159 = vmatmul.mubr.f32.gmra.mxu0 %v2906
  %v3160 = vpop.f32.mrf.mxu0
  %v3161 = vadd.f32 %v2670, %v3160
  %v3162 = vpop.f32.mrf.mxu0
  %3163 = vmatprep.mubr.f32.mxu0 0.0
  %3164 = vmatmul.mubr.f32.gmra.mxu0 %v2909
  %v3165 = vpop.f32.mrf.mxu0
  %v3166 = vadd.f32 %v2675, %v3165
  %v3167 = vpop.f32.mrf.mxu0
  %3168 = vmatprep.mubr.f32.mxu0 0.0
  %3169 = vmatmul.mubr.f32.gmra.mxu0 %v2912
  %v3170 = vpop.f32.mrf.mxu0
  %v3171 = vadd.f32 %v2680, %v3170
  %v3172 = vpop.f32.mrf.mxu0
  %3173 = vmatprep.mubr.f32.mxu0 0.0
  %3174 = vmatmul.mubr.f32.gmra.mxu0 %v2915
  %v3175 = vpop.f32.mrf.mxu0
  %v3176 = vadd.f32 %v2685, %v3175
  %v3177 = vpop.f32.mrf.mxu0
  %3178 = vmatprep.mubr.f32.mxu0 0.0
  %3179 = vmatmul.mubr.f32.gmra.mxu0 %v2918
  %v3180 = vpop.f32.mrf.mxu0
  %v3181 = vadd.f32 %v2690, %v3180
  %v3182 = vpop.f32.mrf.mxu0
  %3183 = vmatprep.mubr.f32.mxu0 0.0
  %3184 = vmatmul.mubr.f32.gmra.mxu0 %v2921
  %v3185 = vpop.f32.mrf.mxu0
  %v3186 = vadd.f32 %v2695, %v3185
  %v3187 = vpop.f32.mrf.mxu0
  %3188 = vmatprep.mubr.f32.mxu0 0.0
  %3189 = vmatmul.mubr.f32.gmra.mxu0 %v2924
  %v3190 = vpop.f32.mrf.mxu0
  %v3191 = vadd.f32 %v2700, %v3190
  %v3192 = vpop.f32.mrf.mxu0
  %3193 = vmatprep.mubr.f32.mxu0 0.0
  %3194 = vmatmul.mubr.f32.gmra.mxu0 %v2927
  %v3195 = vpop.f32.mrf.mxu0
  %v3196 = vadd.f32 %v2705, %v3195
  %v3197 = vpop.f32.mrf.mxu0
  %3198 = vmatprep.mubr.f32.mxu0 0.0
  %3199 = vmatmul.mubr.f32.gmra.mxu0 %v2930
  %v3200 = vpop.f32.mrf.mxu0
  %v3201 = vadd.f32 %v2710, %v3200
  %v3202 = vpop.f32.mrf.mxu0
  %3203 = vmatprep.mubr.f32.mxu0 0.0
  %3204 = vmatmul.mubr.f32.gmra.mxu0 %v2933
  %v3205 = vpop.f32.mrf.mxu0
  %v3206 = vadd.f32 %v2715, %v3205
  %v3207 = vpop.f32.mrf.mxu0
  %3208 = vmatprep.mubr.f32.mxu0 0.0
  %3209 = vmatmul.mubr.f32.gmra.mxu0 %v2936
  %v3210 = vpop.f32.mrf.mxu0
  %v3211 = vadd.f32 %v2720, %v3210
  %v3212 = vpop.f32.mrf.mxu0
  %3213 = vmatprep.mubr.f32.mxu0 0.0
  %3214 = vmatmul.mubr.f32.gmra.mxu0 %v2939
  %v3215 = vpop.f32.mrf.mxu0
  %v3216 = vadd.f32 %v2725, %v3215
  %v3217 = vpop.f32.mrf.mxu0
  %3218 = vmatprep.mubr.f32.mxu0 0.0
  %3219 = vmatmul.mubr.f32.gmra.mxu0 %v2942
  %v3220 = vpop.f32.mrf.mxu0
  %v3221 = vadd.f32 %v2730, %v3220
  %v3222 = vpop.f32.mrf.mxu0
  %3223 = vmatprep.mubr.f32.mxu0 0.0
  %3224 = vmatmul.mubr.f32.gmra.mxu0 %v2945
  %v3225 = vpop.f32.mrf.mxu0
  %v3226 = vadd.f32 %v2735, %v3225
  %v3227 = vpop.f32.mrf.mxu0
  %3228 = vmatprep.mubr.f32.mxu0 0.0
  %3229 = vmatmul.mubr.f32.gmra.mxu0 %v2948
  %v3230 = vpop.f32.mrf.mxu0
  %v3231 = vadd.f32 %v2740, %v3230
  %v3232 = vpop.f32.mrf.mxu0
  %3233 = vmatprep.mubr.f32.mxu0 0.0
  %3234 = vmatmul.mubr.f32.gmra.mxu0 %v2951
  %v3235 = vpop.f32.mrf.mxu0
  %v3236 = vadd.f32 %v2745, %v3235
  %v3237 = vpop.f32.mrf.mxu0
  %3238 = vmatprep.mubr.f32.mxu0 0.0
  %3239 = vmatmul.mubr.f32.gmra.mxu0 %v2954
  %v3240 = vpop.f32.mrf.mxu0
  %v3241 = vadd.f32 %v2750, %v3240
  %v3242 = vpop.f32.mrf.mxu0
  %3243 = vmatprep.mubr.f32.mxu0 0.0
  %3244 = vmatmul.mubr.f32.gmra.mxu0 %v2957
  %v3245 = vpop.f32.mrf.mxu0
  %v3246 = vadd.f32 %v2755, %v3245
  %v3247 = vpop.f32.mrf.mxu0
  %3248 = vmatprep.mubr.f32.mxu0 0.0
  %3249 = vmatmul.mubr.f32.gmra.mxu0 %v2960
  %v3250 = vpop.f32.mrf.mxu0
  %v3251 = vadd.f32 %v2760, %v3250
  %v3252 = vpop.f32.mrf.mxu0
  %3253 = vmatprep.mubr.f32.mxu0 0.0
  %3254 = vmatmul.mubr.f32.gmra.mxu0 %v2963
  %v3255 = vpop.f32.mrf.mxu0
  %v3256 = vadd.f32 %v2765, %v3255
  %v3257 = vpop.f32.mrf.mxu0
  %3258 = vmatprep.mubr.f32.mxu0 0.0
  %3259 = vmatmul.mubr.f32.gmra.mxu0 %v2966
  %v3260 = vpop.f32.mrf.mxu0
  %v3261 = vadd.f32 %v2770, %v3260
  %v3262 = vpop.f32.mrf.mxu0
  %3263 = vmatprep.mubr.f32.mxu0 0.0
  %3264 = vmatmul.mubr.f32.gmra.mxu0 %v2969
  %v3265 = vpop.f32.mrf.mxu0
  %v3266 = vadd.f32 %v2775, %v3265
  %v3267 = vpop.f32.mrf.mxu0
  %3268 = vmatprep.mubr.f32.mxu0 0.0
  %3269 = vmatmul.mubr.f32.gmra.mxu0 %v2972
  %v3270 = vpop.f32.mrf.mxu0
  %v3271 = vadd.f32 %v2780, %v3270
  %v3272 = vpop.f32.mrf.mxu0
  %3273 = vmatprep.mubr.f32.mxu0 0.0
  %3274 = vmatmul.mubr.f32.gmra.mxu0 %v2975
  %v3275 = vpop.f32.mrf.mxu0
  %v3276 = vadd.f32 %v2785, %v3275
  %v3277 = vpop.f32.mrf.mxu0
  %3278 = vmatprep.mubr.f32.mxu0 0.0
  %3279 = vmatmul.mubr.f32.gmra.mxu0 %v2978
  %v3280 = vpop.f32.mrf.mxu0
  %v3281 = vadd.f32 %v2790, %v3280
  %v3282 = vpop.f32.mrf.mxu0
  %3283 = vmatprep.mubr.f32.mxu0 0.0
  %3284 = vmatmul.mubr.f32.gmra.mxu0 %v2981
  %v3285 = vpop.f32.mrf.mxu0
  %v3286 = vadd.f32 %v2795, %v3285
  %v3287 = vpop.f32.mrf.mxu0
  %3288 = vmatprep.mubr.f32.mxu0 0.0
  %3289 = vmatmul.mubr.f32.gmra.mxu0 %v2984
  %v3290 = vpop.f32.mrf.mxu0
  %v3291 = vadd.f32 %v2800, %v3290
  %v3292 = vpop.f32.mrf.mxu0
  %3293 = vmatprep.mubr.f32.mxu0 0.0
  %3294 = vmatmul.mubr.f32.gmra.mxu0 %v2987
  %v3295 = vpop.f32.mrf.mxu0
  %v3296 = vadd.f32 %v2805, %v3295
  %v3297 = vpop.f32.mrf.mxu0
  %3298 = vmatprep.mubr.f32.mxu0 0.0
  %3299 = vmatmul.mubr.f32.gmra.mxu0 %v2990
  %v3300 = vpop.f32.mrf.mxu0
  %v3301 = vadd.f32 %v2810, %v3300
  %v3302 = vpop.f32.mrf.mxu0
  %3303 = vmatprep.mubr.f32.mxu0 0.0
  %3304 = vmatmul.mubr.f32.gmra.mxu0 %v2993
  %v3305 = vpop.f32.mrf.mxu0
  %v3306 = vadd.f32 %v2815, %v3305
  %v3307 = vpop.f32.mrf.mxu0
  %3308 = vmatprep.mubr.f32.mxu0 0.0
  %3309 = vmatmul.mubr.f32.gmra.mxu0 %v2996
  %v3310 = vpop.f32.mrf.mxu0
  %v3311 = vadd.f32 %v2820, %v3310
  %v3312 = vpop.f32.mrf.mxu0
  %3313 = vmatprep.mubr.f32.mxu0 0.0
  %3314 = vmatmul.mubr.f32.gmra.mxu0 %v2999
  %v3315 = vpop.f32.mrf.mxu0
  %v3316 = vadd.f32 %v2825, %v3315
  %v3317 = vpop.f32.mrf.mxu0
  %3318 = vmatprep.mubr.f32.mxu0 0.0
  %3319 = vmatmul.mubr.f32.gmra.mxu0 %v3002
  %v3320 = vpop.f32.mrf.mxu0
  %v3321 = vadd.f32 %v2830, %v3320
  %v3322 = vpop.f32.mrf.mxu0
  %3323 = vmatprep.mubr.f32.mxu0 0.0
  %3324 = vmatmul.mubr.f32.gmra.mxu0 %v3005
  %v3325 = vpop.f32.mrf.mxu0
  %v3326 = vadd.f32 %v2835, %v3325
  %v3327 = vpop.f32.mrf.mxu0
  %3328 = vmatprep.mubr.f32.mxu0 0.0
  %3329 = vmatmul.mubr.f32.gmra.mxu0 %v3008
  %v3330 = vpop.f32.mrf.mxu0
  %v3331 = vadd.f32 %v2840, %v3330
  %v3332 = vpop.f32.mrf.mxu0
  %3333 = vmatprep.mubr.f32.mxu0 0.0
  %3334 = vmatmul.mubr.f32.gmra.mxu0 %v3011
  %v3335 = vpop.f32.mrf.mxu0
  %v3336 = vadd.f32 %v2845, %v3335
  %v3337 = vpop.f32.mrf.mxu0
  %3338 = vmatprep.mubr.f32.mxu0 0.0
  %3339 = vmatmul.mubr.f32.gmra.mxu0 %v3014
  %v3340 = vpop.f32.mrf.mxu0
  %v3341 = vadd.f32 %v2850, %v3340
  %v3342 = vpop.f32.mrf.mxu0
  %3343 = vmatprep.mubr.f32.mxu0 0.0
  %3344 = vmatmul.mubr.f32.gmra.mxu0 %v3017
  %v3345 = vpop.f32.mrf.mxu0
  %v3346 = vadd.f32 %v2855, %v3345
  %v3347 = vpop.f32.mrf.mxu0
  %3348 = vmatprep.mubr.f32.mxu0 0.0
  %3349 = vmatmul.mubr.f32.gmra.mxu0 %v3020
  %v3350 = vpop.f32.mrf.mxu0
  %v3351 = vadd.f32 %v2860, %v3350
  %v3352 = vpop.f32.mrf.mxu0
  %3353 = vdwg.mxu0
  %v3354 = vmax.f32 %v3091, 0.0
  %v3355 = vmax.f32 %v3096, 0.0
  %v3356 = vmax.f32 %v3101, 0.0
  %v3357 = vmax.f32 %v3106, 0.0
  %v3358 = vmax.f32 %v3111, 0.0
  %v3359 = vmax.f32 %v3116, 0.0
  %v3360 = vmax.f32 %v3121, 0.0
  %v3361 = vmax.f32 %v3126, 0.0
  %v3362 = vmax.f32 %v3131, 0.0
  %v3363 = vmax.f32 %v3136, 0.0
  %v3364 = vmax.f32 %v3141, 0.0
  %v3365 = vmax.f32 %v3146, 0.0
  %v3366 = vmax.f32 %v3151, 0.0
  %v3367 = vmax.f32 %v3156, 0.0
  %v3368 = vmax.f32 %v3161, 0.0
  %v3369 = vmax.f32 %v3166, 0.0
  %v3370 = vmax.f32 %v3171, 0.0
  %v3371 = vmax.f32 %v3176, 0.0
  %v3372 = vmax.f32 %v3181, 0.0
  %v3373 = vmax.f32 %v3186, 0.0
  %v3374 = vmax.f32 %v3191, 0.0
  %v3375 = vmax.f32 %v3196, 0.0
  %v3376 = vmax.f32 %v3201, 0.0
  %v3377 = vmax.f32 %v3206, 0.0
  %v3378 = vmax.f32 %v3211, 0.0
  %v3379 = vmax.f32 %v3216, 0.0
  %v3380 = vmax.f32 %v3221, 0.0
  %v3381 = vmax.f32 %v3226, 0.0
  %v3382 = vmax.f32 %v3231, 0.0
  %v3383 = vmax.f32 %v3236, 0.0
  %v3384 = vmax.f32 %v3241, 0.0
  %v3385 = vmax.f32 %v3246, 0.0
  %v3386 = vmax.f32 %v3251, 0.0
  %v3387 = vmax.f32 %v3256, 0.0
  %v3388 = vmax.f32 %v3261, 0.0
  %v3389 = vmax.f32 %v3266, 0.0
  %v3390 = vmax.f32 %v3271, 0.0
  %v3391 = vmax.f32 %v3276, 0.0
  %v3392 = vmax.f32 %v3281, 0.0
  %v3393 = vmax.f32 %v3286, 0.0
  %v3394 = vmax.f32 %v3291, 0.0
  %v3395 = vmax.f32 %v3296, 0.0
  %v3396 = vmax.f32 %v3301, 0.0
  %v3397 = vmax.f32 %v3306, 0.0
  %v3398 = vmax.f32 %v3311, 0.0
  %v3399 = vmax.f32 %v3316, 0.0
  %v3400 = vmax.f32 %v3321, 0.0
  %v3401 = vmax.f32 %v3326, 0.0
  %v3402 = vmax.f32 %v3331, 0.0
  %v3403 = vmax.f32 %v3336, 0.0
  %v3404 = vmax.f32 %v3341, 0.0
  %v3405 = vmax.f32 %v3346, 0.0
  %v3406 = vmax.f32 %v3351, 0.0
  %v3407 = vld [vmem:[%s15] sm:$0xff]
  %v3408 = vld [vmem:[%s15 + $0x8] sm:$0xff]
  %v3409 = vld [vmem:[%s15 + $0x10] sm:$0xff]
  %v3410 = vld [vmem:[%s15 + $0x18] sm:$0xff]
  %v3411 = vld [vmem:[%s15 + $0x20] sm:$0xff]
  %v3412 = vld [vmem:[%s15 + $0x28] sm:$0xff]
  %v3413 = vld [vmem:[%s15 + $0x30] sm:$0xff]
  %v3414 = vld [vmem:[%s15 + $0x38] sm:$0xff]
  %v3415 = vld [vmem:[%s15 + $0x40] sm:$0xff]
  %v3416 = vld [vmem:[%s15 + $0x48] sm:$0xff]
  %v3417 = vld [vmem:[%s15 + $0x50] sm:$0xff]
  %v3418 = vld [vmem:[%s15 + $0x58] sm:$0xff]
  %v3419 = vld [vmem:[%s15 + $0x60] sm:$0xff]
  %v3420 = vld [vmem:[%s15 + $0x68] sm:$0xff]
  %v3421 = vld [vmem:[%s15 + $0x70] sm:$0xff]
  %v3422 = vld [vmem:[%s15 + $0x78] sm:$0xff]
  %v3423 = vld [vmem:[%s15 + $0x80] sm:$0xff]
  %v3424 = vld [vmem:[%s15 + $0x88] sm:$0xff]
  %v3425 = vld [vmem:[%s15 + $0x90] sm:$0xff]
  %v3426 = vld [vmem:[%s15 + $0x98] sm:$0xff]
  %v3427 = vld [vmem:[%s15 + $0xa0] sm:$0xff]
  %v3428 = vld [vmem:[%s15 + $0xa8] sm:$0xff]
  %v3429 = vld [vmem:[%s15 + $0xb0] sm:$0xff]
  %v3430 = vld [vmem:[%s15 + $0xb8] sm:$0xff]
  %v3431 = vld [vmem:[%s15 + $0xc0] sm:$0xff]
  %v3432 = vld [vmem:[%s15 + $0xc8] sm:$0xff]
  %v3433 = vld [vmem:[%s15 + $0xd0] sm:$0xff]
  %v3434 = vld [vmem:[%s15 + $0xd8] sm:$0xff]
  %v3435 = vld [vmem:[%s15 + $0xe0] sm:$0xff]
  %v3436 = vld [vmem:[%s15 + $0xe8] sm:$0xff]
  %v3437 = vld [vmem:[%s15 + $0xf0] sm:$0xff]
  %v3438 = vld [vmem:[%s15 + $0xf8] sm:$0xff]
  %v3439 = vld [vmem:[%s15 + $0x100] sm:$0xff]
  %v3440 = vld [vmem:[%s15 + $0x108] sm:$0xff]
  %v3441 = vld [vmem:[%s15 + $0x110] sm:$0xff]
  %v3442 = vld [vmem:[%s15 + $0x118] sm:$0xff]
  %v3443 = vld [vmem:[%s15 + $0x120] sm:$0xff]
  %v3444 = vld [vmem:[%s15 + $0x128] sm:$0xff]
  %v3445 = vld [vmem:[%s15 + $0x130] sm:$0xff]
  %v3446 = vld [vmem:[%s15 + $0x138] sm:$0xff]
  %v3447 = vld [vmem:[%s15 + $0x140] sm:$0xff]
  %v3448 = vld [vmem:[%s15 + $0x148] sm:$0xff]
  %v3449 = vld [vmem:[%s15 + $0x150] sm:$0xff]
  %v3450 = vld [vmem:[%s15 + $0x158] sm:$0xff]
  %v3451 = vld [vmem:[%s15 + $0x160] sm:$0xff]
  %v3452 = vld [vmem:[%s15 + $0x168] sm:$0xff]
  %v3453 = vld [vmem:[%s15 + $0x170] sm:$0xff]
  %v3454 = vld [vmem:[%s15 + $0x178] sm:$0xff]
  %v3455 = vld [vmem:[%s15 + $0x180] sm:$0xff]
  %v3456 = vld [vmem:[%s15 + $0x188] sm:$0xff]
  %v3457 = vld [vmem:[%s15 + $0x190] sm:$0xff]
  %v3458 = vld [vmem:[%s15 + $0x198] sm:$0xff]
  %v3459 = vld [vmem:[%s15 + $0x1a0] sm:$0xff]
  %v3460 = vld [vmem:[%s15 + $0x1a8] sm:$0xff]
  %v3461 = vld [vmem:[%s15 + $0x1b0] sm:$0xff]
  %v3462 = vld [vmem:[%s15 + $0x1b8] sm:$0xff]
  %v3463 = vld [vmem:[%s15 + $0x1c0] sm:$0xff]
  %v3464 = vld [vmem:[%s15 + $0x1c8] sm:$0xff]
  %v3465 = vld [vmem:[%s15 + $0x1d0] sm:$0xff]
  %v3466 = vld [vmem:[%s15 + $0x1d8] sm:$0xff]
  %v3467 = vld [vmem:[%s15 + $0x1e0] sm:$0xff]
  %v3468 = vld [vmem:[%s15 + $0x1e8] sm:$0xff]
  %v3469 = vld [vmem:[%s15 + $0x1f0] sm:$0xff]
  %v3470 = vld [vmem:[%s15 + $0x1f8] sm:$0xff]
  %v3471 = vld [vmem:[%s15 + $0x200] sm:$0xff]
  %v3472 = vld [vmem:[%s15 + $0x208] sm:$0xff]
  %v3473 = vld [vmem:[%s15 + $0x210] sm:$0xff]
  %v3474 = vld [vmem:[%s15 + $0x218] sm:$0xff]
  %v3475 = vld [vmem:[%s15 + $0x220] sm:$0xff]
  %v3476 = vld [vmem:[%s15 + $0x228] sm:$0xff]
  %v3477 = vld [vmem:[%s15 + $0x230] sm:$0xff]
  %v3478 = vld [vmem:[%s15 + $0x238] sm:$0xff]
  %v3479 = vld [vmem:[%s15 + $0x240] sm:$0xff]
  %v3480 = vld [vmem:[%s15 + $0x248] sm:$0xff]
  %v3481 = vld [vmem:[%s15 + $0x250] sm:$0xff]
  %v3482 = vld [vmem:[%s15 + $0x258] sm:$0xff]
  %v3483 = vld [vmem:[%s15 + $0x260] sm:$0xff]
  %v3484 = vld [vmem:[%s15 + $0x268] sm:$0xff]
  %v3485 = vld [vmem:[%s15 + $0x270] sm:$0xff]
  %v3486 = vld [vmem:[%s15 + $0x278] sm:$0xff]
  %v3487 = vld [vmem:[%s15 + $0x280] sm:$0xff]
  %v3488 = vld [vmem:[%s15 + $0x288] sm:$0xff]
  %v3489 = vld [vmem:[%s15 + $0x290] sm:$0xff]
  %v3490 = vld [vmem:[%s15 + $0x298] sm:$0xff]
  %v3491 = vld [vmem:[%s15 + $0x2a0] sm:$0xff]
  %v3492 = vld [vmem:[%s15 + $0x2a8] sm:$0xff]
  %v3493 = vld [vmem:[%s15 + $0x2b0] sm:$0xff]
  %v3494 = vld [vmem:[%s15 + $0x2b8] sm:$0xff]
  %v3495 = vld [vmem:[%s15 + $0x2c0] sm:$0xff]
  %v3496 = vld [vmem:[%s15 + $0x2c8] sm:$0xff]
  %v3497 = vld [vmem:[%s15 + $0x2d0] sm:$0xff]
  %v3498 = vld [vmem:[%s15 + $0x2d8] sm:$0xff]
  %v3499 = vld [vmem:[%s15 + $0x2e0] sm:$0xff]
  %v3500 = vld [vmem:[%s15 + $0x2e8] sm:$0xff]
  %v3501 = vld [vmem:[%s15 + $0x2f0] sm:$0xff]
  %v3502 = vld [vmem:[%s15 + $0x2f8] sm:$0xff]
  %v3503 = vld [vmem:[%s15 + $0x300] sm:$0xff]
  %v3504 = vld [vmem:[%s15 + $0x308] sm:$0xff]
  %v3505 = vld [vmem:[%s15 + $0x310] sm:$0xff]
  %v3506 = vld [vmem:[%s15 + $0x318] sm:$0xff]
  %v3507 = vld [vmem:[%s15 + $0x320] sm:$0xff]
  %v3508 = vld [vmem:[%s15 + $0x328] sm:$0xff]
  %v3509 = vld [vmem:[%s15 + $0x330] sm:$0xff]
  %v3510 = vld [vmem:[%s15 + $0x338] sm:$0xff]
  %v3511 = vld [vmem:[%s15 + $0x340] sm:$0xff]
  %v3512 = vld [vmem:[%s15 + $0x348] sm:$0xff]
  %v3513 = vld [vmem:[%s15 + $0x350] sm:$0xff]
  %v3514 = vld [vmem:[%s15 + $0x358] sm:$0xff]
  %v3515 = vld [vmem:[%s15 + $0x360] sm:$0xff]
  %v3516 = vld [vmem:[%s15 + $0x368] sm:$0xff]
  %v3517 = vld [vmem:[%s15 + $0x370] sm:$0xff]
  %v3518 = vld [vmem:[%s15 + $0x378] sm:$0xff]
  %v3519 = vld [vmem:[%s15 + $0x380] sm:$0xff]
  %v3520 = vld [vmem:[%s15 + $0x388] sm:$0xff]
  %v3521 = vld [vmem:[%s15 + $0x390] sm:$0xff]
  %v3522 = vld [vmem:[%s15 + $0x398] sm:$0xff]
  %v3523 = vld [vmem:[%s15 + $0x3a0] sm:$0xff]
  %v3524 = vld [vmem:[%s15 + $0x3a8] sm:$0xff]
  %v3525 = vld [vmem:[%s15 + $0x3b0] sm:$0xff]
  %v3526 = vld [vmem:[%s15 + $0x3b8] sm:$0xff]
  %v3527 = vld [vmem:[%s15 + $0x3c0] sm:$0xff]
  %v3528 = vld [vmem:[%s15 + $0x3c8] sm:$0xff]
  %v3529 = vld [vmem:[%s15 + $0x3d0] sm:$0xff]
  %v3530 = vld [vmem:[%s15 + $0x3d8] sm:$0xff]
  %v3531 = vld [vmem:[%s15 + $0x3e0] sm:$0x3]
  %v3532 = vld [vmem:[%s15 + $0x3e8] sm:$0x3]
  %v3533 = vld [vmem:[%s15 + $0x3f0] sm:$0x3]
  %v3534 = vld [vmem:[%s15 + $0x3f8] sm:$0x3]
  %v3535 = vld [vmem:[%s16] sm:$0xff]
  %v3536 = vld [vmem:[%s16 + $0x8] sm:$0xff]
  %v3537 = vld [vmem:[%s16 + $0x10] sm:$0xff]
  %v3538 = vld [vmem:[%s16 + $0x18] sm:$0xff]
  %v3539 = vld [vmem:[%s16 + $0x20] sm:$0xff]
  %v3540 = vld [vmem:[%s16 + $0x28] sm:$0xff]
  %v3541 = vld [vmem:[%s16 + $0x30] sm:$0xff]
  %v3542 = vld [vmem:[%s16 + $0x38] sm:$0xff]
  %v3543 = vld [vmem:[%s16 + $0x40] sm:$0xff]
  %v3544 = vld [vmem:[%s16 + $0x48] sm:$0xff]
  %v3545 = vld [vmem:[%s16 + $0x50] sm:$0xff]
  %v3546 = vld [vmem:[%s16 + $0x58] sm:$0xff]
  %v3547 = vld [vmem:[%s16 + $0x60] sm:$0xff]
  %v3548 = vld [vmem:[%s16 + $0x68] sm:$0xff]
  %v3549 = vld [vmem:[%s16 + $0x70] sm:$0xff]
  %v3550 = vld [vmem:[%s16 + $0x78] sm:$0xff]
  %v3551 = vld [vmem:[%s16 + $0x80] sm:$0xff]
  %v3552 = vld [vmem:[%s16 + $0x88] sm:$0xff]
  %v3553 = vld [vmem:[%s16 + $0x90] sm:$0xff]
  %v3554 = vld [vmem:[%s16 + $0x98] sm:$0xff]
  %v3555 = vld [vmem:[%s16 + $0xa0] sm:$0xff]
  %v3556 = vld [vmem:[%s16 + $0xa8] sm:$0xff]
  %v3557 = vld [vmem:[%s16 + $0xb0] sm:$0xff]
  %v3558 = vld [vmem:[%s16 + $0xb8] sm:$0xff]
  %v3559 = vld [vmem:[%s16 + $0xc0] sm:$0xff]
  %v3560 = vld [vmem:[%s16 + $0xc8] sm:$0xff]
  %v3561 = vld [vmem:[%s16 + $0xd0] sm:$0xff]
  %v3562 = vld [vmem:[%s16 + $0xd8] sm:$0xff]
  %v3563 = vld [vmem:[%s16 + $0xe0] sm:$0xff]
  %v3564 = vld [vmem:[%s16 + $0xe8] sm:$0xff]
  %v3565 = vld [vmem:[%s16 + $0xf0] sm:$0xff]
  %v3566 = vld [vmem:[%s16 + $0xf8] sm:$0x3]
  %3568 = vset.pattern.permute.xlu0 0
  %3569 = vperm.xlu0 %3568, %v3535
  %v3570 = vpop.permute.xlu0 %3569
  %3573 = vset.pattern.permute.xlu0 0
  %3574 = vperm.xlu0 %3573, %v3536
  %v3575 = vpop.permute.xlu0 %3574
  %3578 = vset.pattern.permute.xlu0 0
  %3579 = vperm.xlu0 %3578, %v3537
  %v3580 = vpop.permute.xlu0 %3579
  %3583 = vset.pattern.permute.xlu0 0
  %3584 = vperm.xlu0 %3583, %v3538
  %v3585 = vpop.permute.xlu0 %3584
  %3588 = vset.pattern.permute.xlu0 0
  %3589 = vperm.xlu0 %3588, %v3539
  %v3590 = vpop.permute.xlu0 %3589
  %3593 = vset.pattern.permute.xlu0 0
  %3594 = vperm.xlu0 %3593, %v3540
  %v3595 = vpop.permute.xlu0 %3594
  %3598 = vset.pattern.permute.xlu0 0
  %3599 = vperm.xlu0 %3598, %v3541
  %v3600 = vpop.permute.xlu0 %3599
  %3603 = vset.pattern.permute.xlu0 0
  %3604 = vperm.xlu0 %3603, %v3542
  %v3605 = vpop.permute.xlu0 %3604
  %3608 = vset.pattern.permute.xlu0 0
  %3609 = vperm.xlu0 %3608, %v3543
  %v3610 = vpop.permute.xlu0 %3609
  %3613 = vset.pattern.permute.xlu0 0
  %3614 = vperm.xlu0 %3613, %v3544
  %v3615 = vpop.permute.xlu0 %3614
  %3618 = vset.pattern.permute.xlu0 0
  %3619 = vperm.xlu0 %3618, %v3545
  %v3620 = vpop.permute.xlu0 %3619
  %3623 = vset.pattern.permute.xlu0 0
  %3624 = vperm.xlu0 %3623, %v3546
  %v3625 = vpop.permute.xlu0 %3624
  %3628 = vset.pattern.permute.xlu0 0
  %3629 = vperm.xlu0 %3628, %v3547
  %v3630 = vpop.permute.xlu0 %3629
  %3633 = vset.pattern.permute.xlu0 0
  %3634 = vperm.xlu0 %3633, %v3548
  %v3635 = vpop.permute.xlu0 %3634
  %3638 = vset.pattern.permute.xlu0 0
  %3639 = vperm.xlu0 %3638, %v3549
  %v3640 = vpop.permute.xlu0 %3639
  %3643 = vset.pattern.permute.xlu0 0
  %3644 = vperm.xlu0 %3643, %v3550
  %v3645 = vpop.permute.xlu0 %3644
  %3648 = vset.pattern.permute.xlu0 0
  %3649 = vperm.xlu0 %3648, %v3551
  %v3650 = vpop.permute.xlu0 %3649
  %3653 = vset.pattern.permute.xlu0 0
  %3654 = vperm.xlu0 %3653, %v3552
  %v3655 = vpop.permute.xlu0 %3654
  %3658 = vset.pattern.permute.xlu0 0
  %3659 = vperm.xlu0 %3658, %v3553
  %v3660 = vpop.permute.xlu0 %3659
  %3663 = vset.pattern.permute.xlu0 0
  %3664 = vperm.xlu0 %3663, %v3554
  %v3665 = vpop.permute.xlu0 %3664
  %3668 = vset.pattern.permute.xlu0 0
  %3669 = vperm.xlu0 %3668, %v3555
  %v3670 = vpop.permute.xlu0 %3669
  %3673 = vset.pattern.permute.xlu0 0
  %3674 = vperm.xlu0 %3673, %v3556
  %v3675 = vpop.permute.xlu0 %3674
  %3678 = vset.pattern.permute.xlu0 0
  %3679 = vperm.xlu0 %3678, %v3557
  %v3680 = vpop.permute.xlu0 %3679
  %3683 = vset.pattern.permute.xlu0 0
  %3684 = vperm.xlu0 %3683, %v3558
  %v3685 = vpop.permute.xlu0 %3684
  %3688 = vset.pattern.permute.xlu0 0
  %3689 = vperm.xlu0 %3688, %v3559
  %v3690 = vpop.permute.xlu0 %3689
  %3693 = vset.pattern.permute.xlu0 0
  %3694 = vperm.xlu0 %3693, %v3560
  %v3695 = vpop.permute.xlu0 %3694
  %3698 = vset.pattern.permute.xlu0 0
  %3699 = vperm.xlu0 %3698, %v3561
  %v3700 = vpop.permute.xlu0 %3699
  %3703 = vset.pattern.permute.xlu0 0
  %3704 = vperm.xlu0 %3703, %v3562
  %v3705 = vpop.permute.xlu0 %3704
  %3708 = vset.pattern.permute.xlu0 0
  %3709 = vperm.xlu0 %3708, %v3563
  %v3710 = vpop.permute.xlu0 %3709
  %3713 = vset.pattern.permute.xlu0 0
  %3714 = vperm.xlu0 %3713, %v3564
  %v3715 = vpop.permute.xlu0 %3714
  %3718 = vset.pattern.permute.xlu0 0
  %3719 = vperm.xlu0 %3718, %v3565
  %v3720 = vpop.permute.xlu0 %3719
  %3723 = vset.pattern.permute.xlu0 0
  %3724 = vperm.xlu0 %3723, %v3566
  %v3725 = vpop.permute.xlu0 %3724
  %vm3727 = vcmask 293888
  %v3729 = vsel %vm3727, %v3410, 0
  %v3732 = vsel %vm3727, %v3414, 0
  %v3735 = vsel %vm3727, %v3418, 0
  %v3738 = vsel %vm3727, %v3422, 0
  %v3741 = vsel %vm3727, %v3426, 0
  %v3744 = vsel %vm3727, %v3430, 0
  %v3747 = vsel %vm3727, %v3434, 0
  %v3750 = vsel %vm3727, %v3438, 0
  %v3753 = vsel %vm3727, %v3442, 0
  %v3756 = vsel %vm3727, %v3446, 0
  %v3759 = vsel %vm3727, %v3450, 0
  %v3762 = vsel %vm3727, %v3454, 0
  %v3765 = vsel %vm3727, %v3458, 0
  %v3768 = vsel %vm3727, %v3462, 0
  %v3771 = vsel %vm3727, %v3466, 0
  %v3774 = vsel %vm3727, %v3470, 0
  %v3777 = vsel %vm3727, %v3474, 0
  %v3780 = vsel %vm3727, %v3478, 0
  %v3783 = vsel %vm3727, %v3482, 0
  %v3786 = vsel %vm3727, %v3486, 0
  %v3789 = vsel %vm3727, %v3490, 0
  %v3792 = vsel %vm3727, %v3494, 0
  %v3795 = vsel %vm3727, %v3498, 0
  %v3798 = vsel %vm3727, %v3502, 0
  %v3801 = vsel %vm3727, %v3506, 0
  %v3804 = vsel %vm3727, %v3510, 0
  %v3807 = vsel %vm3727, %v3514, 0
  %v3810 = vsel %vm3727, %v3518, 0
  %v3813 = vsel %vm3727, %v3522, 0
  %v3816 = vsel %vm3727, %v3526, 0
  %v3819 = vsel %vm3727, %v3530, 0
  %v3822 = vsel %vm3727, %v3534, 0
  %v3825 = vsel %vm97, %v3406, 0
  %3827 = vmatprep.subr.mxu0 0.0
  %3828 = vmatpush1.msra.mxu0 %v3369
  %3829 = vmatprep.subr.mxu0 0.0
  %3830 = vmatpush1.msra.mxu0 %v3368
  %3831 = vmatprep.subr.mxu0 0.0
  %3832 = vmatpush1.msra.mxu0 %v3367
  %3833 = vmatprep.subr.mxu0 0.0
  %3834 = vmatpush1.msra.mxu0 %v3366
  %3835 = vmatprep.subr.mxu0 0.0
  %3836 = vmatpush1.msra.mxu0 %v3365
  %3837 = vmatprep.subr.mxu0 0.0
  %3838 = vmatpush1.msra.mxu0 %v3364
  %3839 = vmatprep.subr.mxu0 0.0
  %3840 = vmatpush1.msra.mxu0 %v3363
  %3841 = vmatprep.subr.mxu0 0.0
  %3842 = vmatpush1.msra.mxu0 %v3362
  %3843 = vmatprep.subr.mxu0 0.0
  %3844 = vmatpush1.msra.mxu0 %v3361
  %3845 = vmatprep.subr.mxu0 0.0
  %3846 = vmatpush1.msra.mxu0 %v3360
  %3847 = vmatprep.subr.mxu0 0.0
  %3848 = vmatpush1.msra.mxu0 %v3359
  %3849 = vmatprep.subr.mxu0 0.0
  %3850 = vmatpush1.msra.mxu0 %v3358
  %3851 = vmatprep.subr.mxu0 0.0
  %3852 = vmatpush1.msra.mxu0 %v3357
  %3853 = vmatprep.subr.mxu0 0.0
  %3854 = vmatpush1.msra.mxu0 %v3356
  %3855 = vmatprep.subr.mxu0 0.0
  %3856 = vmatpush1.msra.mxu0 %v3355
  %3857 = vmatprep.subr.mxu0 0.0
  %3858 = vmatpush1.msra.mxu0 %v3354
  %3859 = vmatprep.subr.mxu0 0.0
  %3860 = vmatpush2.msra.mxu0 %v3385
  %3861 = vmatprep.subr.mxu0 0.0
  %3862 = vmatpush2.msra.mxu0 %v3384
  %3863 = vmatprep.subr.mxu0 0.0
  %3864 = vmatpush2.msra.mxu0 %v3383
  %3865 = vmatprep.subr.mxu0 0.0
  %3866 = vmatpush2.msra.mxu0 %v3382
  %3867 = vmatprep.subr.mxu0 0.0
  %3868 = vmatpush2.msra.mxu0 %v3381
  %3869 = vmatprep.subr.mxu0 0.0
  %3870 = vmatpush2.msra.mxu0 %v3380
  %3871 = vmatprep.subr.mxu0 0.0
  %3872 = vmatpush2.msra.mxu0 %v3379
  %3873 = vmatprep.subr.mxu0 0.0
  %3874 = vmatpush2.msra.mxu0 %v3378
  %3875 = vmatprep.subr.mxu0 0.0
  %3876 = vmatpush2.msra.mxu0 %v3377
  %3877 = vmatprep.subr.mxu0 0.0
  %3878 = vmatpush2.msra.mxu0 %v3376
  %3879 = vmatprep.subr.mxu0 0.0
  %3880 = vmatpush2.msra.mxu0 %v3375
  %3881 = vmatprep.subr.mxu0 0.0
  %3882 = vmatpush2.msra.mxu0 %v3374
  %3883 = vmatprep.subr.mxu0 0.0
  %3884 = vmatpush2.msra.mxu0 %v3373
  %3885 = vmatprep.subr.mxu0 0.0
  %3886 = vmatpush2.msra.mxu0 %v3372
  %3887 = vmatprep.subr.mxu0 0.0
  %3888 = vmatpush2.msra.mxu0 %v3371
  %3889 = vmatprep.subr.mxu0 0.0
  %3890 = vmatpush2.msra.mxu0 %v3370
  %3891 = vmatprep.mubr.f32.mxu0 %v3408
  %3892 = vmatmul.mubr.f32.gmra.mxu0 %v3407
  %v3893 = vpop.f32.mrf.mxu0
  %v3894 = vadd.f32 %v3570, %v3893
  %v3895 = vpop.f32.mrf.mxu0
  %3896 = vmatprep.mubr.f32.mxu0 %v3412
  %3897 = vmatmul.mubr.f32.gmra.mxu0 %v3411
  %v3898 = vpop.f32.mrf.mxu0
  %v3899 = vadd.f32 %v3575, %v3898
  %v3900 = vpop.f32.mrf.mxu0
  %3901 = vmatprep.mubr.f32.mxu0 %v3416
  %3902 = vmatmul.mubr.f32.gmra.mxu0 %v3415
  %v3903 = vpop.f32.mrf.mxu0
  %v3904 = vadd.f32 %v3580, %v3903
  %v3905 = vpop.f32.mrf.mxu0
  %3906 = vmatprep.mubr.f32.mxu0 %v3420
  %3907 = vmatmul.mubr.f32.gmra.mxu0 %v3419
  %v3908 = vpop.f32.mrf.mxu0
  %v3909 = vadd.f32 %v3585, %v3908
  %v3910 = vpop.f32.mrf.mxu0
  %3911 = vmatprep.mubr.f32.mxu0 %v3424
  %3912 = vmatmul.mubr.f32.gmra.mxu0 %v3423
  %v3913 = vpop.f32.mrf.mxu0
  %v3914 = vadd.f32 %v3590, %v3913
  %v3915 = vpop.f32.mrf.mxu0
  %3916 = vmatprep.mubr.f32.mxu0 %v3428
  %3917 = vmatmul.mubr.f32.gmra.mxu0 %v3427
  %v3918 = vpop.f32.mrf.mxu0
  %v3919 = vadd.f32 %v3595, %v3918
  %v3920 = vpop.f32.mrf.mxu0
  %3921 = vmatprep.mubr.f32.mxu0 %v3432
  %3922 = vmatmul.mubr.f32.gmra.mxu0 %v3431
  %v3923 = vpop.f32.mrf.mxu0
  %v3924 = vadd.f32 %v3600, %v3923
  %v3925 = vpop.f32.mrf.mxu0
  %3926 = vmatprep.mubr.f32.mxu0 %v3436
  %3927 = vmatmul.mubr.f32.gmra.mxu0 %v3435
  %v3928 = vpop.f32.mrf.mxu0
  %v3929 = vadd.f32 %v3605, %v3928
  %v3930 = vpop.f32.mrf.mxu0
  %3931 = vmatprep.mubr.f32.mxu0 %v3440
  %3932 = vmatmul.mubr.f32.gmra.mxu0 %v3439
  %v3933 = vpop.f32.mrf.mxu0
  %v3934 = vadd.f32 %v3610, %v3933
  %v3935 = vpop.f32.mrf.mxu0
  %3936 = vmatprep.mubr.f32.mxu0 %v3444
  %3937 = vmatmul.mubr.f32.gmra.mxu0 %v3443
  %v3938 = vpop.f32.mrf.mxu0
  %v3939 = vadd.f32 %v3615, %v3938
  %v3940 = vpop.f32.mrf.mxu0
  %3941 = vmatprep.mubr.f32.mxu0 %v3448
  %3942 = vmatmul.mubr.f32.gmra.mxu0 %v3447
  %v3943 = vpop.f32.mrf.mxu0
  %v3944 = vadd.f32 %v3620, %v3943
  %v3945 = vpop.f32.mrf.mxu0
  %3946 = vmatprep.mubr.f32.mxu0 %v3452
  %3947 = vmatmul.mubr.f32.gmra.mxu0 %v3451
  %v3948 = vpop.f32.mrf.mxu0
  %v3949 = vadd.f32 %v3625, %v3948
  %v3950 = vpop.f32.mrf.mxu0
  %3951 = vmatprep.mubr.f32.mxu0 %v3456
  %3952 = vmatmul.mubr.f32.gmra.mxu0 %v3455
  %v3953 = vpop.f32.mrf.mxu0
  %v3954 = vadd.f32 %v3630, %v3953
  %v3955 = vpop.f32.mrf.mxu0
  %3956 = vmatprep.mubr.f32.mxu0 %v3460
  %3957 = vmatmul.mubr.f32.gmra.mxu0 %v3459
  %v3958 = vpop.f32.mrf.mxu0
  %v3959 = vadd.f32 %v3635, %v3958
  %v3960 = vpop.f32.mrf.mxu0
  %3961 = vmatprep.mubr.f32.mxu0 %v3464
  %3962 = vmatmul.mubr.f32.gmra.mxu0 %v3463
  %v3963 = vpop.f32.mrf.mxu0
  %v3964 = vadd.f32 %v3640, %v3963
  %v3965 = vpop.f32.mrf.mxu0
  %3966 = vmatprep.mubr.f32.mxu0 %v3468
  %3967 = vmatmul.mubr.f32.gmra.mxu0 %v3467
  %v3968 = vpop.f32.mrf.mxu0
  %v3969 = vadd.f32 %v3645, %v3968
  %v3970 = vpop.f32.mrf.mxu0
  %3971 = vmatprep.mubr.f32.mxu0 %v3472
  %3972 = vmatmul.mubr.f32.gmra.mxu0 %v3471
  %v3973 = vpop.f32.mrf.mxu0
  %v3974 = vadd.f32 %v3650, %v3973
  %v3975 = vpop.f32.mrf.mxu0
  %3976 = vmatprep.mubr.f32.mxu0 %v3476
  %3977 = vmatmul.mubr.f32.gmra.mxu0 %v3475
  %v3978 = vpop.f32.mrf.mxu0
  %v3979 = vadd.f32 %v3655, %v3978
  %v3980 = vpop.f32.mrf.mxu0
  %3981 = vmatprep.mubr.f32.mxu0 %v3480
  %3982 = vmatmul.mubr.f32.gmra.mxu0 %v3479
  %v3983 = vpop.f32.mrf.mxu0
  %v3984 = vadd.f32 %v3660, %v3983
  %v3985 = vpop.f32.mrf.mxu0
  %3986 = vmatprep.mubr.f32.mxu0 %v3484
  %3987 = vmatmul.mubr.f32.gmra.mxu0 %v3483
  %v3988 = vpop.f32.mrf.mxu0
  %v3989 = vadd.f32 %v3665, %v3988
  %v3990 = vpop.f32.mrf.mxu0
  %3991 = vmatprep.mubr.f32.mxu0 %v3488
  %3992 = vmatmul.mubr.f32.gmra.mxu0 %v3487
  %v3993 = vpop.f32.mrf.mxu0
  %v3994 = vadd.f32 %v3670, %v3993
  %v3995 = vpop.f32.mrf.mxu0
  %3996 = vmatprep.mubr.f32.mxu0 %v3492
  %3997 = vmatmul.mubr.f32.gmra.mxu0 %v3491
  %v3998 = vpop.f32.mrf.mxu0
  %v3999 = vadd.f32 %v3675, %v3998
  %v4000 = vpop.f32.mrf.mxu0
  %4001 = vmatprep.mubr.f32.mxu0 %v3496
  %4002 = vmatmul.mubr.f32.gmra.mxu0 %v3495
  %v4003 = vpop.f32.mrf.mxu0
  %v4004 = vadd.f32 %v3680, %v4003
  %v4005 = vpop.f32.mrf.mxu0
  %4006 = vmatprep.mubr.f32.mxu0 %v3500
  %4007 = vmatmul.mubr.f32.gmra.mxu0 %v3499
  %v4008 = vpop.f32.mrf.mxu0
  %v4009 = vadd.f32 %v3685, %v4008
  %v4010 = vpop.f32.mrf.mxu0
  %4011 = vmatprep.mubr.f32.mxu0 %v3504
  %4012 = vmatmul.mubr.f32.gmra.mxu0 %v3503
  %v4013 = vpop.f32.mrf.mxu0
  %v4014 = vadd.f32 %v3690, %v4013
  %v4015 = vpop.f32.mrf.mxu0
  %4016 = vmatprep.mubr.f32.mxu0 %v3508
  %4017 = vmatmul.mubr.f32.gmra.mxu0 %v3507
  %v4018 = vpop.f32.mrf.mxu0
  %v4019 = vadd.f32 %v3695, %v4018
  %v4020 = vpop.f32.mrf.mxu0
  %4021 = vmatprep.mubr.f32.mxu0 %v3512
  %4022 = vmatmul.mubr.f32.gmra.mxu0 %v3511
  %v4023 = vpop.f32.mrf.mxu0
  %v4024 = vadd.f32 %v3700, %v4023
  %v4025 = vpop.f32.mrf.mxu0
  %4026 = vmatprep.mubr.f32.mxu0 %v3516
  %4027 = vmatmul.mubr.f32.gmra.mxu0 %v3515
  %v4028 = vpop.f32.mrf.mxu0
  %v4029 = vadd.f32 %v3705, %v4028
  %v4030 = vpop.f32.mrf.mxu0
  %4031 = vmatprep.mubr.f32.mxu0 %v3520
  %4032 = vmatmul.mubr.f32.gmra.mxu0 %v3519
  %v4033 = vpop.f32.mrf.mxu0
  %v4034 = vadd.f32 %v3710, %v4033
  %v4035 = vpop.f32.mrf.mxu0
  %4036 = vmatprep.mubr.f32.mxu0 %v3524
  %4037 = vmatmul.mubr.f32.gmra.mxu0 %v3523
  %v4038 = vpop.f32.mrf.mxu0
  %v4039 = vadd.f32 %v3715, %v4038
  %v4040 = vpop.f32.mrf.mxu0
  %4041 = vmatprep.mubr.f32.mxu0 %v3528
  %4042 = vmatmul.mubr.f32.gmra.mxu0 %v3527
  %v4043 = vpop.f32.mrf.mxu0
  %v4044 = vadd.f32 %v3720, %v4043
  %v4045 = vpop.f32.mrf.mxu0
  %4046 = vmatprep.mubr.f32.mxu0 %v3532
  %4047 = vmatmul.mubr.f32.gmra.mxu0 %v3531
  %v4048 = vpop.f32.mrf.mxu0
  %v4049 = vadd.f32 %v3725, %v4048
  %v4050 = vpop.f32.mrf.mxu0
  %4051 = vdwg.mxu0
  %4052 = vmatprep.subr.mxu0 0.0
  %4053 = vmatpush1.msra.mxu0 %v3401
  %4054 = vmatprep.subr.mxu0 0.0
  %4055 = vmatpush1.msra.mxu0 %v3400
  %4056 = vmatprep.subr.mxu0 0.0
  %4057 = vmatpush1.msra.mxu0 %v3399
  %4058 = vmatprep.subr.mxu0 0.0
  %4059 = vmatpush1.msra.mxu0 %v3398
  %4060 = vmatprep.subr.mxu0 0.0
  %4061 = vmatpush1.msra.mxu0 %v3397
  %4062 = vmatprep.subr.mxu0 0.0
  %4063 = vmatpush1.msra.mxu0 %v3396
  %4064 = vmatprep.subr.mxu0 0.0
  %4065 = vmatpush1.msra.mxu0 %v3395
  %4066 = vmatprep.subr.mxu0 0.0
  %4067 = vmatpush1.msra.mxu0 %v3394
  %4068 = vmatprep.subr.mxu0 0.0
  %4069 = vmatpush1.msra.mxu0 %v3393
  %4070 = vmatprep.subr.mxu0 0.0
  %4071 = vmatpush1.msra.mxu0 %v3392
  %4072 = vmatprep.subr.mxu0 0.0
  %4073 = vmatpush1.msra.mxu0 %v3391
  %4074 = vmatprep.subr.mxu0 0.0
  %4075 = vmatpush1.msra.mxu0 %v3390
  %4076 = vmatprep.subr.mxu0 0.0
  %4077 = vmatpush1.msra.mxu0 %v3389
  %4078 = vmatprep.subr.mxu0 0.0
  %4079 = vmatpush1.msra.mxu0 %v3388
  %4080 = vmatprep.subr.mxu0 0.0
  %4081 = vmatpush1.msra.mxu0 %v3387
  %4082 = vmatprep.subr.mxu0 0.0
  %4083 = vmatpush1.msra.mxu0 %v3386
  %4084 = vmatprep.subr.mxu0 0.0
  %4085 = vmatpush2.msra.mxu0 0.0
  %4086 = vmatprep.subr.mxu0 0.0
  %4087 = vmatpush2.msra.mxu0 0.0
  %4088 = vmatprep.subr.mxu0 0.0
  %4089 = vmatpush2.msra.mxu0 0.0
  %4090 = vmatprep.subr.mxu0 0.0
  %4091 = vmatpush2.msra.mxu0 0.0
  %4092 = vmatprep.subr.mxu0 0.0
  %4093 = vmatpush2.msra.mxu0 0.0
  %4094 = vmatprep.subr.mxu0 0.0
  %4095 = vmatpush2.msra.mxu0 0.0
  %4096 = vmatprep.subr.mxu0 0.0
  %4097 = vmatpush2.msra.mxu0 0.0
  %4098 = vmatprep.subr.mxu0 0.0
  %4099 = vmatpush2.msra.mxu0 0.0
  %4100 = vmatprep.subr.mxu0 0.0
  %4101 = vmatpush2.msra.mxu0 0.0
  %4102 = vmatprep.subr.mxu0 0.0
  %4103 = vmatpush2.msra.mxu0 0.0
  %4104 = vmatprep.subr.mxu0 0.0
  %4105 = vmatpush2.msra.mxu0 0.0
  %4106 = vmatprep.subr.mxu0 0.0
  %4107 = vmatpush2.msra.mxu0 %v3825
  %4108 = vmatprep.subr.mxu0 0.0
  %4109 = vmatpush2.msra.mxu0 %v3405
  %4110 = vmatprep.subr.mxu0 0.0
  %4111 = vmatpush2.msra.mxu0 %v3404
  %4112 = vmatprep.subr.mxu0 0.0
  %4113 = vmatpush2.msra.mxu0 %v3403
  %4114 = vmatprep.subr.mxu0 0.0
  %4115 = vmatpush2.msra.mxu0 %v3402
  %4116 = vmatprep.mubr.f32.mxu0 %v3729
  %4117 = vmatmul.mubr.f32.gmra.mxu0 %v3409
  %v4118 = vpop.f32.mrf.mxu0
  %v4119 = vadd.f32 %v3894, %v4118
  %v4120 = vpop.f32.mrf.mxu0
  %4121 = vmatprep.mubr.f32.mxu0 %v3732
  %4122 = vmatmul.mubr.f32.gmra.mxu0 %v3413
  %v4123 = vpop.f32.mrf.mxu0
  %v4124 = vadd.f32 %v3899, %v4123
  %v4125 = vpop.f32.mrf.mxu0
  %4126 = vmatprep.mubr.f32.mxu0 %v3735
  %4127 = vmatmul.mubr.f32.gmra.mxu0 %v3417
  %v4128 = vpop.f32.mrf.mxu0
  %v4129 = vadd.f32 %v3904, %v4128
  %v4130 = vpop.f32.mrf.mxu0
  %4131 = vmatprep.mubr.f32.mxu0 %v3738
  %4132 = vmatmul.mubr.f32.gmra.mxu0 %v3421
  %v4133 = vpop.f32.mrf.mxu0
  %v4134 = vadd.f32 %v3909, %v4133
  %v4135 = vpop.f32.mrf.mxu0
  %4136 = vmatprep.mubr.f32.mxu0 %v3741
  %4137 = vmatmul.mubr.f32.gmra.mxu0 %v3425
  %v4138 = vpop.f32.mrf.mxu0
  %v4139 = vadd.f32 %v3914, %v4138
  %v4140 = vpop.f32.mrf.mxu0
  %4141 = vmatprep.mubr.f32.mxu0 %v3744
  %4142 = vmatmul.mubr.f32.gmra.mxu0 %v3429
  %v4143 = vpop.f32.mrf.mxu0
  %v4144 = vadd.f32 %v3919, %v4143
  %v4145 = vpop.f32.mrf.mxu0
  %4146 = vmatprep.mubr.f32.mxu0 %v3747
  %4147 = vmatmul.mubr.f32.gmra.mxu0 %v3433
  %v4148 = vpop.f32.mrf.mxu0
  %v4149 = vadd.f32 %v3924, %v4148
  %v4150 = vpop.f32.mrf.mxu0
  %4151 = vmatprep.mubr.f32.mxu0 %v3750
  %4152 = vmatmul.mubr.f32.gmra.mxu0 %v3437
  %v4153 = vpop.f32.mrf.mxu0
  %v4154 = vadd.f32 %v3929, %v4153
  %v4155 = vpop.f32.mrf.mxu0
  %4156 = vmatprep.mubr.f32.mxu0 %v3753
  %4157 = vmatmul.mubr.f32.gmra.mxu0 %v3441
  %v4158 = vpop.f32.mrf.mxu0
  %v4159 = vadd.f32 %v3934, %v4158
  %v4160 = vpop.f32.mrf.mxu0
  %4161 = vmatprep.mubr.f32.mxu0 %v3756
  %4162 = vmatmul.mubr.f32.gmra.mxu0 %v3445
  %v4163 = vpop.f32.mrf.mxu0
  %v4164 = vadd.f32 %v3939, %v4163
  %v4165 = vpop.f32.mrf.mxu0
  %4166 = vmatprep.mubr.f32.mxu0 %v3759
  %4167 = vmatmul.mubr.f32.gmra.mxu0 %v3449
  %v4168 = vpop.f32.mrf.mxu0
  %v4169 = vadd.f32 %v3944, %v4168
  %v4170 = vpop.f32.mrf.mxu0
  %4171 = vmatprep.mubr.f32.mxu0 %v3762
  %4172 = vmatmul.mubr.f32.gmra.mxu0 %v3453
  %v4173 = vpop.f32.mrf.mxu0
  %v4174 = vadd.f32 %v3949, %v4173
  %v4175 = vpop.f32.mrf.mxu0
  %4176 = vmatprep.mubr.f32.mxu0 %v3765
  %4177 = vmatmul.mubr.f32.gmra.mxu0 %v3457
  %v4178 = vpop.f32.mrf.mxu0
  %v4179 = vadd.f32 %v3954, %v4178
  %v4180 = vpop.f32.mrf.mxu0
  %4181 = vmatprep.mubr.f32.mxu0 %v3768
  %4182 = vmatmul.mubr.f32.gmra.mxu0 %v3461
  %v4183 = vpop.f32.mrf.mxu0
  %v4184 = vadd.f32 %v3959, %v4183
  %v4185 = vpop.f32.mrf.mxu0
  %4186 = vmatprep.mubr.f32.mxu0 %v3771
  %4187 = vmatmul.mubr.f32.gmra.mxu0 %v3465
  %v4188 = vpop.f32.mrf.mxu0
  %v4189 = vadd.f32 %v3964, %v4188
  %v4190 = vpop.f32.mrf.mxu0
  %4191 = vmatprep.mubr.f32.mxu0 %v3774
  %4192 = vmatmul.mubr.f32.gmra.mxu0 %v3469
  %v4193 = vpop.f32.mrf.mxu0
  %v4194 = vadd.f32 %v3969, %v4193
  %v4195 = vpop.f32.mrf.mxu0
  %4196 = vmatprep.mubr.f32.mxu0 %v3777
  %4197 = vmatmul.mubr.f32.gmra.mxu0 %v3473
  %v4198 = vpop.f32.mrf.mxu0
  %v4199 = vadd.f32 %v3974, %v4198
  %v4200 = vpop.f32.mrf.mxu0
  %4201 = vmatprep.mubr.f32.mxu0 %v3780
  %4202 = vmatmul.mubr.f32.gmra.mxu0 %v3477
  %v4203 = vpop.f32.mrf.mxu0
  %v4204 = vadd.f32 %v3979, %v4203
  %v4205 = vpop.f32.mrf.mxu0
  %4206 = vmatprep.mubr.f32.mxu0 %v3783
  %4207 = vmatmul.mubr.f32.gmra.mxu0 %v3481
  %v4208 = vpop.f32.mrf.mxu0
  %v4209 = vadd.f32 %v3984, %v4208
  %v4210 = vpop.f32.mrf.mxu0
  %4211 = vmatprep.mubr.f32.mxu0 %v3786
  %4212 = vmatmul.mubr.f32.gmra.mxu0 %v3485
  %v4213 = vpop.f32.mrf.mxu0
  %v4214 = vadd.f32 %v3989, %v4213
  %v4215 = vpop.f32.mrf.mxu0
  %4216 = vmatprep.mubr.f32.mxu0 %v3789
  %4217 = vmatmul.mubr.f32.gmra.mxu0 %v3489
  %v4218 = vpop.f32.mrf.mxu0
  %v4219 = vadd.f32 %v3994, %v4218
  %v4220 = vpop.f32.mrf.mxu0
  %4221 = vmatprep.mubr.f32.mxu0 %v3792
  %4222 = vmatmul.mubr.f32.gmra.mxu0 %v3493
  %v4223 = vpop.f32.mrf.mxu0
  %v4224 = vadd.f32 %v3999, %v4223
  %v4225 = vpop.f32.mrf.mxu0
  %4226 = vmatprep.mubr.f32.mxu0 %v3795
  %4227 = vmatmul.mubr.f32.gmra.mxu0 %v3497
  %v4228 = vpop.f32.mrf.mxu0
  %v4229 = vadd.f32 %v4004, %v4228
  %v4230 = vpop.f32.mrf.mxu0
  %4231 = vmatprep.mubr.f32.mxu0 %v3798
  %4232 = vmatmul.mubr.f32.gmra.mxu0 %v3501
  %v4233 = vpop.f32.mrf.mxu0
  %v4234 = vadd.f32 %v4009, %v4233
  %v4235 = vpop.f32.mrf.mxu0
  %4236 = vmatprep.mubr.f32.mxu0 %v3801
  %4237 = vmatmul.mubr.f32.gmra.mxu0 %v3505
  %v4238 = vpop.f32.mrf.mxu0
  %v4239 = vadd.f32 %v4014, %v4238
  %v4240 = vpop.f32.mrf.mxu0
  %4241 = vmatprep.mubr.f32.mxu0 %v3804
  %4242 = vmatmul.mubr.f32.gmra.mxu0 %v3509
  %v4243 = vpop.f32.mrf.mxu0
  %v4244 = vadd.f32 %v4019, %v4243
  %v4245 = vpop.f32.mrf.mxu0
  %4246 = vmatprep.mubr.f32.mxu0 %v3807
  %4247 = vmatmul.mubr.f32.gmra.mxu0 %v3513
  %v4248 = vpop.f32.mrf.mxu0
  %v4249 = vadd.f32 %v4024, %v4248
  %v4250 = vpop.f32.mrf.mxu0
  %4251 = vmatprep.mubr.f32.mxu0 %v3810
  %4252 = vmatmul.mubr.f32.gmra.mxu0 %v3517
  %v4253 = vpop.f32.mrf.mxu0
  %v4254 = vadd.f32 %v4029, %v4253
  %v4255 = vpop.f32.mrf.mxu0
  %4256 = vmatprep.mubr.f32.mxu0 %v3813
  %4257 = vmatmul.mubr.f32.gmra.mxu0 %v3521
  %v4258 = vpop.f32.mrf.mxu0
  %v4259 = vadd.f32 %v4034, %v4258
  %v4260 = vpop.f32.mrf.mxu0
  %4261 = vmatprep.mubr.f32.mxu0 %v3816
  %4262 = vmatmul.mubr.f32.gmra.mxu0 %v3525
  %v4263 = vpop.f32.mrf.mxu0
  %v4264 = vadd.f32 %v4039, %v4263
  %v4265 = vpop.f32.mrf.mxu0
  %4266 = vmatprep.mubr.f32.mxu0 %v3819
  %4267 = vmatmul.mubr.f32.gmra.mxu0 %v3529
  %v4268 = vpop.f32.mrf.mxu0
  %v4269 = vadd.f32 %v4044, %v4268
  %v4270 = vpop.f32.mrf.mxu0
  %4271 = vmatprep.mubr.f32.mxu0 %v3822
  %4272 = vmatmul.mubr.f32.gmra.mxu0 %v3533
  %v4273 = vpop.f32.mrf.mxu0
  %v4274 = vadd.f32 %v4049, %v4273
  %v4275 = vpop.f32.mrf.mxu0
  %4276 = vdwg.mxu0
  %v4277 = vmax.f32 %v4119, 0.0
  %v4278 = vmax.f32 %v4124, 0.0
  %v4279 = vmax.f32 %v4129, 0.0
  %v4280 = vmax.f32 %v4134, 0.0
  %v4281 = vmax.f32 %v4139, 0.0
  %v4282 = vmax.f32 %v4144, 0.0
  %v4283 = vmax.f32 %v4149, 0.0
  %v4284 = vmax.f32 %v4154, 0.0
  %v4285 = vmax.f32 %v4159, 0.0
  %v4286 = vmax.f32 %v4164, 0.0
  %v4287 = vmax.f32 %v4169, 0.0
  %v4288 = vmax.f32 %v4174, 0.0
  %v4289 = vmax.f32 %v4179, 0.0
  %v4290 = vmax.f32 %v4184, 0.0
  %v4291 = vmax.f32 %v4189, 0.0
  %v4292 = vmax.f32 %v4194, 0.0
  %v4293 = vmax.f32 %v4199, 0.0
  %v4294 = vmax.f32 %v4204, 0.0
  %v4295 = vmax.f32 %v4209, 0.0
  %v4296 = vmax.f32 %v4214, 0.0
  %v4297 = vmax.f32 %v4219, 0.0
  %v4298 = vmax.f32 %v4224, 0.0
  %v4299 = vmax.f32 %v4229, 0.0
  %v4300 = vmax.f32 %v4234, 0.0
  %v4301 = vmax.f32 %v4239, 0.0
  %v4302 = vmax.f32 %v4244, 0.0
  %v4303 = vmax.f32 %v4249, 0.0
  %v4304 = vmax.f32 %v4254, 0.0
  %v4305 = vmax.f32 %v4259, 0.0
  %v4306 = vmax.f32 %v4264, 0.0
  %v4307 = vmax.f32 %v4269, 0.0
  %v4308 = vmax.f32 %v4274, 0.0
  %v4309 = vld [vmem:[%s17] sm:$0xff]
  %v4310 = vld [vmem:[%s17 + $0x8] sm:$0xff]
  %v4311 = vld [vmem:[%s17 + $0x10] sm:$0x3]
  %v4312 = vld [vmem:[%s17 + $0x18] sm:$0x3]
  %v4313 = vld [vmem:[%s18] sm:$0xff]
  %v4314 = vld [vmem:[%s18 + $0x8] sm:$0x3]
  %4316 = vset.pattern.permute.xlu0 0
  %4317 = vperm.xlu0 %4316, %v4313
  %v4318 = vpop.permute.xlu0 %4317
  %4321 = vset.pattern.permute.xlu0 0
  %4322 = vperm.xlu0 %4321, %v4314
  %v4323 = vpop.permute.xlu0 %4322
  %vm4325 = vcmask 998400
  %v4327 = vsel %vm4325, %v4310, 0
  %v4330 = vsel %vm4325, %v4312, 0
  %v4333 = vsel %vm571, %v4308, 0
  %4335 = vmatprep.subr.mxu0 0.0
  %4336 = vmatpush1.msra.mxu0 %v4292
  %4337 = vmatprep.subr.mxu0 0.0
  %4338 = vmatpush1.msra.mxu0 %v4291
  %4339 = vmatprep.subr.mxu0 0.0
  %4340 = vmatpush1.msra.mxu0 %v4290
  %4341 = vmatprep.subr.mxu0 0.0
  %4342 = vmatpush1.msra.mxu0 %v4289
  %4343 = vmatprep.subr.mxu0 0.0
  %4344 = vmatpush1.msra.mxu0 %v4288
  %4345 = vmatprep.subr.mxu0 0.0
  %4346 = vmatpush1.msra.mxu0 %v4287
  %4347 = vmatprep.subr.mxu0 0.0
  %4348 = vmatpush1.msra.mxu0 %v4286
  %4349 = vmatprep.subr.mxu0 0.0
  %4350 = vmatpush1.msra.mxu0 %v4285
  %4351 = vmatprep.subr.mxu0 0.0
  %4352 = vmatpush1.msra.mxu0 %v4284
  %4353 = vmatprep.subr.mxu0 0.0
  %4354 = vmatpush1.msra.mxu0 %v4283
  %4355 = vmatprep.subr.mxu0 0.0
  %4356 = vmatpush1.msra.mxu0 %v4282
  %4357 = vmatprep.subr.mxu0 0.0
  %4358 = vmatpush1.msra.mxu0 %v4281
  %4359 = vmatprep.subr.mxu0 0.0
  %4360 = vmatpush1.msra.mxu0 %v4280
  %4361 = vmatprep.subr.mxu0 0.0
  %4362 = vmatpush1.msra.mxu0 %v4279
  %4363 = vmatprep.subr.mxu0 0.0
  %4364 = vmatpush1.msra.mxu0 %v4278
  %4365 = vmatprep.subr.mxu0 0.0
  %4366 = vmatpush1.msra.mxu0 %v4277
  %4367 = vmatprep.subr.mxu0 0.0
  %4368 = vmatpush2.msra.mxu0 %v4333
  %4369 = vmatprep.subr.mxu0 0.0
  %4370 = vmatpush2.msra.mxu0 %v4307
  %4371 = vmatprep.subr.mxu0 0.0
  %4372 = vmatpush2.msra.mxu0 %v4306
  %4373 = vmatprep.subr.mxu0 0.0
  %4374 = vmatpush2.msra.mxu0 %v4305
  %4375 = vmatprep.subr.mxu0 0.0
  %4376 = vmatpush2.msra.mxu0 %v4304
  %4377 = vmatprep.subr.mxu0 0.0
  %4378 = vmatpush2.msra.mxu0 %v4303
  %4379 = vmatprep.subr.mxu0 0.0
  %4380 = vmatpush2.msra.mxu0 %v4302
  %4381 = vmatprep.subr.mxu0 0.0
  %4382 = vmatpush2.msra.mxu0 %v4301
  %4383 = vmatprep.subr.mxu0 0.0
  %4384 = vmatpush2.msra.mxu0 %v4300
  %4385 = vmatprep.subr.mxu0 0.0
  %4386 = vmatpush2.msra.mxu0 %v4299
  %4387 = vmatprep.subr.mxu0 0.0
  %4388 = vmatpush2.msra.mxu0 %v4298
  %4389 = vmatprep.subr.mxu0 0.0
  %4390 = vmatpush2.msra.mxu0 %v4297
  %4391 = vmatprep.subr.mxu0 0.0
  %4392 = vmatpush2.msra.mxu0 %v4296
  %4393 = vmatprep.subr.mxu0 0.0
  %4394 = vmatpush2.msra.mxu0 %v4295
  %4395 = vmatprep.subr.mxu0 0.0
  %4396 = vmatpush2.msra.mxu0 %v4294
  %4397 = vmatprep.subr.mxu0 0.0
  %4398 = vmatpush2.msra.mxu0 %v4293
  %4399 = vmatprep.mubr.f32.mxu0 %v4327
  %4400 = vmatmul.mubr.f32.gmra.mxu0 %v4309
  %v4401 = vpop.f32.mrf.mxu0
  %v4402 = vadd.f32 %v4318, %v4401
  %v4403 = vpop.f32.mrf.mxu0
  %4404 = vmatprep.mubr.f32.mxu0 %v4330
  %4405 = vmatmul.mubr.f32.gmra.mxu0 %v4311
  %v4406 = vpop.f32.mrf.mxu0
  %v4407 = vadd.f32 %v4323, %v4406
  %v4408 = vpop.f32.mrf.mxu0
  %4409 = vdwg.mxu0
  %vm4410 = vcmask 15360
  %4411 = vst.msk [vmem:[%s23] sm:$0xff] %vm4410, %v4402
  %vm4412 = vcmask 9216
  %4413 = vst.msk [vmem:[%s23 + $0x8] sm:$0x3] %vm4412, %v4407
  // Predicated region
  $region94: #{nmnet_forward.1} parent=0 // pred_check
    _
  $region95: #{nmnet_forward.1} parent=0 // pred_check_branch
    %4415 = sbr.rel (0) target = $region97
  $region96: #{nmnet_forward.1} parent=0 // pred_region
    _
  $region97: #{nmnet_forward.1} parent=0 // pred_fallthru
    _
  // Predicated region
  $region98: #{nmnet_forward.1} parent=0 // pred_check
    _
  $region99: #{nmnet_forward.1} parent=0 // pred_check_branch
    %4417 = sbr.rel (0) target = $region101
  $region100: #{nmnet_forward.1} parent=0 // pred_region
    _
  $region101: #{nmnet_forward.1} parent=0 // pred_fallthru
    _

</llo_original>
